<compile_context>
chip_gen: v7x
topology: tpu7x:2x2x1
jax: 0.10.0
libtpu: 0.0.40
codegen_flags: <defaults>
</compile_context>

<pallas_src>
import functools

import jax
import jax.numpy as jnp
from jax import lax
from jax.experimental import pallas as pl
from jax.experimental.pallas import tpu as pltpu


# ----------------------------- in-kernel helpers -----------------------------

def _layernorm(x, w, b, eps=1e-6):
    # Matches torch.nn.LayerNorm (biased variance), eps=1e-6. Kept in f32.
    mu = jnp.mean(x, axis=-1, keepdims=True)
    var = jnp.mean((x - mu) ** 2, axis=-1, keepdims=True)
    return (x - mu) * lax.rsqrt(var + eps) * w + b


def _gelu_exact(x):
    # torch.nn.GELU() default (erf-based, exact). Kept in f32.
    return 0.5 * x * (1.0 + lax.erf(x * 0.7071067811865476))


# ------------------------------ fused kernel ---------------------------------

def make_vit_kernel(*, E, H, depth, Bb, P, T_pad, scale):
    hd = E // H
    T = P + 1
    f32 = jnp.float32
    bf16 = jnp.bfloat16

    def kernel(patches_ref, pew_ref, tokadd_ref, kmask_ref,
               ln1w_ref, ln1b_ref, qkvw_ref, qkvb_ref, pjw_ref, pjb_ref,
               ln2w_ref, ln2b_ref, f1w_ref, f1b_ref, f2w_ref, f2b_ref,
               nw_ref, nb_ref, hw_ref, hb_ref,
               o_ref,
               x_sc, qkv_sc, a_sc):
        l = pl.program_id(1)

        # ---- prologue (layer 0): patch embed + cls token + positional embed.
        @pl.when(l == 0)
        def _():
            x_sc[...] = jnp.zeros_like(x_sc)           # also zeroes pad rows
            tok_cls = tokadd_ref[0:1, :]               # cls_token + pos[0]
            tok_pat = tokadd_ref[1:T, :]               # pos[1:] + conv bias
            for bi in range(Bb):
                r0 = bi * T_pad
                pe = jnp.dot(patches_ref[bi], pew_ref[...],
                             preferred_element_type=f32)            # (P, E)
                x_sc[r0:r0 + 1, :] = tok_cls
                x_sc[r0 + 1:r0 + 1 + P, :] = pe + tok_pat

        # ---- transformer block `l` (this layer's weights streamed from HBM) -
        x = x_sc[...]                                                # (M, E) f32
        h1 = _layernorm(x, ln1w_ref[0], ln1b_ref[0]).astype(bf16)
        qkv = (jnp.dot(h1, qkvw_ref[0], preferred_element_type=f32)
               + qkvb_ref[0])                                        # (M, 3E)
        for bi in range(Bb):                                         # park per
            r0 = bi * T_pad                                          # sample
            qkv_sc[bi] = qkv[r0:r0 + T_pad, :].astype(bf16)

        kmask = kmask_ref[...]                                       # (1, Tp)
        for hi in range(H):                                          # per head
            c0 = hi * hd
            qh = qkv_sc[:, :, c0:c0 + hd]                            # (Bb,Tp,hd)
            kh = qkv_sc[:, :, E + c0:E + c0 + hd]
            vh = qkv_sc[:, :, 2 * E + c0:2 * E + c0 + hd]
            s = jnp.einsum('bqd,bkd->bqk', qh, kh,
                           preferred_element_type=f32) * scale       # (Bb,Tp,Tp)
            s = s + kmask                                            # mask pads
            s = s - jnp.max(s, axis=-1, keepdims=True)
            e = jnp.exp(s)
            p = e * pl.reciprocal(jnp.sum(e, axis=-1, keepdims=True),
                                  approx=False)
            oh = jnp.einsum('bqk,bkd->bqd', p.astype(bf16), vh,
                            preferred_element_type=f32)              # (Bb,Tp,hd)
            a_sc[:, :, c0:c0 + hd] = oh.astype(bf16)

        attn = jnp.concatenate([a_sc[bi] for bi in range(Bb)], axis=0)  # (M,E)
        attn = (jnp.dot(attn, pjw_ref[0], preferred_element_type=f32)
                + pjb_ref[0])
        x1 = x + attn                                                # residual 1

        h2 = _layernorm(x1, ln2w_ref[0], ln2b_ref[0]).astype(bf16)
        h2 = jnp.dot(h2, f1w_ref[0], preferred_element_type=f32) + f1b_ref[0]
        h2 = _gelu_exact(h2).astype(bf16)
        h2 = jnp.dot(h2, f2w_ref[0], preferred_element_type=f32) + f2b_ref[0]
        x_sc[...] = x1 + h2                                          # residual 2

        # ---- epilogue (last layer): final LayerNorm on cls rows + classifier.
        @pl.when(l == depth - 1)
        def _():
            xf = x_sc[...]
            cls = jnp.concatenate(
                [xf[bi * T_pad:bi * T_pad + 1, :] for bi in range(Bb)], axis=0)
            cls = _layernorm(cls, nw_ref[...], nb_ref[...]).astype(bf16)
            o_ref[0] = (jnp.dot(cls, hw_ref[...], preferred_element_type=f32)
                        + hb_ref[...])

    return kernel


# ------------------------------- JAX glue -------------------------------------

def patchify(x, p):
    # x: (B, 1, D, H, W) -> (B, nP, p^3); token order = (d, h, w) scan, matching
    # Conv3d(stride=patch).flatten(2).transpose(1, 2).
    # TODO(synk): for clinical-size volumes, do this gather with a BlockSpec
    # index_map over the (nD, nH, nW) patch grid instead of an HBM transpose.
    B, C, Dz, Hy, Wx = x.shape
    x = x.reshape(B, C, Dz // p, p, Hy // p, p, Wx // p, p)
    x = x.transpose(0, 2, 4, 6, 1, 3, 5, 7)
    return x.reshape(B, (Dz // p) * (Hy // p) * (Wx // p), C * p * p * p)


def _stack(blocks, key):
    return jnp.stack([b[key] for b in blocks], axis=0)


def vit3d_forward(x, params, *, patch, embed_dim, n_heads, block_b=None):
    B = x.shape[0]
    E = embed_dim
    depth = len(params['blocks'])
    n_classes = params['head_w'].shape[1]
    hd = E // n_heads
    bf16 = jnp.bfloat16

    # batch block: fill the MXU / amortize weight DMA, but keep >= 2 parallel
    # grid steps so both v7x TensorCores get work.
    if block_b is None:
        block_b = B // 2 if (B % 2 == 0 and B >= 4) else 1
    assert B % block_b == 0
    Bb = block_b
    nb = B // Bb

    patches = patchify(x.astype(bf16), patch)                       # (B, P, V)
    _, P, V = patches.shape
    T = P + 1
    T_pad = ((T + 7) // 8) * 8                                      # sublane pad
    M = Bb * T_pad

    # per-token additive term: row 0 = cls + pos[0]; row t>0 = pos[t] + conv bias
    tok_add = jnp.concatenate(
        [params['cls_token'][0] + params['pos_embed'][0, 0:1, :],
         params['pos_embed'][0, 1:, :] + params['pe_b']],
        axis=0).astype(jnp.float32)                                 # (T, E)

    # additive key mask: 0 on real tokens, -1e30 on padded tokens
    kmask = jnp.where(jnp.arange(T_pad) < T, 0.0, -1e30
                      ).astype(jnp.float32)[None, :]                # (1, T_pad)

    # ---- stacked per-layer weights (leading layer axis, streamed by l) -------
    blocks = params['blocks']
    L = depth
    ln1_w = _stack(blocks, 'ln1_w'); ln1_b = _stack(blocks, 'ln1_b')
    qkv_w = _stack(blocks, 'qkv_w').astype(bf16)                    # (L, E, 3E)
    qkv_b = _stack(blocks, 'qkv_b')                                 # (L, 1, 3E)
    proj_w = _stack(blocks, 'proj_w').astype(bf16)
    proj_b = _stack(blocks, 'proj_b')
    ln2_w = _stack(blocks, 'ln2_w'); ln2_b = _stack(blocks, 'ln2_b')
    fc1_w = _stack(blocks, 'fc1_w').astype(bf16)
    fc1_b = _stack(blocks, 'fc1_b')
    fc2_w = _stack(blocks, 'fc2_w').astype(bf16)
    fc2_b = _stack(blocks, 'fc2_b')
    hidden = fc1_w.shape[2]

    # lane-dense classifier head: pad n_classes up to a multiple of 128
    Cp = max(128, ((n_classes + 127) // 128) * 128)
    head_w = jnp.zeros((E, Cp), jnp.float32).at[:, :n_classes].set(
        params['head_w']).astype(bf16)
    head_b = jnp.zeros((1, Cp), jnp.float32).at[:, :n_classes].set(
        params['head_b'])
    pe_w = params['pe_w'].astype(bf16)
    scale = float(hd) ** -0.5

    def inv(shape):
        # grid-invariant whole-array block (small; could be pl.Buffered(1))
        zeros = (0,) * len(shape)
        return pl.BlockSpec(shape, lambda b, l: zeros)

    def per_layer(shape):
        # one layer's slice of an (L, ...) stack, streamed along the l axis
        zeros = (0,) * len(shape)
        return pl.BlockSpec((1,) + shape, lambda b, l: (l,) + zeros)

    kernel = make_vit_kernel(E=E, H=n_heads, depth=depth, Bb=Bb, P=P,
                             T_pad=T_pad, scale=scale)

    # ---- VMEM budget: 2x streamed layer weights (double buffer) + invariants
    #      + IO blocks + scratch + live-value headroom; cap at 64 MiB (v7x). ---
    per_layer_bytes = (qkv_w.nbytes + proj_w.nbytes + fc1_w.nbytes + fc2_w.nbytes
                       + qkv_b.nbytes + proj_b.nbytes + fc1_b.nbytes + fc2_b.nbytes
                       + ln1_w.nbytes + ln1_b.nbytes + ln2_w.nbytes + ln2_b.nbytes
                       ) // L
    invariant_bytes = (pe_w.nbytes + tok_add.nbytes + kmask.nbytes
                       + head_w.nbytes + head_b.nbytes
                       + params['norm_w'].nbytes + params['norm_b'].nbytes)
    block_io_bytes = Bb * P * V * 2 + Bb * Cp * 4
    scratch_bytes = M * E * 4 + Bb * T_pad * 3 * E * 2 + Bb * T_pad * E * 2
    live_bytes = M * max(hidden, 3 * E) * 4 * 4 + Bb * T_pad * T_pad * 4 * 4
    est = (2 * per_layer_bytes + 2 * invariant_bytes + 2 * block_io_bytes
           + scratch_bytes + live_bytes)
    vmem_limit = int(min(max(2 * est + (8 << 20), 32 << 20), 64 << 20))

    out = pl.pallas_call(
        kernel,
        out_shape=jax.ShapeDtypeStruct((nb, Bb, Cp), jnp.float32),
        grid=(nb, depth),
        in_specs=[
            pl.BlockSpec((Bb, P, V), lambda b, l: (b, 0, 0)),   # patches (bf16)
            inv((V, E)),                                        # pe_w (bf16)
            inv((T, E)),                                        # tok_add
            inv((1, T_pad)),                                    # key pad mask
            per_layer((1, E)), per_layer((1, E)),               # ln1 w/b
            per_layer((E, 3 * E)), per_layer((1, 3 * E)),       # qkv w/b
            per_layer((E, E)), per_layer((1, E)),               # proj w/b
            per_layer((1, E)), per_layer((1, E)),               # ln2 w/b
            per_layer((E, hidden)), per_layer((1, hidden)),     # fc1 w/b
            per_layer((hidden, E)), per_layer((1, E)),          # fc2 w/b
            inv((1, E)), inv((1, E)),                           # final norm w/b
            inv((E, Cp)), inv((1, Cp)),                         # head w/b
        ],
        out_specs=pl.BlockSpec((1, Bb, Cp), lambda b, l: (b, 0, 0)),
        scratch_shapes=[
            pltpu.VMEM((M, E), jnp.float32),                    # residual stream
            pltpu.VMEM((Bb, T_pad, 3 * E), bf16),               # qkv (head slicing)
            pltpu.VMEM((Bb, T_pad, E), bf16),                   # attention output
        ],
        compiler_params=pltpu.CompilerParams(
            dimension_semantics=("parallel", "arbitrary"),
            vmem_limit_bytes=vmem_limit),
    )(patches, pe_w, tok_add, kmask,
      ln1_w, ln1_b, qkv_w, qkv_b, proj_w, proj_b,
      ln2_w, ln2_b, fc1_w, fc1_b, fc2_w, fc2_b,
      params['norm_w'], params['norm_b'], head_w, head_b)

    return out.reshape(B, Cp)[:, :n_classes]


# ------------------------------ param init ------------------------------------

def init_params(key, *, patch_vol, embed_dim, depth, n_heads, mlp_ratio,
                n_classes, n_patches):
    def tn(k, shape, std=0.02):
        return (std * jax.random.truncated_normal(k, -2.0, 2.0, shape)
                ).astype(jnp.float32)

    ks = jax.random.split(key, depth + 4)
    hidden = int(embed_dim * mlp_ratio)
    params = {
        'pe_w': tn(ks[0], (patch_vol, embed_dim)),      # Conv3d kernel, flattened
        'pe_b': jnp.zeros((1, embed_dim), jnp.float32),
        'cls_token': (1e-6 * jax.random.normal(ks[1], (1, 1, embed_dim))
                      ).astype(jnp.float32),
        'pos_embed': tn(ks[2], (1, 1 + n_patches, embed_dim)),
        'norm_w': jnp.ones((1, embed_dim), jnp.float32),
        'norm_b': jnp.zeros((1, embed_dim), jnp.float32),
        'head_w': tn(ks[3], (embed_dim, n_classes)),
        'head_b': jnp.zeros((1, n_classes), jnp.float32),
        'blocks': [],
    }
    for i in range(depth):
        bk = jax.random.split(ks[4 + i], 4)
        params['blocks'].append(dict(
            ln1_w=jnp.ones((1, embed_dim), jnp.float32),
            ln1_b=jnp.zeros((1, embed_dim), jnp.float32),
            qkv_w=tn(bk[0], (embed_dim, 3 * embed_dim)),
            qkv_b=jnp.zeros((1, 3 * embed_dim), jnp.float32),
            proj_w=tn(bk[1], (embed_dim, embed_dim)),
            proj_b=jnp.zeros((1, embed_dim), jnp.float32),
            ln2_w=jnp.ones((1, embed_dim), jnp.float32),
            ln2_b=jnp.zeros((1, embed_dim), jnp.float32),
            fc1_w=tn(bk[2], (embed_dim, hidden)),
            fc1_b=jnp.zeros((1, hidden), jnp.float32),
            fc2_w=tn(bk[3], (hidden, embed_dim)),
            fc2_b=jnp.zeros((1, embed_dim), jnp.float32),
        ))
    return params


if __name__ == "__main__":
    # Small config consistent with Vision_Transformer3D:
    #   img_size=(16,16,16), patch_size=8 -> 8 patches, embed_dim=32,
    #   depth=2, n_heads=4, mlp_ratio=4.0, n_classes=10, in_chans=1, batch=4
    #   (batch 4 -> 2 samples per grid step x 2 parallel grid steps).
    B = 4
    img = (16, 16, 16)
    patch = 8
    embed_dim = 32
    depth = 2
    n_heads = 4
    mlp_ratio = 4.0
    n_classes = 10

    key = jax.random.PRNGKey(0)
    kx, kp = jax.random.split(key)
    x = jax.random.normal(kx, (B, 1) + img, dtype=jnp.float32)

    n_patches = (img[0] // patch) * (img[1] // patch) * (img[2] // patch)
    params = init_params(kp, patch_vol=patch ** 3, embed_dim=embed_dim,
                         depth=depth, n_heads=n_heads, mlp_ratio=mlp_ratio,
                         n_classes=n_classes, n_patches=n_patches)

    fwd = jax.jit(functools.partial(vit3d_forward, patch=patch,
                                    embed_dim=embed_dim, n_heads=n_heads))
    logits = fwd(x, params)
    jax.block_until_ready(logits)
    assert logits.shape == (B, n_classes)
    assert bool(jnp.all(jnp.isfinite(logits)))
    print("KERNEL_OK")
</pallas_src>

<mosaic_0001>
module attributes {stable_mosaic.version = 11 : i64} {
  func.func @kernel(%arg0: i32, %arg1: i32, %arg2: memref<2x8x512xbf16, #tpu.memory_space<vmem>>, %arg3: memref<512x32xbf16, #tpu.memory_space<vmem>>, %arg4: memref<9x32xf32, #tpu.memory_space<vmem>>, %arg5: memref<1x16xf32, #tpu.memory_space<vmem>>, %arg6: memref<1x1x32xf32, #tpu.memory_space<vmem>>, %arg7: memref<1x1x32xf32, #tpu.memory_space<vmem>>, %arg8: memref<1x32x96xbf16, #tpu.memory_space<vmem>>, %arg9: memref<1x1x96xf32, #tpu.memory_space<vmem>>, %arg10: memref<1x32x32xbf16, #tpu.memory_space<vmem>>, %arg11: memref<1x1x32xf32, #tpu.memory_space<vmem>>, %arg12: memref<1x1x32xf32, #tpu.memory_space<vmem>>, %arg13: memref<1x1x32xf32, #tpu.memory_space<vmem>>, %arg14: memref<1x32x128xbf16, #tpu.memory_space<vmem>>, %arg15: memref<1x1x128xf32, #tpu.memory_space<vmem>>, %arg16: memref<1x128x32xbf16, #tpu.memory_space<vmem>>, %arg17: memref<1x1x32xf32, #tpu.memory_space<vmem>>, %arg18: memref<1x32xf32, #tpu.memory_space<vmem>>, %arg19: memref<1x32xf32, #tpu.memory_space<vmem>>, %arg20: memref<32x128xbf16, #tpu.memory_space<vmem>>, %arg21: memref<1x128xf32, #tpu.memory_space<vmem>>, %arg22: memref<1x2x128xf32, #tpu.memory_space<vmem>>, %arg23: memref<32x32xf32, #tpu.memory_space<vmem>>, %arg24: memref<2x16x96xbf16, #tpu.memory_space<vmem>>, %arg25: memref<2x16x32xbf16, #tpu.memory_space<vmem>>) attributes {dimension_semantics = [#tpu.dimension_semantics<parallel>, #tpu.dimension_semantics<arbitrary>], iteration_bounds = array<i64: 2, 2>, scalar_prefetch = 0 : i64, scratch_operands = 3 : i64, tpu.core_type = #tpu.core_type<tc>, window_params = [{transform_indices = @transform_0, window_bounds = array<i64: 2, 8, 512>}, {pipeline_mode = #tpu.pipeline_mode<synchronous>, transform_indices = @transform_1, window_bounds = array<i64: 512, 32>}, {pipeline_mode = #tpu.pipeline_mode<synchronous>, transform_indices = @transform_2, window_bounds = array<i64: 9, 32>}, {pipeline_mode = #tpu.pipeline_mode<synchronous>, transform_indices = @transform_3, window_bounds = array<i64: 1, 16>}, {transform_indices = @transform_4, window_bounds = array<i64: 1, 1, 32>}, {transform_indices = @transform_5, window_bounds = array<i64: 1, 1, 32>}, {transform_indices = @transform_6, window_bounds = array<i64: 1, 32, 96>}, {transform_indices = @transform_7, window_bounds = array<i64: 1, 1, 96>}, {transform_indices = @transform_8, window_bounds = array<i64: 1, 32, 32>}, {transform_indices = @transform_9, window_bounds = array<i64: 1, 1, 32>}, {transform_indices = @transform_10, window_bounds = array<i64: 1, 1, 32>}, {transform_indices = @transform_11, window_bounds = array<i64: 1, 1, 32>}, {transform_indices = @transform_12, window_bounds = array<i64: 1, 32, 128>}, {transform_indices = @transform_13, window_bounds = array<i64: 1, 1, 128>}, {transform_indices = @transform_14, window_bounds = array<i64: 1, 128, 32>}, {transform_indices = @transform_15, window_bounds = array<i64: 1, 1, 32>}, {pipeline_mode = #tpu.pipeline_mode<synchronous>, transform_indices = @transform_16, window_bounds = array<i64: 1, 32>}, {pipeline_mode = #tpu.pipeline_mode<synchronous>, transform_indices = @transform_17, window_bounds = array<i64: 1, 32>}, {pipeline_mode = #tpu.pipeline_mode<synchronous>, transform_indices = @transform_18, window_bounds = array<i64: 32, 128>}, {pipeline_mode = #tpu.pipeline_mode<synchronous>, transform_indices = @transform_19, window_bounds = array<i64: 1, 128>}, {transform_indices = @transform_20, window_bounds = array<i64: 1, 2, 128>}]} {
    %c0_i32 = arith.constant 0 : i32
    %0 = arith.cmpi eq, %arg1, %c0_i32 : i32
    %1 = arith.extui %0 : i1 to i32
    %c0_i32_0 = arith.constant 0 : i32
    %2 = arith.cmpi ne, %1, %c0_i32_0 : i32
    scf.if %2 {
      %cst_127 = arith.constant 0.000000e+00 : f32
      %209 = vector.broadcast %cst_127 : f32 to vector<32x32xf32>
      %c0_128 = arith.constant 0 : index
      %c0_129 = arith.constant 0 : index
      %210 = vector.load %arg23[%c0_128, %c0_129] : memref<32x32xf32, #tpu.memory_space<vmem>>, vector<32x32xf32>
      tpu.vector_store %arg23[%c0_128, %c0_129], %209 {strides = array<i32>} : memref<32x32xf32, #tpu.memory_space<vmem>>, vector<32x32xf32>,
      %c0_130 = arith.constant 0 : index
      %c0_131 = arith.constant 0 : index
      %211 = vector.load %arg4[%c0_130, %c0_131] : memref<9x32xf32, #tpu.memory_space<vmem>>, vector<1x32xf32>
      %c1_132 = arith.constant 1 : index
      %c0_133 = arith.constant 0 : index
      %212 = vector.load %arg4[%c1_132, %c0_133] : memref<9x32xf32, #tpu.memory_space<vmem>>, vector<8x32xf32>
      %c0_134 = arith.constant 0 : index
      %c0_135 = arith.constant 0 : index
      %c0_136 = arith.constant 0 : index
      %213 = vector.load %arg2[%c0_134, %c0_135, %c0_136] : memref<2x8x512xbf16, #tpu.memory_space<vmem>>, vector<1x8x512xbf16>
      %214 = vector.shape_cast %213 : vector<1x8x512xbf16> to vector<8x512xbf16>
      %c0_137 = arith.constant 0 : index
      %c0_138 = arith.constant 0 : index
      %215 = vector.load %arg3[%c0_137, %c0_138] : memref<512x32xbf16, #tpu.memory_space<vmem>>, vector<512x32xbf16>
      %cst_139 = arith.constant dense<0.000000e+00> : vector<8x32xf32>
      %216 = tpu.matmul %214, %215, %cst_139 {dimension_numbers = #tpu.dot_dimension_numbers<[1], [0], [0], [1], [0, 0, 1, 1], [], []>} : vector<8x512xbf16>, vector<512x32xbf16>, vector<8x32xf32> -> vector<8x32xf32>
      %c0_140 = arith.constant 0 : index
      %c0_141 = arith.constant 0 : index
      %217 = vector.load %arg23[%c0_140, %c0_141] : memref<32x32xf32, #tpu.memory_space<vmem>>, vector<1x32xf32>
      tpu.vector_store %arg23[%c0_140, %c0_141], %211 {strides = array<i32>} : memref<32x32xf32, #tpu.memory_space<vmem>>, vector<1x32xf32>,
      %218 = arith.addf %216, %212 : vector<8x32xf32>
      %c1_142 = arith.constant 1 : index
      %c0_143 = arith.constant 0 : index
      %219 = vector.load %arg23[%c1_142, %c0_143] : memref<32x32xf32, #tpu.memory_space<vmem>>, vector<8x32xf32>
      tpu.vector_store %arg23[%c1_142, %c0_143], %218 {strides = array<i32>} : memref<32x32xf32, #tpu.memory_space<vmem>>, vector<8x32xf32>,
      %c1_144 = arith.constant 1 : index
      %c0_145 = arith.constant 0 : index
      %c0_146 = arith.constant 0 : index
      %220 = vector.load %arg2[%c1_144, %c0_145, %c0_146] : memref<2x8x512xbf16, #tpu.memory_space<vmem>>, vector<1x8x512xbf16>
      %221 = vector.shape_cast %220 : vector<1x8x512xbf16> to vector<8x512xbf16>
      %c0_147 = arith.constant 0 : index
      %c0_148 = arith.constant 0 : index
      %222 = vector.load %arg3[%c0_147, %c0_148] : memref<512x32xbf16, #tpu.memory_space<vmem>>, vector<512x32xbf16>
      %cst_149 = arith.constant dense<0.000000e+00> : vector<8x32xf32>
      %223 = tpu.matmul %221, %222, %cst_149 {dimension_numbers = #tpu.dot_dimension_numbers<[1], [0], [0], [1], [0, 0, 1, 1], [], []>} : vector<8x512xbf16>, vector<512x32xbf16>, vector<8x32xf32> -> vector<8x32xf32>
      %c16_150 = arith.constant 16 : index
      %c0_151 = arith.constant 0 : index
      %224 = vector.load %arg23[%c16_150, %c0_151] : memref<32x32xf32, #tpu.memory_space<vmem>>, vector<1x32xf32>
      tpu.vector_store %arg23[%c16_150, %c0_151], %211 {strides = array<i32>} : memref<32x32xf32, #tpu.memory_space<vmem>>, vector<1x32xf32>,
      %225 = arith.addf %223, %212 : vector<8x32xf32>
      %c17 = arith.constant 17 : index
      %c0_152 = arith.constant 0 : index
      %226 = vector.load %arg23[%c17, %c0_152] : memref<32x32xf32, #tpu.memory_space<vmem>>, vector<8x32xf32>
      tpu.vector_store %arg23[%c17, %c0_152], %225 {strides = array<i32>} : memref<32x32xf32, #tpu.memory_space<vmem>>, vector<8x32xf32>,
    } else {
    }
    %c0 = arith.constant 0 : index
    %c0_1 = arith.constant 0 : index
    %3 = vector.load %arg23[%c0, %c0_1] : memref<32x32xf32, #tpu.memory_space<vmem>>, vector<32x32xf32>
    %c0_2 = arith.constant 0 : index
    %c0_3 = arith.constant 0 : index
    %c0_4 = arith.constant 0 : index
    %4 = vector.load %arg6[%c0_2, %c0_3, %c0_4] : memref<1x1x32xf32, #tpu.memory_space<vmem>>, vector<1x1x32xf32>
    %5 = vector.shape_cast %4 : vector<1x1x32xf32> to vector<1x32xf32>
    %c0_5 = arith.constant 0 : index
    %c0_6 = arith.constant 0 : index
    %c0_7 = arith.constant 0 : index
    %6 = vector.load %arg7[%c0_5, %c0_6, %c0_7] : memref<1x1x32xf32, #tpu.memory_space<vmem>>, vector<1x1x32xf32>
    %7 = vector.shape_cast %6 : vector<1x1x32xf32> to vector<1x32xf32>
    %cst = arith.constant dense<0.000000e+00> : vector<32xf32>
    %8 = vector.multi_reduction <add>, %3, %cst [1] : vector<32x32xf32> to vector<32xf32>
    %9 = vector.shape_cast %8 : vector<32xf32> to vector<32x1xf32>
    %cst_8 = arith.constant 3.200000e+01 : f32
    %10 = vector.broadcast %cst_8 : f32 to vector<32x1xf32>
    %11 = arith.divf %9, %10 : vector<32x1xf32>
    %12 = vector.broadcast %11 : vector<32x1xf32> to vector<32x32xf32>
    %13 = arith.subf %3, %12 : vector<32x32xf32>
    %14 = arith.mulf %13, %13 : vector<32x32xf32>
    %cst_9 = arith.constant dense<0.000000e+00> : vector<32xf32>
    %15 = vector.multi_reduction <add>, %14, %cst_9 [1] : vector<32x32xf32> to vector<32xf32>
    %16 = vector.shape_cast %15 : vector<32xf32> to vector<32x1xf32>
    %cst_10 = arith.constant 3.200000e+01 : f32
    %17 = vector.broadcast %cst_10 : f32 to vector<32x1xf32>
    %18 = arith.divf %16, %17 : vector<32x1xf32>
    %19 = vector.broadcast %11 : vector<32x1xf32> to vector<32x32xf32>
    %20 = arith.subf %3, %19 : vector<32x32xf32>
    %cst_11 = arith.constant 9.99999997E-7 : f32
    %21 = vector.broadcast %cst_11 : f32 to vector<32x1xf32>
    %22 = arith.addf %18, %21 : vector<32x1xf32>
    %23 = math.rsqrt %22 : vector<32x1xf32>
    %24 = vector.broadcast %23 : vector<32x1xf32> to vector<32x32xf32>
    %25 = arith.mulf %20, %24 : vector<32x32xf32>
    %26 = vector.broadcast %5 : vector<1x32xf32> to vector<32x32xf32>
    %27 = arith.mulf %25, %26 : vector<32x32xf32>
    %28 = vector.broadcast %7 : vector<1x32xf32> to vector<32x32xf32>
    %29 = arith.addf %27, %28 : vector<32x32xf32>
    %30 = arith.truncf %29 : vector<32x32xf32> to vector<32x32xbf16>
    %c0_12 = arith.constant 0 : index
    %c0_13 = arith.constant 0 : index
    %c0_14 = arith.constant 0 : index
    %31 = vector.load %arg8[%c0_12, %c0_13, %c0_14] : memref<1x32x96xbf16, #tpu.memory_space<vmem>>, vector<1x32x96xbf16>
    %32 = vector.shape_cast %31 : vector<1x32x96xbf16> to vector<32x96xbf16>
    %cst_15 = arith.constant dense<0.000000e+00> : vector<32x96xf32>
    %33 = tpu.matmul %30, %32, %cst_15 {dimension_numbers = #tpu.dot_dimension_numbers<[1], [0], [0], [1], [0, 0, 1, 1], [], []>} : vector<32x32xbf16>, vector<32x96xbf16>, vector<32x96xf32> -> vector<32x96xf32>
    %c0_16 = arith.constant 0 : index
    %c0_17 = arith.constant 0 : index
    %c0_18 = arith.constant 0 : index
    %34 = vector.load %arg9[%c0_16, %c0_17, %c0_18] : memref<1x1x96xf32, #tpu.memory_space<vmem>>, vector<1x1x96xf32>
    %35 = vector.shape_cast %34 : vector<1x1x96xf32> to vector<1x96xf32>
    %36 = vector.broadcast %35 : vector<1x96xf32> to vector<32x96xf32>
    %37 = arith.addf %33, %36 : vector<32x96xf32>
    %38 = vector.extract_strided_slice %37 {offsets = [0, 0], sizes = [16, 96], strides = [1, 1]} : vector<32x96xf32> to vector<16x96xf32>
    %39 = arith.truncf %38 : vector<16x96xf32> to vector<16x96xbf16>
    %c0_19 = arith.constant 0 : index
    %c0_20 = arith.constant 0 : index
    %c0_21 = arith.constant 0 : index
    %40 = vector.load %arg24[%c0_19, %c0_20, %c0_21] : memref<2x16x96xbf16, #tpu.memory_space<vmem>>, vector<1x16x96xbf16>
    %41 = vector.shape_cast %40 : vector<1x16x96xbf16> to vector<16x96xbf16>
    %42 = vector.shape_cast %39 : vector<16x96xbf16> to vector<1x16x96xbf16>
    tpu.vector_store %arg24[%c0_19, %c0_20, %c0_21], %42 {strides = array<i32>} : memref<2x16x96xbf16, #tpu.memory_space<vmem>>, vector<1x16x96xbf16>,
    %43 = vector.extract_strided_slice %37 {offsets = [16, 0], sizes = [16, 96], strides = [1, 1]} : vector<32x96xf32> to vector<16x96xf32>
    %44 = arith.truncf %43 : vector<16x96xf32> to vector<16x96xbf16>
    %c1 = arith.constant 1 : index
    %c0_22 = arith.constant 0 : index
    %c0_23 = arith.constant 0 : index
    %45 = vector.load %arg24[%c1, %c0_22, %c0_23] : memref<2x16x96xbf16, #tpu.memory_space<vmem>>, vector<1x16x96xbf16>
    %46 = vector.shape_cast %45 : vector<1x16x96xbf16> to vector<16x96xbf16>
    %47 = vector.shape_cast %44 : vector<16x96xbf16> to vector<1x16x96xbf16>
    tpu.vector_store %arg24[%c1, %c0_22, %c0_23], %47 {strides = array<i32>} : memref<2x16x96xbf16, #tpu.memory_space<vmem>>, vector<1x16x96xbf16>,
    %c0_24 = arith.constant 0 : index
    %c0_25 = arith.constant 0 : index
    %48 = vector.load %arg5[%c0_24, %c0_25] : memref<1x16xf32, #tpu.memory_space<vmem>>, vector<1x16xf32>
    %c0_26 = arith.constant 0 : index
    %c0_27 = arith.constant 0 : index
    %c0_28 = arith.constant 0 : index
    %49 = vector.load %arg24[%c0_26, %c0_27, %c0_28] : memref<2x16x96xbf16, #tpu.memory_space<vmem>>, vector<2x16x8xbf16>
    %c0_29 = arith.constant 0 : index
    %c0_30 = arith.constant 0 : index
    %c32 = arith.constant 32 : index
    %50 = vector.load %arg24[%c0_29, %c0_30, %c32] : memref<2x16x96xbf16, #tpu.memory_space<vmem>>, vector<2x16x8xbf16>
    %c0_31 = arith.constant 0 : index
    %c0_32 = arith.constant 0 : index
    %c64 = arith.constant 64 : index
    %51 = vector.load %arg24[%c0_31, %c0_32, %c64] : memref<2x16x96xbf16, #tpu.memory_space<vmem>>, vector<2x16x8xbf16>
    "tpu.trace_start"() <{level = 10 : i32, message = "bqd,bkd->bqk"}> : () -> ()
    %cst_33 = arith.constant dense<0.000000e+00> : vector<2x16x16xf32>
    %52 = tpu.matmul %49, %50, %cst_33 {dimension_numbers = #tpu.dot_dimension_numbers<[2], [2], [1], [1], [0, 0, 0, 1, 1, 1], [0], [0]>} : vector<2x16x8xbf16>, vector<2x16x8xbf16>, vector<2x16x16xf32> -> vector<2x16x16xf32>
    "tpu.trace_stop"() : () -> ()
    %cst_34 = arith.constant 0.353553385 : f32
    %53 = vector.broadcast %cst_34 : f32 to vector<2x16x16xf32>
    %54 = arith.mulf %52, %53 : vector<2x16x16xf32>
    %55 = vector.shape_cast %48 : vector<1x16xf32> to vector<1x1x16xf32>
    %56 = vector.broadcast %55 : vector<1x1x16xf32> to vector<2x16x16xf32>
    %57 = arith.addf %54, %56 : vector<2x16x16xf32>
    %cst_35 = arith.constant dense<0xFF800000> : vector<2x16xf32>
    %58 = vector.multi_reduction <maximumf>, %57, %cst_35 [2] : vector<2x16x16xf32> to vector<2x16xf32>
    %59 = vector.shape_cast %58 : vector<2x16xf32> to vector<2x16x1xf32>
    %60 = vector.broadcast %59 : vector<2x16x1xf32> to vector<2x16x16xf32>
    %61 = arith.subf %57, %60 : vector<2x16x16xf32>
    %62 = math.exp %61 : vector<2x16x16xf32>
    %cst_36 = arith.constant dense<0.000000e+00> : vector<2x16xf32>
    %63 = vector.multi_reduction <add>, %62, %cst_36 [2] : vector<2x16x16xf32> to vector<2x16xf32>
    %64 = vector.shape_cast %63 : vector<2x16xf32> to vector<2x16x1xf32>
    %65 = tpu.reciprocal %64 : vector<2x16x1xf32> -> vector<2x16x1xf32>
    %66 = vector.broadcast %65 : vector<2x16x1xf32> to vector<2x16x16xf32>
    %67 = arith.mulf %62, %66 : vector<2x16x16xf32>
    %68 = arith.truncf %67 : vector<2x16x16xf32> to vector<2x16x16xbf16>
    "tpu.trace_start"() <{level = 10 : i32, message = "bqk,bkd->bqd"}> : () -> ()
    %cst_37 = arith.constant dense<0.000000e+00> : vector<2x16x8xf32>
    %69 = tpu.matmul %68, %51, %cst_37 {dimension_numbers = #tpu.dot_dimension_numbers<[2], [1], [1], [2], [0, 0, 0, 1, 1, 2], [0], [0]>} : vector<2x16x16xbf16>, vector<2x16x8xbf16>, vector<2x16x8xf32> -> vector<2x16x8xf32>
    "tpu.trace_stop"() : () -> ()
    %70 = arith.truncf %69 : vector<2x16x8xf32> to vector<2x16x8xbf16>
    %c0_38 = arith.constant 0 : index
    %c0_39 = arith.constant 0 : index
    %c0_40 = arith.constant 0 : index
    %71 = vector.load %arg25[%c0_38, %c0_39, %c0_40] : memref<2x16x32xbf16, #tpu.memory_space<vmem>>, vector<2x16x8xbf16>
    tpu.vector_store %arg25[%c0_38, %c0_39, %c0_40], %70 {strides = array<i32>} : memref<2x16x32xbf16, #tpu.memory_space<vmem>>, vector<2x16x8xbf16>,
    %c0_41 = arith.constant 0 : index
    %c0_42 = arith.constant 0 : index
    %c8 = arith.constant 8 : index
    %72 = vector.load %arg24[%c0_41, %c0_42, %c8] : memref<2x16x96xbf16, #tpu.memory_space<vmem>>, vector<2x16x8xbf16>
    %c0_43 = arith.constant 0 : index
    %c0_44 = arith.constant 0 : index
    %c40 = arith.constant 40 : index
    %73 = vector.load %arg24[%c0_43, %c0_44, %c40] : memref<2x16x96xbf16, #tpu.memory_space<vmem>>, vector<2x16x8xbf16>
    %c0_45 = arith.constant 0 : index
    %c0_46 = arith.constant 0 : index
    %c72 = arith.constant 72 : index
    %74 = vector.load %arg24[%c0_45, %c0_46, %c72] : memref<2x16x96xbf16, #tpu.memory_space<vmem>>, vector<2x16x8xbf16>
    "tpu.trace_start"() <{level = 10 : i32, message = "bqd,bkd->bqk"}> : () -> ()
    %cst_47 = arith.constant dense<0.000000e+00> : vector<2x16x16xf32>
    %75 = tpu.matmul %72, %73, %cst_47 {dimension_numbers = #tpu.dot_dimension_numbers<[2], [2], [1], [1], [0, 0, 0, 1, 1, 1], [0], [0]>} : vector<2x16x8xbf16>, vector<2x16x8xbf16>, vector<2x16x16xf32> -> vector<2x16x16xf32>
    "tpu.trace_stop"() : () -> ()
    %cst_48 = arith.constant 0.353553385 : f32
    %76 = vector.broadcast %cst_48 : f32 to vector<2x16x16xf32>
    %77 = arith.mulf %75, %76 : vector<2x16x16xf32>
    %78 = vector.shape_cast %48 : vector<1x16xf32> to vector<1x1x16xf32>
    %79 = vector.broadcast %78 : vector<1x1x16xf32> to vector<2x16x16xf32>
    %80 = arith.addf %77, %79 : vector<2x16x16xf32>
    %cst_49 = arith.constant dense<0xFF800000> : vector<2x16xf32>
    %81 = vector.multi_reduction <maximumf>, %80, %cst_49 [2] : vector<2x16x16xf32> to vector<2x16xf32>
    %82 = vector.shape_cast %81 : vector<2x16xf32> to vector<2x16x1xf32>
    %83 = vector.broadcast %82 : vector<2x16x1xf32> to vector<2x16x16xf32>
    %84 = arith.subf %80, %83 : vector<2x16x16xf32>
    %85 = math.exp %84 : vector<2x16x16xf32>
    %cst_50 = arith.constant dense<0.000000e+00> : vector<2x16xf32>
    %86 = vector.multi_reduction <add>, %85, %cst_50 [2] : vector<2x16x16xf32> to vector<2x16xf32>
    %87 = vector.shape_cast %86 : vector<2x16xf32> to vector<2x16x1xf32>
    %88 = tpu.reciprocal %87 : vector<2x16x1xf32> -> vector<2x16x1xf32>
    %89 = vector.broadcast %88 : vector<2x16x1xf32> to vector<2x16x16xf32>
    %90 = arith.mulf %85, %89 : vector<2x16x16xf32>
    %91 = arith.truncf %90 : vector<2x16x16xf32> to vector<2x16x16xbf16>
    "tpu.trace_start"() <{level = 10 : i32, message = "bqk,bkd->bqd"}> : () -> ()
    %cst_51 = arith.constant dense<0.000000e+00> : vector<2x16x8xf32>
    %92 = tpu.matmul %91, %74, %cst_51 {dimension_numbers = #tpu.dot_dimension_numbers<[2], [1], [1], [2], [0, 0, 0, 1, 1, 2], [0], [0]>} : vector<2x16x16xbf16>, vector<2x16x8xbf16>, vector<2x16x8xf32> -> vector<2x16x8xf32>
    "tpu.trace_stop"() : () -> ()
    %93 = arith.truncf %92 : vector<2x16x8xf32> to vector<2x16x8xbf16>
    %c0_52 = arith.constant 0 : index
    %c0_53 = arith.constant 0 : index
    %c8_54 = arith.constant 8 : index
    %94 = vector.load %arg25[%c0_52, %c0_53, %c8_54] : memref<2x16x32xbf16, #tpu.memory_space<vmem>>, vector<2x16x8xbf16>
    tpu.vector_store %arg25[%c0_52, %c0_53, %c8_54], %93 {strides = array<i32>} : memref<2x16x32xbf16, #tpu.memory_space<vmem>>, vector<2x16x8xbf16>,
    %c0_55 = arith.constant 0 : index
    %c0_56 = arith.constant 0 : index
    %c16 = arith.constant 16 : index
    %95 = vector.load %arg24[%c0_55, %c0_56, %c16] : memref<2x16x96xbf16, #tpu.memory_space<vmem>>, vector<2x16x8xbf16>
    %c0_57 = arith.constant 0 : index
    %c0_58 = arith.constant 0 : index
    %c48 = arith.constant 48 : index
    %96 = vector.load %arg24[%c0_57, %c0_58, %c48] : memref<2x16x96xbf16, #tpu.memory_space<vmem>>, vector<2x16x8xbf16>
    %c0_59 = arith.constant 0 : index
    %c0_60 = arith.constant 0 : index
    %c80 = arith.constant 80 : index
    %97 = vector.load %arg24[%c0_59, %c0_60, %c80] : memref<2x16x96xbf16, #tpu.memory_space<vmem>>, vector<2x16x8xbf16>
    "tpu.trace_start"() <{level = 10 : i32, message = "bqd,bkd->bqk"}> : () -> ()
    %cst_61 = arith.constant dense<0.000000e+00> : vector<2x16x16xf32>
    %98 = tpu.matmul %95, %96, %cst_61 {dimension_numbers = #tpu.dot_dimension_numbers<[2], [2], [1], [1], [0, 0, 0, 1, 1, 1], [0], [0]>} : vector<2x16x8xbf16>, vector<2x16x8xbf16>, vector<2x16x16xf32> -> vector<2x16x16xf32>
    "tpu.trace_stop"() : () -> ()
    %cst_62 = arith.constant 0.353553385 : f32
    %99 = vector.broadcast %cst_62 : f32 to vector<2x16x16xf32>
    %100 = arith.mulf %98, %99 : vector<2x16x16xf32>
    %101 = vector.shape_cast %48 : vector<1x16xf32> to vector<1x1x16xf32>
    %102 = vector.broadcast %101 : vector<1x1x16xf32> to vector<2x16x16xf32>
    %103 = arith.addf %100, %102 : vector<2x16x16xf32>
    %cst_63 = arith.constant dense<0xFF800000> : vector<2x16xf32>
    %104 = vector.multi_reduction <maximumf>, %103, %cst_63 [2] : vector<2x16x16xf32> to vector<2x16xf32>
    %105 = vector.shape_cast %104 : vector<2x16xf32> to vector<2x16x1xf32>
    %106 = vector.broadcast %105 : vector<2x16x1xf32> to vector<2x16x16xf32>
    %107 = arith.subf %103, %106 : vector<2x16x16xf32>
    %108 = math.exp %107 : vector<2x16x16xf32>
    %cst_64 = arith.constant dense<0.000000e+00> : vector<2x16xf32>
    %109 = vector.multi_reduction <add>, %108, %cst_64 [2] : vector<2x16x16xf32> to vector<2x16xf32>
    %110 = vector.shape_cast %109 : vector<2x16xf32> to vector<2x16x1xf32>
    %111 = tpu.reciprocal %110 : vector<2x16x1xf32> -> vector<2x16x1xf32>
    %112 = vector.broadcast %111 : vector<2x16x1xf32> to vector<2x16x16xf32>
    %113 = arith.mulf %108, %112 : vector<2x16x16xf32>
    %114 = arith.truncf %113 : vector<2x16x16xf32> to vector<2x16x16xbf16>
    "tpu.trace_start"() <{level = 10 : i32, message = "bqk,bkd->bqd"}> : () -> ()
    %cst_65 = arith.constant dense<0.000000e+00> : vector<2x16x8xf32>
    %115 = tpu.matmul %114, %97, %cst_65 {dimension_numbers = #tpu.dot_dimension_numbers<[2], [1], [1], [2], [0, 0, 0, 1, 1, 2], [0], [0]>} : vector<2x16x16xbf16>, vector<2x16x8xbf16>, vector<2x16x8xf32> -> vector<2x16x8xf32>
    "tpu.trace_stop"() : () -> ()
    %116 = arith.truncf %115 : vector<2x16x8xf32> to vector<2x16x8xbf16>
    %c0_66 = arith.constant 0 : index
    %c0_67 = arith.constant 0 : index
    %c16_68 = arith.constant 16 : index
    %117 = vector.load %arg25[%c0_66, %c0_67, %c16_68] : memref<2x16x32xbf16, #tpu.memory_space<vmem>>, vector<2x16x8xbf16>
    tpu.vector_store %arg25[%c0_66, %c0_67, %c16_68], %116 {strides = array<i32>} : memref<2x16x32xbf16, #tpu.memory_space<vmem>>, vector<2x16x8xbf16>,
    %c0_69 = arith.constant 0 : index
    %c0_70 = arith.constant 0 : index
    %c24 = arith.constant 24 : index
    %118 = vector.load %arg24[%c0_69, %c0_70, %c24] : memref<2x16x96xbf16, #tpu.memory_space<vmem>>, vector<2x16x8xbf16>
    %c0_71 = arith.constant 0 : index
    %c0_72 = arith.constant 0 : index
    %c56 = arith.constant 56 : index
    %119 = vector.load %arg24[%c0_71, %c0_72, %c56] : memref<2x16x96xbf16, #tpu.memory_space<vmem>>, vector<2x16x8xbf16>
    %c0_73 = arith.constant 0 : index
    %c0_74 = arith.constant 0 : index
    %c88 = arith.constant 88 : index
    %120 = vector.load %arg24[%c0_73, %c0_74, %c88] : memref<2x16x96xbf16, #tpu.memory_space<vmem>>, vector<2x16x8xbf16>
    "tpu.trace_start"() <{level = 10 : i32, message = "bqd,bkd->bqk"}> : () -> ()
    %cst_75 = arith.constant dense<0.000000e+00> : vector<2x16x16xf32>
    %121 = tpu.matmul %118, %119, %cst_75 {dimension_numbers = #tpu.dot_dimension_numbers<[2], [2], [1], [1], [0, 0, 0, 1, 1, 1], [0], [0]>} : vector<2x16x8xbf16>, vector<2x16x8xbf16>, vector<2x16x16xf32> -> vector<2x16x16xf32>
    "tpu.trace_stop"() : () -> ()
    %cst_76 = arith.constant 0.353553385 : f32
    %122 = vector.broadcast %cst_76 : f32 to vector<2x16x16xf32>
    %123 = arith.mulf %121, %122 : vector<2x16x16xf32>
    %124 = vector.shape_cast %48 : vector<1x16xf32> to vector<1x1x16xf32>
    %125 = vector.broadcast %124 : vector<1x1x16xf32> to vector<2x16x16xf32>
    %126 = arith.addf %123, %125 : vector<2x16x16xf32>
    %cst_77 = arith.constant dense<0xFF800000> : vector<2x16xf32>
    %127 = vector.multi_reduction <maximumf>, %126, %cst_77 [2] : vector<2x16x16xf32> to vector<2x16xf32>
    %128 = vector.shape_cast %127 : vector<2x16xf32> to vector<2x16x1xf32>
    %129 = vector.broadcast %128 : vector<2x16x1xf32> to vector<2x16x16xf32>
    %130 = arith.subf %126, %129 : vector<2x16x16xf32>
    %131 = math.exp %130 : vector<2x16x16xf32>
    %cst_78 = arith.constant dense<0.000000e+00> : vector<2x16xf32>
    %132 = vector.multi_reduction <add>, %131, %cst_78 [2] : vector<2x16x16xf32> to vector<2x16xf32>
    %133 = vector.shape_cast %132 : vector<2x16xf32> to vector<2x16x1xf32>
    %134 = tpu.reciprocal %133 : vector<2x16x1xf32> -> vector<2x16x1xf32>
    %135 = vector.broadcast %134 : vector<2x16x1xf32> to vector<2x16x16xf32>
    %136 = arith.mulf %131, %135 : vector<2x16x16xf32>
    %137 = arith.truncf %136 : vector<2x16x16xf32> to vector<2x16x16xbf16>
    "tpu.trace_start"() <{level = 10 : i32, message = "bqk,bkd->bqd"}> : () -> ()
    %cst_79 = arith.constant dense<0.000000e+00> : vector<2x16x8xf32>
    %138 = tpu.matmul %137, %120, %cst_79 {dimension_numbers = #tpu.dot_dimension_numbers<[2], [1], [1], [2], [0, 0, 0, 1, 1, 2], [0], [0]>} : vector<2x16x16xbf16>, vector<2x16x8xbf16>, vector<2x16x8xf32> -> vector<2x16x8xf32>
    "tpu.trace_stop"() : () -> ()
    %139 = arith.truncf %138 : vector<2x16x8xf32> to vector<2x16x8xbf16>
    %c0_80 = arith.constant 0 : index
    %c0_81 = arith.constant 0 : index
    %c24_82 = arith.constant 24 : index
    %140 = vector.load %arg25[%c0_80, %c0_81, %c24_82] : memref<2x16x32xbf16, #tpu.memory_space<vmem>>, vector<2x16x8xbf16>
    tpu.vector_store %arg25[%c0_80, %c0_81, %c24_82], %139 {strides = array<i32>} : memref<2x16x32xbf16, #tpu.memory_space<vmem>>, vector<2x16x8xbf16>,
    %c0_83 = arith.constant 0 : index
    %c0_84 = arith.constant 0 : index
    %c0_85 = arith.constant 0 : index
    %141 = vector.load %arg25[%c0_83, %c0_84, %c0_85] : memref<2x16x32xbf16, #tpu.memory_space<vmem>>, vector<1x16x32xbf16>
    %142 = vector.shape_cast %141 : vector<1x16x32xbf16> to vector<16x32xbf16>
    %c1_86 = arith.constant 1 : index
    %c0_87 = arith.constant 0 : index
    %c0_88 = arith.constant 0 : index
    %143 = vector.load %arg25[%c1_86, %c0_87, %c0_88] : memref<2x16x32xbf16, #tpu.memory_space<vmem>>, vector<1x16x32xbf16>
    %144 = vector.shape_cast %143 : vector<1x16x32xbf16> to vector<16x32xbf16>
    %145 = tpu.concatenate %142, %144 in 0 : vector<16x32xbf16>, vector<16x32xbf16> -> vector<32x32xbf16>
    %c0_89 = arith.constant 0 : index
    %c0_90 = arith.constant 0 : index
    %c0_91 = arith.constant 0 : index
    %146 = vector.load %arg10[%c0_89, %c0_90, %c0_91] : memref<1x32x32xbf16, #tpu.memory_space<vmem>>, vector<1x32x32xbf16>
    %147 = vector.shape_cast %146 : vector<1x32x32xbf16> to vector<32x32xbf16>
    %cst_92 = arith.constant dense<0.000000e+00> : vector<32x32xf32>
    %148 = tpu.matmul %145, %147, %cst_92 {dimension_numbers = #tpu.dot_dimension_numbers<[1], [0], [0], [1], [0, 0, 1, 1], [], []>} : vector<32x32xbf16>, vector<32x32xbf16>, vector<32x32xf32> -> vector<32x32xf32>
    %c0_93 = arith.constant 0 : index
    %c0_94 = arith.constant 0 : index
    %c0_95 = arith.constant 0 : index
    %149 = vector.load %arg11[%c0_93, %c0_94, %c0_95] : memref<1x1x32xf32, #tpu.memory_space<vmem>>, vector<1x1x32xf32>
    %150 = vector.shape_cast %149 : vector<1x1x32xf32> to vector<1x32xf32>
    %151 = vector.broadcast %150 : vector<1x32xf32> to vector<32x32xf32>
    %152 = arith.addf %148, %151 : vector<32x32xf32>
    %153 = arith.addf %3, %152 : vector<32x32xf32>
    %c0_96 = arith.constant 0 : index
    %c0_97 = arith.constant 0 : index
    %c0_98 = arith.constant 0 : index
    %154 = vector.load %arg12[%c0_96, %c0_97, %c0_98] : memref<1x1x32xf32, #tpu.memory_space<vmem>>, vector<1x1x32xf32>
    %155 = vector.shape_cast %154 : vector<1x1x32xf32> to vector<1x32xf32>
    %c0_99 = arith.constant 0 : index
    %c0_100 = arith.constant 0 : index
    %c0_101 = arith.constant 0 : index
    %156 = vector.load %arg13[%c0_99, %c0_100, %c0_101] : memref<1x1x32xf32, #tpu.memory_space<vmem>>, vector<1x1x32xf32>
    %157 = vector.shape_cast %156 : vector<1x1x32xf32> to vector<1x32xf32>
    %cst_102 = arith.constant dense<0.000000e+00> : vector<32xf32>
    %158 = vector.multi_reduction <add>, %153, %cst_102 [1] : vector<32x32xf32> to vector<32xf32>
    %159 = vector.shape_cast %158 : vector<32xf32> to vector<32x1xf32>
    %cst_103 = arith.constant 3.200000e+01 : f32
    %160 = vector.broadcast %cst_103 : f32 to vector<32x1xf32>
    %161 = arith.divf %159, %160 : vector<32x1xf32>
    %162 = vector.broadcast %161 : vector<32x1xf32> to vector<32x32xf32>
    %163 = arith.subf %153, %162 : vector<32x32xf32>
    %164 = arith.mulf %163, %163 : vector<32x32xf32>
    %cst_104 = arith.constant dense<0.000000e+00> : vector<32xf32>
    %165 = vector.multi_reduction <add>, %164, %cst_104 [1] : vector<32x32xf32> to vector<32xf32>
    %166 = vector.shape_cast %165 : vector<32xf32> to vector<32x1xf32>
    %cst_105 = arith.constant 3.200000e+01 : f32
    %167 = vector.broadcast %cst_105 : f32 to vector<32x1xf32>
    %168 = arith.divf %166, %167 : vector<32x1xf32>
    %169 = vector.broadcast %161 : vector<32x1xf32> to vector<32x32xf32>
    %170 = arith.subf %153, %169 : vector<32x32xf32>
    %cst_106 = arith.constant 9.99999997E-7 : f32
    %171 = vector.broadcast %cst_106 : f32 to vector<32x1xf32>
    %172 = arith.addf %168, %171 : vector<32x1xf32>
    %173 = math.rsqrt %172 : vector<32x1xf32>
    %174 = vector.broadcast %173 : vector<32x1xf32> to vector<32x32xf32>
    %175 = arith.mulf %170, %174 : vector<32x32xf32>
    %176 = vector.broadcast %155 : vector<1x32xf32> to vector<32x32xf32>
    %177 = arith.mulf %175, %176 : vector<32x32xf32>
    %178 = vector.broadcast %157 : vector<1x32xf32> to vector<32x32xf32>
    %179 = arith.addf %177, %178 : vector<32x32xf32>
    %180 = arith.truncf %179 : vector<32x32xf32> to vector<32x32xbf16>
    %c0_107 = arith.constant 0 : index
    %c0_108 = arith.constant 0 : index
    %c0_109 = arith.constant 0 : index
    %181 = vector.load %arg14[%c0_107, %c0_108, %c0_109] : memref<1x32x128xbf16, #tpu.memory_space<vmem>>, vector<1x32x128xbf16>
    %182 = vector.shape_cast %181 : vector<1x32x128xbf16> to vector<32x128xbf16>
    %cst_110 = arith.constant dense<0.000000e+00> : vector<32x128xf32>
    %183 = tpu.matmul %180, %182, %cst_110 {dimension_numbers = #tpu.dot_dimension_numbers<[1], [0], [0], [1], [0, 0, 1, 1], [], []>} : vector<32x32xbf16>, vector<32x128xbf16>, vector<32x128xf32> -> vector<32x128xf32>
    %c0_111 = arith.constant 0 : index
    %c0_112 = arith.constant 0 : index
    %c0_113 = arith.constant 0 : index
    %184 = vector.load %arg15[%c0_111, %c0_112, %c0_113] : memref<1x1x128xf32, #tpu.memory_space<vmem>>, vector<1x1x128xf32>
    %185 = vector.shape_cast %184 : vector<1x1x128xf32> to vector<1x128xf32>
    %186 = vector.broadcast %185 : vector<1x128xf32> to vector<32x128xf32>
    %187 = arith.addf %183, %186 : vector<32x128xf32>
    %cst_114 = arith.constant 5.000000e-01 : f32
    %188 = vector.broadcast %cst_114 : f32 to vector<32x128xf32>
    %189 = arith.mulf %188, %187 : vector<32x128xf32>
    %cst_115 = arith.constant 0.707106769 : f32
    %190 = vector.broadcast %cst_115 : f32 to vector<32x128xf32>
    %191 = arith.mulf %187, %190 : vector<32x128xf32>
    %192 = math.erf %191 : vector<32x128xf32>
    %cst_116 = arith.constant 1.000000e+00 : f32
    %193 = vector.broadcast %cst_116 : f32 to vector<32x128xf32>
    %194 = arith.addf %193, %192 : vector<32x128xf32>
    %195 = arith.mulf %189, %194 : vector<32x128xf32>
    %196 = arith.truncf %195 : vector<32x128xf32> to vector<32x128xbf16>
    %c0_117 = arith.constant 0 : index
    %c0_118 = arith.constant 0 : index
    %c0_119 = arith.constant 0 : index
    %197 = vector.load %arg16[%c0_117, %c0_118, %c0_119] : memref<1x128x32xbf16, #tpu.memory_space<vmem>>, vector<1x128x32xbf16>
    %198 = vector.shape_cast %197 : vector<1x128x32xbf16> to vector<128x32xbf16>
    %cst_120 = arith.constant dense<0.000000e+00> : vector<32x32xf32>
    %199 = tpu.matmul %196, %198, %cst_120 {dimension_numbers = #tpu.dot_dimension_numbers<[1], [0], [0], [1], [0, 0, 1, 1], [], []>} : vector<32x128xbf16>, vector<128x32xbf16>, vector<32x32xf32> -> vector<32x32xf32>
    %c0_121 = arith.constant 0 : index
    %c0_122 = arith.constant 0 : index
    %c0_123 = arith.constant 0 : index
    %200 = vector.load %arg17[%c0_121, %c0_122, %c0_123] : memref<1x1x32xf32, #tpu.memory_space<vmem>>, vector<1x1x32xf32>
    %201 = vector.shape_cast %200 : vector<1x1x32xf32> to vector<1x32xf32>
    %202 = vector.broadcast %201 : vector<1x32xf32> to vector<32x32xf32>
    %203 = arith.addf %199, %202 : vector<32x32xf32>
    %204 = arith.addf %153, %203 : vector<32x32xf32>
    %c0_124 = arith.constant 0 : index
    %c0_125 = arith.constant 0 : index
    %205 = vector.load %arg23[%c0_124, %c0_125] : memref<32x32xf32, #tpu.memory_space<vmem>>, vector<32x32xf32>
    tpu.vector_store %arg23[%c0_124, %c0_125], %204 {strides = array<i32>} : memref<32x32xf32, #tpu.memory_space<vmem>>, vector<32x32xf32>,
    %c1_i32 = arith.constant 1 : i32
    %206 = arith.cmpi eq, %arg1, %c1_i32 : i32
    %207 = arith.extui %206 : i1 to i32
    %c0_i32_126 = arith.constant 0 : i32
    %208 = arith.cmpi ne, %207, %c0_i32_126 : i32
    scf.if %208 {
      %c0_127 = arith.constant 0 : index
      %c0_128 = arith.constant 0 : index
      %209 = vector.load %arg23[%c0_127, %c0_128] : memref<32x32xf32, #tpu.memory_space<vmem>>, vector<32x32xf32>
      %210 = vector.extract_strided_slice %209 {offsets = [0, 0], sizes = [1, 32], strides = [1, 1]} : vector<32x32xf32> to vector<1x32xf32>
      %211 = vector.extract_strided_slice %209 {offsets = [16, 0], sizes = [1, 32], strides = [1, 1]} : vector<32x32xf32> to vector<1x32xf32>
      %212 = tpu.concatenate %210, %211 in 0 : vector<1x32xf32>, vector<1x32xf32> -> vector<2x32xf32>
      %c0_129 = arith.constant 0 : index
      %c0_130 = arith.constant 0 : index
      %213 = vector.load %arg18[%c0_129, %c0_130] : memref<1x32xf32, #tpu.memory_space<vmem>>, vector<1x32xf32>
      %c0_131 = arith.constant 0 : index
      %c0_132 = arith.constant 0 : index
      %214 = vector.load %arg19[%c0_131, %c0_132] : memref<1x32xf32, #tpu.memory_space<vmem>>, vector<1x32xf32>
      %cst_133 = arith.constant dense<0.000000e+00> : vector<2xf32>
      %215 = vector.multi_reduction <add>, %212, %cst_133 [1] : vector<2x32xf32> to vector<2xf32>
      %216 = vector.shape_cast %215 : vector<2xf32> to vector<2x1xf32>
      %cst_134 = arith.constant 3.200000e+01 : f32
      %217 = vector.broadcast %cst_134 : f32 to vector<2x1xf32>
      %218 = arith.divf %216, %217 : vector<2x1xf32>
      %219 = vector.broadcast %218 : vector<2x1xf32> to vector<2x32xf32>
      %220 = arith.subf %212, %219 : vector<2x32xf32>
      %221 = arith.mulf %220, %220 : vector<2x32xf32>
      %cst_135 = arith.constant dense<0.000000e+00> : vector<2xf32>
      %222 = vector.multi_reduction <add>, %221, %cst_135 [1] : vector<2x32xf32> to vector<2xf32>
      %223 = vector.shape_cast %222 : vector<2xf32> to vector<2x1xf32>
      %cst_136 = arith.constant 3.200000e+01 : f32
      %224 = vector.broadcast %cst_136 : f32 to vector<2x1xf32>
      %225 = arith.divf %223, %224 : vector<2x1xf32>
      %226 = vector.broadcast %218 : vector<2x1xf32> to vector<2x32xf32>
      %227 = arith.subf %212, %226 : vector<2x32xf32>
      %cst_137 = arith.constant 9.99999997E-7 : f32
      %228 = vector.broadcast %cst_137 : f32 to vector<2x1xf32>
      %229 = arith.addf %225, %228 : vector<2x1xf32>
      %230 = math.rsqrt %229 : vector<2x1xf32>
      %231 = vector.broadcast %230 : vector<2x1xf32> to vector<2x32xf32>
      %232 = arith.mulf %227, %231 : vector<2x32xf32>
      %233 = vector.broadcast %213 : vector<1x32xf32> to vector<2x32xf32>
      %234 = arith.mulf %232, %233 : vector<2x32xf32>
      %235 = vector.broadcast %214 : vector<1x32xf32> to vector<2x32xf32>
      %236 = arith.addf %234, %235 : vector<2x32xf32>
      %237 = arith.truncf %236 : vector<2x32xf32> to vector<2x32xbf16>
      %c0_138 = arith.constant 0 : index
      %c0_139 = arith.constant 0 : index
      %238 = vector.load %arg20[%c0_138, %c0_139] : memref<32x128xbf16, #tpu.memory_space<vmem>>, vector<32x128xbf16>
      %cst_140 = arith.constant dense<0.000000e+00> : vector<2x128xf32>
      %239 = tpu.matmul %237, %238, %cst_140 {dimension_numbers = #tpu.dot_dimension_numbers<[1], [0], [0], [1], [0, 0, 1, 1], [], []>} : vector<2x32xbf16>, vector<32x128xbf16>, vector<2x128xf32> -> vector<2x128xf32>
      %c0_141 = arith.constant 0 : index
      %c0_142 = arith.constant 0 : index
      %240 = vector.load %arg21[%c0_141, %c0_142] : memref<1x128xf32, #tpu.memory_space<vmem>>, vector<1x128xf32>
      %241 = vector.broadcast %240 : vector<1x128xf32> to vector<2x128xf32>
      %242 = arith.addf %239, %241 : vector<2x128xf32>
      %c0_143 = arith.constant 0 : index
      %c0_144 = arith.constant 0 : index
      %c0_145 = arith.constant 0 : index
      %243 = vector.load %arg22[%c0_143, %c0_144, %c0_145] : memref<1x2x128xf32, #tpu.memory_space<vmem>>, vector<1x2x128xf32>
      %244 = vector.shape_cast %243 : vector<1x2x128xf32> to vector<2x128xf32>
      %245 = vector.shape_cast %242 : vector<2x128xf32> to vector<1x2x128xf32>
      tpu.vector_store %arg22[%c0_143, %c0_144, %c0_145], %245 {strides = array<i32>} : memref<1x2x128xf32, #tpu.memory_space<vmem>>, vector<1x2x128xf32>,
    } else {
    }
    return
  }
  func.func @transform_0(%arg0: i32, %arg1: i32) -> (i32, i32, i32) {
    %c0_i32 = arith.constant 0 : i32
    %c0_i32_0 = arith.constant 0 : i32
    %c0_i32_1 = arith.constant 0 : i32
    return %arg0, %c0_i32, %c0_i32_0 : i32, i32, i32
  }
  func.func @transform_1(%arg0: i32, %arg1: i32) -> (i32, i32) {
    %c0_i32 = arith.constant 0 : i32
    %c0_i32_0 = arith.constant 0 : i32
    %c0_i32_1 = arith.constant 0 : i32
    return %c0_i32, %c0_i32_0 : i32, i32
  }
  func.func @transform_2(%arg0: i32, %arg1: i32) -> (i32, i32) {
    %c0_i32 = arith.constant 0 : i32
    %c0_i32_0 = arith.constant 0 : i32
    %c0_i32_1 = arith.constant 0 : i32
    return %c0_i32, %c0_i32_0 : i32, i32
  }
  func.func @transform_3(%arg0: i32, %arg1: i32) -> (i32, i32) {
    %c0_i32 = arith.constant 0 : i32
    %c0_i32_0 = arith.constant 0 : i32
    %c0_i32_1 = arith.constant 0 : i32
    return %c0_i32, %c0_i32_0 : i32, i32
  }
  func.func @transform_4(%arg0: i32, %arg1: i32) -> (i32, i32, i32) {
    %c0_i32 = arith.constant 0 : i32
    %c0_i32_0 = arith.constant 0 : i32
    %c0_i32_1 = arith.constant 0 : i32
    return %arg1, %c0_i32, %c0_i32_0 : i32, i32, i32
  }
  func.func @transform_5(%arg0: i32, %arg1: i32) -> (i32, i32, i32) {
    %c0_i32 = arith.constant 0 : i32
    %c0_i32_0 = arith.constant 0 : i32
    %c0_i32_1 = arith.constant 0 : i32
    return %arg1, %c0_i32, %c0_i32_0 : i32, i32, i32
  }
  func.func @transform_6(%arg0: i32, %arg1: i32) -> (i32, i32, i32) {
    %c0_i32 = arith.constant 0 : i32
    %c0_i32_0 = arith.constant 0 : i32
    %c0_i32_1 = arith.constant 0 : i32
    return %arg1, %c0_i32, %c0_i32_0 : i32, i32, i32
  }
  func.func @transform_7(%arg0: i32, %arg1: i32) -> (i32, i32, i32) {
    %c0_i32 = arith.constant 0 : i32
    %c0_i32_0 = arith.constant 0 : i32
    %c0_i32_1 = arith.constant 0 : i32
    return %arg1, %c0_i32, %c0_i32_0 : i32, i32, i32
  }
  func.func @transform_8(%arg0: i32, %arg1: i32) -> (i32, i32, i32) {
    %c0_i32 = arith.constant 0 : i32
    %c0_i32_0 = arith.constant 0 : i32
    %c0_i32_1 = arith.constant 0 : i32
    return %arg1, %c0_i32, %c0_i32_0 : i32, i32, i32
  }
  func.func @transform_9(%arg0: i32, %arg1: i32) -> (i32, i32, i32) {
    %c0_i32 = arith.constant 0 : i32
    %c0_i32_0 = arith.constant 0 : i32
    %c0_i32_1 = arith.constant 0 : i32
    return %arg1, %c0_i32, %c0_i32_0 : i32, i32, i32
  }
  func.func @transform_10(%arg0: i32, %arg1: i32) -> (i32, i32, i32) {
    %c0_i32 = arith.constant 0 : i32
    %c0_i32_0 = arith.constant 0 : i32
    %c0_i32_1 = arith.constant 0 : i32
    return %arg1, %c0_i32, %c0_i32_0 : i32, i32, i32
  }
  func.func @transform_11(%arg0: i32, %arg1: i32) -> (i32, i32, i32) {
    %c0_i32 = arith.constant 0 : i32
    %c0_i32_0 = arith.constant 0 : i32
    %c0_i32_1 = arith.constant 0 : i32
    return %arg1, %c0_i32, %c0_i32_0 : i32, i32, i32
  }
  func.func @transform_12(%arg0: i32, %arg1: i32) -> (i32, i32, i32) {
    %c0_i32 = arith.constant 0 : i32
    %c0_i32_0 = arith.constant 0 : i32
    %c0_i32_1 = arith.constant 0 : i32
    return %arg1, %c0_i32, %c0_i32_0 : i32, i32, i32
  }
  func.func @transform_13(%arg0: i32, %arg1: i32) -> (i32, i32, i32) {
    %c0_i32 = arith.constant 0 : i32
    %c0_i32_0 = arith.constant 0 : i32
    %c0_i32_1 = arith.constant 0 : i32
    return %arg1, %c0_i32, %c0_i32_0 : i32, i32, i32
  }
  func.func @transform_14(%arg0: i32, %arg1: i32) -> (i32, i32, i32) {
    %c0_i32 = arith.constant 0 : i32
    %c0_i32_0 = arith.constant 0 : i32
    %c0_i32_1 = arith.constant 0 : i32
    return %arg1, %c0_i32, %c0_i32_0 : i32, i32, i32
  }
  func.func @transform_15(%arg0: i32, %arg1: i32) -> (i32, i32, i32) {
    %c0_i32 = arith.constant 0 : i32
    %c0_i32_0 = arith.constant 0 : i32
    %c0_i32_1 = arith.constant 0 : i32
    return %arg1, %c0_i32, %c0_i32_0 : i32, i32, i32
  }
  func.func @transform_16(%arg0: i32, %arg1: i32) -> (i32, i32) {
    %c0_i32 = arith.constant 0 : i32
    %c0_i32_0 = arith.constant 0 : i32
    %c0_i32_1 = arith.constant 0 : i32
    return %c0_i32, %c0_i32_0 : i32, i32
  }
  func.func @transform_17(%arg0: i32, %arg1: i32) -> (i32, i32) {
    %c0_i32 = arith.constant 0 : i32
    %c0_i32_0 = arith.constant 0 : i32
    %c0_i32_1 = arith.constant 0 : i32
    return %c0_i32, %c0_i32_0 : i32, i32
  }
  func.func @transform_18(%arg0: i32, %arg1: i32) -> (i32, i32) {
    %c0_i32 = arith.constant 0 : i32
    %c0_i32_0 = arith.constant 0 : i32
    %c0_i32_1 = arith.constant 0 : i32
    return %c0_i32, %c0_i32_0 : i32, i32
  }
  func.func @transform_19(%arg0: i32, %arg1: i32) -> (i32, i32) {
    %c0_i32 = arith.constant 0 : i32
    %c0_i32_0 = arith.constant 0 : i32
    %c0_i32_1 = arith.constant 0 : i32
    return %c0_i32, %c0_i32_0 : i32, i32
  }
  func.func @transform_20(%arg0: i32, %arg1: i32) -> (i32, i32, i32) {
    %c0_i32 = arith.constant 0 : i32
    %c0_i32_0 = arith.constant 0 : i32
    %c0_i32_1 = arith.constant 0 : i32
    return %arg0, %c0_i32, %c0_i32_0 : i32, i32, i32
  }
}

</mosaic_0001>

<llo_original>
// kernel: vit3d_forward.1
$region0: #{vit3d_forward.1}
  #allocation0 [shape = 'u32[]', space=smem, size = 0x4, offset = 0x4, fixed_abs, tag = 'smem constant byte address 0x4 - core index']
  #allocation1 [shape = 'u32[144,128]{1,0:T(1,128)}', space=vmem, size = 0x12000, scoped, tag = 'internal scratch']
  #allocation2 [shape = 'f32[32,32]{1,0:T(8,128)}', space=vmem, size = 0x4000, scoped, tag = 'scratch operand']
  #allocation3 [shape = 'bf16[2,16,96]{2,1,0:T(16,128)(2,1)}', space=vmem, size = 0x2000, scoped, tag = 'scratch operand']
  #allocation4 [shape = 'bf16[2,16,32]{2,1,0:T(16,128)(2,1)}', space=vmem, size = 0x2000, scoped, tag = 'scratch operand']
  %s0 = inlined_call_operand.vmem [shape: bf16[4,8,512], index: 0, kind: input, shape index: {}]
  %s1 = inlined_call_operand.vmem [shape: bf16[512,32], index: 1, kind: input, shape index: {}]
  %s2 = inlined_call_operand.vmem [shape: f32[9,32], index: 2, kind: input, shape index: {}]
  %s3 = inlined_call_operand.vmem [shape: f32[1,16], index: 3, kind: input, shape index: {}]
  %s4 = inlined_call_operand.vmem [shape: f32[2,1,32], index: 4, kind: input, shape index: {}]
  %s5 = inlined_call_operand.vmem [shape: f32[2,1,32], index: 5, kind: input, shape index: {}]
  %s6 = inlined_call_operand.vmem [shape: bf16[2,32,96], index: 6, kind: input, shape index: {}]
  %s7 = inlined_call_operand.vmem [shape: f32[2,1,96], index: 7, kind: input, shape index: {}]
  %s8 = inlined_call_operand.vmem [shape: bf16[2,32,32], index: 8, kind: input, shape index: {}]
  %s9 = inlined_call_operand.vmem [shape: f32[2,1,32], index: 9, kind: input, shape index: {}]
  %s10 = inlined_call_operand.vmem [shape: f32[2,1,32], index: 10, kind: input, shape index: {}]
  %s11 = inlined_call_operand.vmem [shape: f32[2,1,32], index: 11, kind: input, shape index: {}]
  %s12 = inlined_call_operand.vmem [shape: bf16[2,32,128], index: 12, kind: input, shape index: {}]
  %s13 = inlined_call_operand.vmem [shape: f32[2,1,128], index: 13, kind: input, shape index: {}]
  %s14 = inlined_call_operand.vmem [shape: bf16[2,128,32], index: 14, kind: input, shape index: {}]
  %s15 = inlined_call_operand.vmem [shape: f32[2,1,32], index: 15, kind: input, shape index: {}]
  %s16 = inlined_call_operand.vmem [shape: f32[1,32], index: 16, kind: input, shape index: {}]
  %s17 = inlined_call_operand.vmem [shape: f32[1,32], index: 17, kind: input, shape index: {}]
  %s18 = inlined_call_operand.vmem [shape: bf16[32,128], index: 18, kind: input, shape index: {}]
  %s19 = inlined_call_operand.vmem [shape: f32[1,128], index: 19, kind: input, shape index: {}]
  %s20 = inlined_call_operand.hbm [shape: f32[2,2,128], index: 20, kind: output, shape index: {}]
  %s21 = sld [smem:[#allocation0]]
  $region121: #{vit3d_forward.1} parent=0
    _
  %s23 = ssub.s32 1, %s21
  %s24 = scalar_select 0, %s23, %s21
  $region1: #{vit3d_forward.1} parent=0
    #allocation5 [shape = 'u8[2048]{0}', space=vmem, size = 0x800, scoped, tag = 'output window, operand 0']
    #allocation6 [shape = 's32[2]{0}', space=sflag, size = 0x8, scoped, tag = 'scoped memory for vit3d_forward.1']
    %25 = vsyncpa [#allocation6], 0
    %s26 = scalar_lea.sflag [#allocation6], 1
    %27 = vsyncpa %s26, 0
    loop: start=0, step=1, limit=6
    $region2: #{vit3d_forward.1} parent=1 // loop_pre_header
      _
    $region3: #{vit3d_forward.1} parent=1 // loop_header
      %s29 = sphi 0, %s33
      %p30 = scmp.ge.s32.totalorder %s29, 6
      %s36 = sphi 0, %s48
      %s37 = sphi 0, %s44
      %s38 = sphi 0, %s36
      %s39 = sphi 0, %s37
      %s40 = sphi 0, %s38
      %s41 = sphi 0, %s39
      %s51 = sphi 0, %s53
      %s54 = sphi 0, %s51
      %s55 = sphi 0, %s54
      %s71 = sphi 0, %s55
      %s75 = sphi 0, %s75
      %s77 = sphi 0, %s75
      %s78 = sphi 0, %s77
      %s92 = sphi 0, %s78
      %s96 = sphi 0, %s96
      %s98 = sphi 0, %s96
      %s99 = sphi 0, %s98
      %s113 = sphi 0, %s99
      %s117 = sphi 0, %s117
      %s119 = sphi 0, %s117
      %s120 = sphi 0, %s119
      %s134 = sphi 0, %s120
      %s140 = sphi 0, %s142
      %s143 = sphi 0, %s140
      %s144 = sphi 0, %s143
      %s160 = sphi 0, %s144
      %s166 = sphi 0, %s168
      %s169 = sphi 0, %s166
      %s170 = sphi 0, %s169
      %s186 = sphi 0, %s170
      %s192 = sphi 0, %s194
      %s195 = sphi 0, %s192
      %s196 = sphi 0, %s195
      %s212 = sphi 0, %s196
      %s218 = sphi 0, %s220
      %s221 = sphi 0, %s218
      %s222 = sphi 0, %s221
      %s238 = sphi 0, %s222
      %s244 = sphi 0, %s246
      %s247 = sphi 0, %s244
      %s248 = sphi 0, %s247
      %s264 = sphi 0, %s248
      %s270 = sphi 0, %s272
      %s273 = sphi 0, %s270
      %s274 = sphi 0, %s273
      %s290 = sphi 0, %s274
      %s296 = sphi 0, %s298
      %s299 = sphi 0, %s296
      %s300 = sphi 0, %s299
      %s316 = sphi 0, %s300
      %s322 = sphi 0, %s324
      %s325 = sphi 0, %s322
      %s326 = sphi 0, %s325
      %s342 = sphi 0, %s326
      %s348 = sphi 0, %s350
      %s351 = sphi 0, %s348
      %s352 = sphi 0, %s351
      %s368 = sphi 0, %s352
      %s374 = sphi 0, %s376
      %s377 = sphi 0, %s374
      %s378 = sphi 0, %s377
      %s394 = sphi 0, %s378
      %s400 = sphi 0, %s402
      %s403 = sphi 0, %s400
      %s404 = sphi 0, %s403
      %s420 = sphi 0, %s404
      %s426 = sphi 0, %s428
      %s429 = sphi 0, %s426
      %s430 = sphi 0, %s429
      %s446 = sphi 0, %s430
      %s450 = sphi 0, %s450
      %s452 = sphi 0, %s450
      %s453 = sphi 0, %s452
      %s467 = sphi 0, %s453
      %s471 = sphi 0, %s471
      %s473 = sphi 0, %s471
      %s474 = sphi 0, %s473
      %s488 = sphi 0, %s474
      %s492 = sphi 0, %s492
      %s494 = sphi 0, %s492
      %s495 = sphi 0, %s494
      %s509 = sphi 0, %s495
      %s513 = sphi 0, %s513
      %s515 = sphi 0, %s513
      %s516 = sphi 0, %s515
      %s530 = sphi 0, %s516
      %s536 = sphi 0, %s538
      %s539 = sphi 0, %s536
      %s540 = sphi 0, %s539
      %s556 = sphi 0, %s540
    $region4: #{vit3d_forward.1} parent=1 // loop_header_branch
      %32 = sbr.rel (%p30) target = $region8
    $region5: #{vit3d_forward.1} parent=1 // loop_body
      %s34 = ssub.s32 %s29, 1
      %s35 = ssub.s32 %s29, 2
      %s42 = sadd.s32 1, %s37
      %p43 = scmp.ge.s32.totalorder %s42, 2
      %s44 = scalar_select %p43, 0, %s42
      %s45 = sadd.s32 1, %s36
      %s46 = scalar_select %p43, %s45, %s36
      %p47 = scmp.ge.s32.totalorder %s46, 2
      %s48 = scalar_select %p47, 0, %s46
      %s49 = ssub.s32 %s36, %s48
      %p50 = scmp.eq.s32.totalorder %s49, 0
      %s52 = sadd.s32 %s51, 1
      %s53 = scalar_select %p50, %s51, %s52
      %p56 = pneg %p50
      %p57 = scmp.eq.s32.totalorder %s29, 3
      %p58 = por %p56, %p57
      %p59 = scmp.ne.s32.totalorder %s51, %s54
      %p60 = scmp.eq.s32.totalorder %s29, 0
      %p61 = por %p59, %p60
      %p62 = scmp.ne.s32.totalorder %s51, %s54
      %p63 = scmp.eq.s32.totalorder %s34, 3
      %p64 = por %p62, %p63
      %p65 = scmp.ne.s32.totalorder %s54, %s55
      %p66 = scmp.eq.s32.totalorder %s34, 0
      %p67 = por %p65, %p66
      %p68 = scmp.ne.s32.totalorder %s54, %s55
      %p69 = scmp.eq.s32.totalorder %s35, 3
      %p70 = por %p68, %p69
      %p72 = scmp.ne.s32.totalorder %s55, %s71
      %p73 = scmp.eq.s32.totalorder %s35, 0
      %p74 = por %p72, %p73
      %s76 = sadd.s32 %s75, 1
      %p79 = scmp.eq.s32.totalorder %s29, 3
      %p80 = scmp.ne.s32.totalorder %s75, %s77
      %p81 = scmp.eq.s32.totalorder %s29, 0
      %p82 = por %p80, %p81
      %p83 = scmp.ne.s32.totalorder %s75, %s77
      %p84 = scmp.eq.s32.totalorder %s34, 3
      %p85 = por %p83, %p84
      %p86 = scmp.ne.s32.totalorder %s77, %s78
      %p87 = scmp.eq.s32.totalorder %s34, 0
      %p88 = por %p86, %p87
      %p89 = scmp.ne.s32.totalorder %s77, %s78
      %p90 = scmp.eq.s32.totalorder %s35, 3
      %p91 = por %p89, %p90
      %p93 = scmp.ne.s32.totalorder %s78, %s92
      %p94 = scmp.eq.s32.totalorder %s35, 0
      %p95 = por %p93, %p94
      %s97 = sadd.s32 %s96, 1
      %p100 = scmp.eq.s32.totalorder %s29, 3
      %p101 = scmp.ne.s32.totalorder %s96, %s98
      %p102 = scmp.eq.s32.totalorder %s29, 0
      %p103 = por %p101, %p102
      %p104 = scmp.ne.s32.totalorder %s96, %s98
      %p105 = scmp.eq.s32.totalorder %s34, 3
      %p106 = por %p104, %p105
      %p107 = scmp.ne.s32.totalorder %s98, %s99
      %p108 = scmp.eq.s32.totalorder %s34, 0
      %p109 = por %p107, %p108
      %p110 = scmp.ne.s32.totalorder %s98, %s99
      %p111 = scmp.eq.s32.totalorder %s35, 3
      %p112 = por %p110, %p111
      %p114 = scmp.ne.s32.totalorder %s99, %s113
      %p115 = scmp.eq.s32.totalorder %s35, 0
      %p116 = por %p114, %p115
      %s118 = sadd.s32 %s117, 1
      %p121 = scmp.eq.s32.totalorder %s29, 3
      %p122 = scmp.ne.s32.totalorder %s117, %s119
      %p123 = scmp.eq.s32.totalorder %s29, 0
      %p124 = por %p122, %p123
      %p125 = scmp.ne.s32.totalorder %s117, %s119
      %p126 = scmp.eq.s32.totalorder %s34, 3
      %p127 = por %p125, %p126
      %p128 = scmp.ne.s32.totalorder %s119, %s120
      %p129 = scmp.eq.s32.totalorder %s34, 0
      %p130 = por %p128, %p129
      %p131 = scmp.ne.s32.totalorder %s119, %s120
      %p132 = scmp.eq.s32.totalorder %s35, 3
      %p133 = por %p131, %p132
      %p135 = scmp.ne.s32.totalorder %s120, %s134
      %p136 = scmp.eq.s32.totalorder %s35, 0
      %p137 = por %p135, %p136
      %s138 = ssub.s32 %s37, %s44
      %p139 = scmp.eq.s32.totalorder %s138, 0
      %s141 = sadd.s32 %s140, 1
      %s142 = scalar_select %p139, %s140, %s141
      %p145 = pneg %p139
      %p146 = scmp.eq.s32.totalorder %s29, 3
      %p147 = por %p145, %p146
      %p148 = scmp.ne.s32.totalorder %s140, %s143
      %p149 = scmp.eq.s32.totalorder %s29, 0
      %p150 = por %p148, %p149
      %p151 = scmp.ne.s32.totalorder %s140, %s143
      %p152 = scmp.eq.s32.totalorder %s34, 3
      %p153 = por %p151, %p152
      %p154 = scmp.ne.s32.totalorder %s143, %s144
      %p155 = scmp.eq.s32.totalorder %s34, 0
      %p156 = por %p154, %p155
      %p157 = scmp.ne.s32.totalorder %s143, %s144
      %p158 = scmp.eq.s32.totalorder %s35, 3
      %p159 = por %p157, %p158
      %p161 = scmp.ne.s32.totalorder %s144, %s160
      %p162 = scmp.eq.s32.totalorder %s35, 0
      %p163 = por %p161, %p162
      %s164 = ssub.s32 %s37, %s44
      %p165 = scmp.eq.s32.totalorder %s164, 0
      %s167 = sadd.s32 %s166, 1
      %s168 = scalar_select %p165, %s166, %s167
      %p171 = pneg %p165
      %p172 = scmp.eq.s32.totalorder %s29, 3
      %p173 = por %p171, %p172
      %p174 = scmp.ne.s32.totalorder %s166, %s169
      %p175 = scmp.eq.s32.totalorder %s29, 0
      %p176 = por %p174, %p175
      %p177 = scmp.ne.s32.totalorder %s166, %s169
      %p178 = scmp.eq.s32.totalorder %s34, 3
      %p179 = por %p177, %p178
      %p180 = scmp.ne.s32.totalorder %s169, %s170
      %p181 = scmp.eq.s32.totalorder %s34, 0
      %p182 = por %p180, %p181
      %p183 = scmp.ne.s32.totalorder %s169, %s170
      %p184 = scmp.eq.s32.totalorder %s35, 3
      %p185 = por %p183, %p184
      %p187 = scmp.ne.s32.totalorder %s170, %s186
      %p188 = scmp.eq.s32.totalorder %s35, 0
      %p189 = por %p187, %p188
      %s190 = ssub.s32 %s37, %s44
      %p191 = scmp.eq.s32.totalorder %s190, 0
      %s193 = sadd.s32 %s192, 1
      %s194 = scalar_select %p191, %s192, %s193
      %p197 = pneg %p191
      %p198 = scmp.eq.s32.totalorder %s29, 3
      %p199 = por %p197, %p198
      %p200 = scmp.ne.s32.totalorder %s192, %s195
      %p201 = scmp.eq.s32.totalorder %s29, 0
      %p202 = por %p200, %p201
      %p203 = scmp.ne.s32.totalorder %s192, %s195
      %p204 = scmp.eq.s32.totalorder %s34, 3
      %p205 = por %p203, %p204
      %p206 = scmp.ne.s32.totalorder %s195, %s196
      %p207 = scmp.eq.s32.totalorder %s34, 0
      %p208 = por %p206, %p207
      %p209 = scmp.ne.s32.totalorder %s195, %s196
      %p210 = scmp.eq.s32.totalorder %s35, 3
      %p211 = por %p209, %p210
      %p213 = scmp.ne.s32.totalorder %s196, %s212
      %p214 = scmp.eq.s32.totalorder %s35, 0
      %p215 = por %p213, %p214
      %s216 = ssub.s32 %s37, %s44
      %p217 = scmp.eq.s32.totalorder %s216, 0
      %s219 = sadd.s32 %s218, 1
      %s220 = scalar_select %p217, %s218, %s219
      %p223 = pneg %p217
      %p224 = scmp.eq.s32.totalorder %s29, 3
      %p225 = por %p223, %p224
      %p226 = scmp.ne.s32.totalorder %s218, %s221
      %p227 = scmp.eq.s32.totalorder %s29, 0
      %p228 = por %p226, %p227
      %p229 = scmp.ne.s32.totalorder %s218, %s221
      %p230 = scmp.eq.s32.totalorder %s34, 3
      %p231 = por %p229, %p230
      %p232 = scmp.ne.s32.totalorder %s221, %s222
      %p233 = scmp.eq.s32.totalorder %s34, 0
      %p234 = por %p232, %p233
      %p235 = scmp.ne.s32.totalorder %s221, %s222
      %p236 = scmp.eq.s32.totalorder %s35, 3
      %p237 = por %p235, %p236
      %p239 = scmp.ne.s32.totalorder %s222, %s238
      %p240 = scmp.eq.s32.totalorder %s35, 0
      %p241 = por %p239, %p240
      %s242 = ssub.s32 %s37, %s44
      %p243 = scmp.eq.s32.totalorder %s242, 0
      %s245 = sadd.s32 %s244, 1
      %s246 = scalar_select %p243, %s244, %s245
      %p249 = pneg %p243
      %p250 = scmp.eq.s32.totalorder %s29, 3
      %p251 = por %p249, %p250
      %p252 = scmp.ne.s32.totalorder %s244, %s247
      %p253 = scmp.eq.s32.totalorder %s29, 0
      %p254 = por %p252, %p253
      %p255 = scmp.ne.s32.totalorder %s244, %s247
      %p256 = scmp.eq.s32.totalorder %s34, 3
      %p257 = por %p255, %p256
      %p258 = scmp.ne.s32.totalorder %s247, %s248
      %p259 = scmp.eq.s32.totalorder %s34, 0
      %p260 = por %p258, %p259
      %p261 = scmp.ne.s32.totalorder %s247, %s248
      %p262 = scmp.eq.s32.totalorder %s35, 3
      %p263 = por %p261, %p262
      %p265 = scmp.ne.s32.totalorder %s248, %s264
      %p266 = scmp.eq.s32.totalorder %s35, 0
      %p267 = por %p265, %p266
      %s268 = ssub.s32 %s37, %s44
      %p269 = scmp.eq.s32.totalorder %s268, 0
      %s271 = sadd.s32 %s270, 1
      %s272 = scalar_select %p269, %s270, %s271
      %p275 = pneg %p269
      %p276 = scmp.eq.s32.totalorder %s29, 3
      %p277 = por %p275, %p276
      %p278 = scmp.ne.s32.totalorder %s270, %s273
      %p279 = scmp.eq.s32.totalorder %s29, 0
      %p280 = por %p278, %p279
      %p281 = scmp.ne.s32.totalorder %s270, %s273
      %p282 = scmp.eq.s32.totalorder %s34, 3
      %p283 = por %p281, %p282
      %p284 = scmp.ne.s32.totalorder %s273, %s274
      %p285 = scmp.eq.s32.totalorder %s34, 0
      %p286 = por %p284, %p285
      %p287 = scmp.ne.s32.totalorder %s273, %s274
      %p288 = scmp.eq.s32.totalorder %s35, 3
      %p289 = por %p287, %p288
      %p291 = scmp.ne.s32.totalorder %s274, %s290
      %p292 = scmp.eq.s32.totalorder %s35, 0
      %p293 = por %p291, %p292
      %s294 = ssub.s32 %s37, %s44
      %p295 = scmp.eq.s32.totalorder %s294, 0
      %s297 = sadd.s32 %s296, 1
      %s298 = scalar_select %p295, %s296, %s297
      %p301 = pneg %p295
      %p302 = scmp.eq.s32.totalorder %s29, 3
      %p303 = por %p301, %p302
      %p304 = scmp.ne.s32.totalorder %s296, %s299
      %p305 = scmp.eq.s32.totalorder %s29, 0
      %p306 = por %p304, %p305
      %p307 = scmp.ne.s32.totalorder %s296, %s299
      %p308 = scmp.eq.s32.totalorder %s34, 3
      %p309 = por %p307, %p308
      %p310 = scmp.ne.s32.totalorder %s299, %s300
      %p311 = scmp.eq.s32.totalorder %s34, 0
      %p312 = por %p310, %p311
      %p313 = scmp.ne.s32.totalorder %s299, %s300
      %p314 = scmp.eq.s32.totalorder %s35, 3
      %p315 = por %p313, %p314
      %p317 = scmp.ne.s32.totalorder %s300, %s316
      %p318 = scmp.eq.s32.totalorder %s35, 0
      %p319 = por %p317, %p318
      %s320 = ssub.s32 %s37, %s44
      %p321 = scmp.eq.s32.totalorder %s320, 0
      %s323 = sadd.s32 %s322, 1
      %s324 = scalar_select %p321, %s322, %s323
      %p327 = pneg %p321
      %p328 = scmp.eq.s32.totalorder %s29, 3
      %p329 = por %p327, %p328
      %p330 = scmp.ne.s32.totalorder %s322, %s325
      %p331 = scmp.eq.s32.totalorder %s29, 0
      %p332 = por %p330, %p331
      %p333 = scmp.ne.s32.totalorder %s322, %s325
      %p334 = scmp.eq.s32.totalorder %s34, 3
      %p335 = por %p333, %p334
      %p336 = scmp.ne.s32.totalorder %s325, %s326
      %p337 = scmp.eq.s32.totalorder %s34, 0
      %p338 = por %p336, %p337
      %p339 = scmp.ne.s32.totalorder %s325, %s326
      %p340 = scmp.eq.s32.totalorder %s35, 3
      %p341 = por %p339, %p340
      %p343 = scmp.ne.s32.totalorder %s326, %s342
      %p344 = scmp.eq.s32.totalorder %s35, 0
      %p345 = por %p343, %p344
      %s346 = ssub.s32 %s37, %s44
      %p347 = scmp.eq.s32.totalorder %s346, 0
      %s349 = sadd.s32 %s348, 1
      %s350 = scalar_select %p347, %s348, %s349
      %p353 = pneg %p347
      %p354 = scmp.eq.s32.totalorder %s29, 3
      %p355 = por %p353, %p354
      %p356 = scmp.ne.s32.totalorder %s348, %s351
      %p357 = scmp.eq.s32.totalorder %s29, 0
      %p358 = por %p356, %p357
      %p359 = scmp.ne.s32.totalorder %s348, %s351
      %p360 = scmp.eq.s32.totalorder %s34, 3
      %p361 = por %p359, %p360
      %p362 = scmp.ne.s32.totalorder %s351, %s352
      %p363 = scmp.eq.s32.totalorder %s34, 0
      %p364 = por %p362, %p363
      %p365 = scmp.ne.s32.totalorder %s351, %s352
      %p366 = scmp.eq.s32.totalorder %s35, 3
      %p367 = por %p365, %p366
      %p369 = scmp.ne.s32.totalorder %s352, %s368
      %p370 = scmp.eq.s32.totalorder %s35, 0
      %p371 = por %p369, %p370
      %s372 = ssub.s32 %s37, %s44
      %p373 = scmp.eq.s32.totalorder %s372, 0
      %s375 = sadd.s32 %s374, 1
      %s376 = scalar_select %p373, %s374, %s375
      %p379 = pneg %p373
      %p380 = scmp.eq.s32.totalorder %s29, 3
      %p381 = por %p379, %p380
      %p382 = scmp.ne.s32.totalorder %s374, %s377
      %p383 = scmp.eq.s32.totalorder %s29, 0
      %p384 = por %p382, %p383
      %p385 = scmp.ne.s32.totalorder %s374, %s377
      %p386 = scmp.eq.s32.totalorder %s34, 3
      %p387 = por %p385, %p386
      %p388 = scmp.ne.s32.totalorder %s377, %s378
      %p389 = scmp.eq.s32.totalorder %s34, 0
      %p390 = por %p388, %p389
      %p391 = scmp.ne.s32.totalorder %s377, %s378
      %p392 = scmp.eq.s32.totalorder %s35, 3
      %p393 = por %p391, %p392
      %p395 = scmp.ne.s32.totalorder %s378, %s394
      %p396 = scmp.eq.s32.totalorder %s35, 0
      %p397 = por %p395, %p396
      %s398 = ssub.s32 %s37, %s44
      %p399 = scmp.eq.s32.totalorder %s398, 0
      %s401 = sadd.s32 %s400, 1
      %s402 = scalar_select %p399, %s400, %s401
      %p405 = pneg %p399
      %p406 = scmp.eq.s32.totalorder %s29, 3
      %p407 = por %p405, %p406
      %p408 = scmp.ne.s32.totalorder %s400, %s403
      %p409 = scmp.eq.s32.totalorder %s29, 0
      %p410 = por %p408, %p409
      %p411 = scmp.ne.s32.totalorder %s400, %s403
      %p412 = scmp.eq.s32.totalorder %s34, 3
      %p413 = por %p411, %p412
      %p414 = scmp.ne.s32.totalorder %s403, %s404
      %p415 = scmp.eq.s32.totalorder %s34, 0
      %p416 = por %p414, %p415
      %p417 = scmp.ne.s32.totalorder %s403, %s404
      %p418 = scmp.eq.s32.totalorder %s35, 3
      %p419 = por %p417, %p418
      %p421 = scmp.ne.s32.totalorder %s404, %s420
      %p422 = scmp.eq.s32.totalorder %s35, 0
      %p423 = por %p421, %p422
      %s424 = ssub.s32 %s37, %s44
      %p425 = scmp.eq.s32.totalorder %s424, 0
      %s427 = sadd.s32 %s426, 1
      %s428 = scalar_select %p425, %s426, %s427
      %p431 = pneg %p425
      %p432 = scmp.eq.s32.totalorder %s29, 3
      %p433 = por %p431, %p432
      %p434 = scmp.ne.s32.totalorder %s426, %s429
      %p435 = scmp.eq.s32.totalorder %s29, 0
      %p436 = por %p434, %p435
      %p437 = scmp.ne.s32.totalorder %s426, %s429
      %p438 = scmp.eq.s32.totalorder %s34, 3
      %p439 = por %p437, %p438
      %p440 = scmp.ne.s32.totalorder %s429, %s430
      %p441 = scmp.eq.s32.totalorder %s34, 0
      %p442 = por %p440, %p441
      %p443 = scmp.ne.s32.totalorder %s429, %s430
      %p444 = scmp.eq.s32.totalorder %s35, 3
      %p445 = por %p443, %p444
      %p447 = scmp.ne.s32.totalorder %s430, %s446
      %p448 = scmp.eq.s32.totalorder %s35, 0
      %p449 = por %p447, %p448
      %s451 = sadd.s32 %s450, 1
      %p454 = scmp.eq.s32.totalorder %s29, 3
      %p455 = scmp.ne.s32.totalorder %s450, %s452
      %p456 = scmp.eq.s32.totalorder %s29, 0
      %p457 = por %p455, %p456
      %p458 = scmp.ne.s32.totalorder %s450, %s452
      %p459 = scmp.eq.s32.totalorder %s34, 3
      %p460 = por %p458, %p459
      %p461 = scmp.ne.s32.totalorder %s452, %s453
      %p462 = scmp.eq.s32.totalorder %s34, 0
      %p463 = por %p461, %p462
      %p464 = scmp.ne.s32.totalorder %s452, %s453
      %p465 = scmp.eq.s32.totalorder %s35, 3
      %p466 = por %p464, %p465
      %p468 = scmp.ne.s32.totalorder %s453, %s467
      %p469 = scmp.eq.s32.totalorder %s35, 0
      %p470 = por %p468, %p469
      %s472 = sadd.s32 %s471, 1
      %p475 = scmp.eq.s32.totalorder %s29, 3
      %p476 = scmp.ne.s32.totalorder %s471, %s473
      %p477 = scmp.eq.s32.totalorder %s29, 0
      %p478 = por %p476, %p477
      %p479 = scmp.ne.s32.totalorder %s471, %s473
      %p480 = scmp.eq.s32.totalorder %s34, 3
      %p481 = por %p479, %p480
      %p482 = scmp.ne.s32.totalorder %s473, %s474
      %p483 = scmp.eq.s32.totalorder %s34, 0
      %p484 = por %p482, %p483
      %p485 = scmp.ne.s32.totalorder %s473, %s474
      %p486 = scmp.eq.s32.totalorder %s35, 3
      %p487 = por %p485, %p486
      %p489 = scmp.ne.s32.totalorder %s474, %s488
      %p490 = scmp.eq.s32.totalorder %s35, 0
      %p491 = por %p489, %p490
      %s493 = sadd.s32 %s492, 1
      %p496 = scmp.eq.s32.totalorder %s29, 3
      %p497 = scmp.ne.s32.totalorder %s492, %s494
      %p498 = scmp.eq.s32.totalorder %s29, 0
      %p499 = por %p497, %p498
      %p500 = scmp.ne.s32.totalorder %s492, %s494
      %p501 = scmp.eq.s32.totalorder %s34, 3
      %p502 = por %p500, %p501
      %p503 = scmp.ne.s32.totalorder %s494, %s495
      %p504 = scmp.eq.s32.totalorder %s34, 0
      %p505 = por %p503, %p504
      %p506 = scmp.ne.s32.totalorder %s494, %s495
      %p507 = scmp.eq.s32.totalorder %s35, 3
      %p508 = por %p506, %p507
      %p510 = scmp.ne.s32.totalorder %s495, %s509
      %p511 = scmp.eq.s32.totalorder %s35, 0
      %p512 = por %p510, %p511
      %s514 = sadd.s32 %s513, 1
      %p517 = scmp.eq.s32.totalorder %s29, 3
      %p518 = scmp.ne.s32.totalorder %s513, %s515
      %p519 = scmp.eq.s32.totalorder %s29, 0
      %p520 = por %p518, %p519
      %p521 = scmp.ne.s32.totalorder %s513, %s515
      %p522 = scmp.eq.s32.totalorder %s34, 3
      %p523 = por %p521, %p522
      %p524 = scmp.ne.s32.totalorder %s515, %s516
      %p525 = scmp.eq.s32.totalorder %s34, 0
      %p526 = por %p524, %p525
      %p527 = scmp.ne.s32.totalorder %s515, %s516
      %p528 = scmp.eq.s32.totalorder %s35, 3
      %p529 = por %p527, %p528
      %p531 = scmp.ne.s32.totalorder %s516, %s530
      %p532 = scmp.eq.s32.totalorder %s35, 0
      %p533 = por %p531, %p532
      %s534 = ssub.s32 %s36, %s48
      %p535 = scmp.eq.s32.totalorder %s534, 0
      %s537 = sadd.s32 %s536, 1
      %s538 = scalar_select %p535, %s536, %s537
      %p541 = pneg %p535
      %p542 = scmp.eq.s32.totalorder %s29, 3
      %p543 = por %p541, %p542
      %p544 = scmp.ne.s32.totalorder %s536, %s539
      %p545 = scmp.eq.s32.totalorder %s29, 0
      %p546 = por %p544, %p545
      %p547 = scmp.ne.s32.totalorder %s536, %s539
      %p548 = scmp.eq.s32.totalorder %s34, 3
      %p549 = por %p547, %p548
      %p550 = scmp.ne.s32.totalorder %s539, %s540
      %p551 = scmp.eq.s32.totalorder %s34, 0
      %p552 = por %p550, %p551
      %p553 = scmp.ne.s32.totalorder %s539, %s540
      %p554 = scmp.eq.s32.totalorder %s35, 3
      %p555 = por %p553, %p554
      %p557 = scmp.ne.s32.totalorder %s540, %s556
      %p558 = scmp.eq.s32.totalorder %s35, 0
      %p559 = por %p557, %p558
      %p560 = scmp.le.s32.totalorder 1, %s29
      %p561 = scmp.lt.s32.totalorder %s29, 5
      %p562 = pnand %p560, %p561
      %p563 = pneg %p562
      // Predicated region
      $region9: #{vit3d_forward.1} parent=5 // pred_check
        _
      $region10: #{vit3d_forward.1} parent=5 // pred_check_branch
        %565 = sbr.rel (%p562) target = $region12
      $region11: #{vit3d_forward.1} parent=5 // pred_region
        %s566 = ssub.s32 %s29, 1
        // Predicated region
        $region13: #{vit3d_forward.1} parent=11 // pred_check
          %p567 = pneg %p88
        $region14: #{vit3d_forward.1} parent=11 // pred_check_branch
          %569 = sbr.rel (%p567) target = $region16
        $region15: #{vit3d_forward.1} parent=11 // pred_region
          _
        $region16: #{vit3d_forward.1} parent=11 // pred_fallthru
          _
        // Predicated region
        $region17: #{vit3d_forward.1} parent=11 // pred_check
          %p570 = pneg %p109
        $region18: #{vit3d_forward.1} parent=11 // pred_check_branch
          %572 = sbr.rel (%p570) target = $region20
        $region19: #{vit3d_forward.1} parent=11 // pred_region
          _
        $region20: #{vit3d_forward.1} parent=11 // pred_fallthru
          _
        // Predicated region
        $region21: #{vit3d_forward.1} parent=11 // pred_check
          %p573 = pneg %p130
        $region22: #{vit3d_forward.1} parent=11 // pred_check_branch
          %575 = sbr.rel (%p573) target = $region24
        $region23: #{vit3d_forward.1} parent=11 // pred_region
          _
        $region24: #{vit3d_forward.1} parent=11 // pred_fallthru
          _
        // Predicated region
        $region25: #{vit3d_forward.1} parent=11 // pred_check
          %p576 = pneg %p463
        $region26: #{vit3d_forward.1} parent=11 // pred_check_branch
          %578 = sbr.rel (%p576) target = $region28
        $region27: #{vit3d_forward.1} parent=11 // pred_region
          _
        $region28: #{vit3d_forward.1} parent=11 // pred_fallthru
          _
        // Predicated region
        $region29: #{vit3d_forward.1} parent=11 // pred_check
          %p579 = pneg %p484
        $region30: #{vit3d_forward.1} parent=11 // pred_check_branch
          %581 = sbr.rel (%p579) target = $region32
        $region31: #{vit3d_forward.1} parent=11 // pred_region
          _
        $region32: #{vit3d_forward.1} parent=11 // pred_fallthru
          _
        // Predicated region
        $region33: #{vit3d_forward.1} parent=11 // pred_check
          %p582 = pneg %p505
        $region34: #{vit3d_forward.1} parent=11 // pred_check_branch
          %584 = sbr.rel (%p582) target = $region36
        $region35: #{vit3d_forward.1} parent=11 // pred_region
          _
        $region36: #{vit3d_forward.1} parent=11 // pred_fallthru
          _
        // Predicated region
        $region37: #{vit3d_forward.1} parent=11 // pred_check
          %p585 = pneg %p526
        $region38: #{vit3d_forward.1} parent=11 // pred_check_branch
          %587 = sbr.rel (%p585) target = $region40
        $region39: #{vit3d_forward.1} parent=11 // pred_region
          _
        $region40: #{vit3d_forward.1} parent=11 // pred_fallthru
          _
      $region12: #{vit3d_forward.1} parent=5 // pred_fallthru
        _
      %p588 = scmp.lt.s32.totalorder %s29, 4
      // Predicated region
      $region41: #{vit3d_forward.1} parent=5 // pred_check
        %p589 = pneg %p588
      $region42: #{vit3d_forward.1} parent=5 // pred_check_branch
        %591 = sbr.rel (%p589) target = $region44
      $region43: #{vit3d_forward.1} parent=5 // pred_region
        // Predicated region
        $region45: #{vit3d_forward.1} parent=43 // pred_check
          %p592 = pneg %p61
        $region46: #{vit3d_forward.1} parent=43 // pred_check_branch
          %594 = sbr.rel (%p592) target = $region48
        $region47: #{vit3d_forward.1} parent=43 // pred_region
          %s595 = smul.u32 2, %s36
          %p596 = scmp.lt.s32.totalorder %s595, 3
          %s597 = scalar_select %p596, %s595, 3
          %s598 = smul.addr %s597, 4
          %s599 = smul.addr %s598, 4
          %s600 = scalar_lea.vmem %s0, %s599
          %s601 = smul.u32 2, %s36
        $region48: #{vit3d_forward.1} parent=43 // pred_fallthru
          _
        // Predicated region
        $region49: #{vit3d_forward.1} parent=43 // pred_check
          %p602 = pneg %p150
        $region50: #{vit3d_forward.1} parent=43 // pred_check_branch
          %604 = sbr.rel (%p602) target = $region52
        $region51: #{vit3d_forward.1} parent=43 // pred_region
          %p605 = scmp.lt.s32.totalorder %s37, 1
          %s606 = scalar_select %p605, %s37, 1
          %s607 = scalar_lea.vmem %s4, %s606
        $region52: #{vit3d_forward.1} parent=43 // pred_fallthru
          _
        // Predicated region
        $region53: #{vit3d_forward.1} parent=43 // pred_check
          %p608 = pneg %p176
        $region54: #{vit3d_forward.1} parent=43 // pred_check_branch
          %610 = sbr.rel (%p608) target = $region56
        $region55: #{vit3d_forward.1} parent=43 // pred_region
          %p611 = scmp.lt.s32.totalorder %s37, 1
          %s612 = scalar_select %p611, %s37, 1
          %s613 = scalar_lea.vmem %s5, %s612
        $region56: #{vit3d_forward.1} parent=43 // pred_fallthru
          _
        // Predicated region
        $region57: #{vit3d_forward.1} parent=43 // pred_check
          %p614 = pneg %p202
        $region58: #{vit3d_forward.1} parent=43 // pred_check_branch
          %616 = sbr.rel (%p614) target = $region60
        $region59: #{vit3d_forward.1} parent=43 // pred_region
          %p617 = scmp.lt.s32.totalorder %s37, 1
          %s618 = scalar_select %p617, %s37, 1
          %s619 = smul.addr %s618, 4
          %s620 = smul.addr %s619, 4
          %s621 = scalar_lea.vmem %s6, %s620
        $region60: #{vit3d_forward.1} parent=43 // pred_fallthru
          _
        // Predicated region
        $region61: #{vit3d_forward.1} parent=43 // pred_check
          %p622 = pneg %p228
        $region62: #{vit3d_forward.1} parent=43 // pred_check_branch
          %624 = sbr.rel (%p622) target = $region64
        $region63: #{vit3d_forward.1} parent=43 // pred_region
          %p625 = scmp.lt.s32.totalorder %s37, 1
          %s626 = scalar_select %p625, %s37, 1
          %s627 = scalar_lea.vmem %s7, %s626
        $region64: #{vit3d_forward.1} parent=43 // pred_fallthru
          _
        // Predicated region
        $region65: #{vit3d_forward.1} parent=43 // pred_check
          %p628 = pneg %p254
        $region66: #{vit3d_forward.1} parent=43 // pred_check_branch
          %630 = sbr.rel (%p628) target = $region68
        $region67: #{vit3d_forward.1} parent=43 // pred_region
          %p631 = scmp.lt.s32.totalorder %s37, 1
          %s632 = scalar_select %p631, %s37, 1
          %s633 = smul.addr %s632, 4
          %s634 = smul.addr %s633, 4
          %s635 = scalar_lea.vmem %s8, %s634
        $region68: #{vit3d_forward.1} parent=43 // pred_fallthru
          _
        // Predicated region
        $region69: #{vit3d_forward.1} parent=43 // pred_check
          %p636 = pneg %p280
        $region70: #{vit3d_forward.1} parent=43 // pred_check_branch
          %638 = sbr.rel (%p636) target = $region72
        $region71: #{vit3d_forward.1} parent=43 // pred_region
          %p639 = scmp.lt.s32.totalorder %s37, 1
          %s640 = scalar_select %p639, %s37, 1
          %s641 = scalar_lea.vmem %s9, %s640
        $region72: #{vit3d_forward.1} parent=43 // pred_fallthru
          _
        // Predicated region
        $region73: #{vit3d_forward.1} parent=43 // pred_check
          %p642 = pneg %p306
        $region74: #{vit3d_forward.1} parent=43 // pred_check_branch
          %644 = sbr.rel (%p642) target = $region76
        $region75: #{vit3d_forward.1} parent=43 // pred_region
          %p645 = scmp.lt.s32.totalorder %s37, 1
          %s646 = scalar_select %p645, %s37, 1
          %s647 = scalar_lea.vmem %s10, %s646
        $region76: #{vit3d_forward.1} parent=43 // pred_fallthru
          _
        // Predicated region
        $region77: #{vit3d_forward.1} parent=43 // pred_check
          %p648 = pneg %p332
        $region78: #{vit3d_forward.1} parent=43 // pred_check_branch
          %650 = sbr.rel (%p648) target = $region80
        $region79: #{vit3d_forward.1} parent=43 // pred_region
          %p651 = scmp.lt.s32.totalorder %s37, 1
          %s652 = scalar_select %p651, %s37, 1
          %s653 = scalar_lea.vmem %s11, %s652
        $region80: #{vit3d_forward.1} parent=43 // pred_fallthru
          _
        // Predicated region
        $region81: #{vit3d_forward.1} parent=43 // pred_check
          %p654 = pneg %p358
        $region82: #{vit3d_forward.1} parent=43 // pred_check_branch
          %656 = sbr.rel (%p654) target = $region84
        $region83: #{vit3d_forward.1} parent=43 // pred_region
          %p657 = scmp.lt.s32.totalorder %s37, 1
          %s658 = scalar_select %p657, %s37, 1
          %s659 = smul.addr %s658, 4
          %s660 = smul.addr %s659, 4
          %s661 = scalar_lea.vmem %s12, %s660
        $region84: #{vit3d_forward.1} parent=43 // pred_fallthru
          _
        // Predicated region
        $region85: #{vit3d_forward.1} parent=43 // pred_check
          %p662 = pneg %p384
        $region86: #{vit3d_forward.1} parent=43 // pred_check_branch
          %664 = sbr.rel (%p662) target = $region88
        $region87: #{vit3d_forward.1} parent=43 // pred_region
          %p665 = scmp.lt.s32.totalorder %s37, 1
          %s666 = scalar_select %p665, %s37, 1
          %s667 = scalar_lea.vmem %s13, %s666
        $region88: #{vit3d_forward.1} parent=43 // pred_fallthru
          _
        // Predicated region
        $region89: #{vit3d_forward.1} parent=43 // pred_check
          %p668 = pneg %p410
        $region90: #{vit3d_forward.1} parent=43 // pred_check_branch
          %670 = sbr.rel (%p668) target = $region92
        $region91: #{vit3d_forward.1} parent=43 // pred_region
          %p671 = scmp.lt.s32.totalorder %s37, 1
          %s672 = scalar_select %p671, %s37, 1
          %s673 = smul.addr %s672, 16
          %s674 = smul.addr %s673, 4
          %s675 = scalar_lea.vmem %s14, %s674
        $region92: #{vit3d_forward.1} parent=43 // pred_fallthru
          _
        // Predicated region
        $region93: #{vit3d_forward.1} parent=43 // pred_check
          %p676 = pneg %p436
        $region94: #{vit3d_forward.1} parent=43 // pred_check_branch
          %678 = sbr.rel (%p676) target = $region96
        $region95: #{vit3d_forward.1} parent=43 // pred_region
          %p679 = scmp.lt.s32.totalorder %s37, 1
          %s680 = scalar_select %p679, %s37, 1
          %s681 = scalar_lea.vmem %s15, %s680
        $region96: #{vit3d_forward.1} parent=43 // pred_fallthru
          _
      $region44: #{vit3d_forward.1} parent=5 // pred_fallthru
        _
      %p682 = scmp.le.s32.totalorder 1, %s29
      %p683 = scmp.lt.s32.totalorder %s29, 5
      %p684 = pnand %p682, %p683
      %p685 = pneg %p684
      // Predicated region
      $region97: #{vit3d_forward.1} parent=5 // pred_check
        _
      $region98: #{vit3d_forward.1} parent=5 // pred_check_branch
        %687 = sbr.rel (%p684) target = $region100
      $region99: #{vit3d_forward.1} parent=5 // pred_region
        %s688 = ssub.s32 %s29, 1
        %s689 = smul.u32 2, %s38
        %p690 = scmp.lt.s32.totalorder %s689, 3
        %s691 = scalar_select %p690, %s689, 3
        %s692 = smul.addr %s691, 4
        %s693 = smul.addr %s692, 4
        %s694 = scalar_lea.vmem %s0, %s693
        %p695 = pneg %p67
        %p696 = pneg %p64
        %p697 = pneg %p88
        %p698 = pneg %p85
        %p699 = pneg %p109
        %p700 = pneg %p106
        %p701 = pneg %p130
        %p702 = pneg %p127
        %p703 = scmp.lt.s32.totalorder %s39, 1
        %s704 = scalar_select %p703, %s39, 1
        %s705 = scalar_lea.vmem %s4, %s704
        %p706 = pneg %p156
        %p707 = pneg %p153
        %p708 = scmp.lt.s32.totalorder %s39, 1
        %s709 = scalar_select %p708, %s39, 1
        %s710 = scalar_lea.vmem %s5, %s709
        %p711 = pneg %p182
        %p712 = pneg %p179
        %p713 = scmp.lt.s32.totalorder %s39, 1
        %s714 = scalar_select %p713, %s39, 1
        %s715 = smul.addr %s714, 4
        %s716 = smul.addr %s715, 4
        %s717 = scalar_lea.vmem %s6, %s716
        %p718 = pneg %p208
        %p719 = pneg %p205
        %p720 = scmp.lt.s32.totalorder %s39, 1
        %s721 = scalar_select %p720, %s39, 1
        %s722 = scalar_lea.vmem %s7, %s721
        %p723 = pneg %p234
        %p724 = pneg %p231
        %p725 = scmp.lt.s32.totalorder %s39, 1
        %s726 = scalar_select %p725, %s39, 1
        %s727 = smul.addr %s726, 4
        %s728 = smul.addr %s727, 4
        %s729 = scalar_lea.vmem %s8, %s728
        %p730 = pneg %p260
        %p731 = pneg %p257
        %p732 = scmp.lt.s32.totalorder %s39, 1
        %s733 = scalar_select %p732, %s39, 1
        %s734 = scalar_lea.vmem %s9, %s733
        %p735 = pneg %p286
        %p736 = pneg %p283
        %p737 = scmp.lt.s32.totalorder %s39, 1
        %s738 = scalar_select %p737, %s39, 1
        %s739 = scalar_lea.vmem %s10, %s738
        %p740 = pneg %p312
        %p741 = pneg %p309
        %p742 = scmp.lt.s32.totalorder %s39, 1
        %s743 = scalar_select %p742, %s39, 1
        %s744 = scalar_lea.vmem %s11, %s743
        %p745 = pneg %p338
        %p746 = pneg %p335
        %p747 = scmp.lt.s32.totalorder %s39, 1
        %s748 = scalar_select %p747, %s39, 1
        %s749 = smul.addr %s748, 4
        %s750 = smul.addr %s749, 4
        %s751 = scalar_lea.vmem %s12, %s750
        %p752 = pneg %p364
        %p753 = pneg %p361
        %p754 = scmp.lt.s32.totalorder %s39, 1
        %s755 = scalar_select %p754, %s39, 1
        %s756 = scalar_lea.vmem %s13, %s755
        %p757 = pneg %p390
        %p758 = pneg %p387
        %p759 = scmp.lt.s32.totalorder %s39, 1
        %s760 = scalar_select %p759, %s39, 1
        %s761 = smul.addr %s760, 16
        %s762 = smul.addr %s761, 4
        %s763 = scalar_lea.vmem %s14, %s762
        %p764 = pneg %p416
        %p765 = pneg %p413
        %p766 = scmp.lt.s32.totalorder %s39, 1
        %s767 = scalar_select %p766, %s39, 1
        %s768 = scalar_lea.vmem %s15, %s767
        %p769 = pneg %p442
        %p770 = pneg %p439
        %p771 = pneg %p463
        %p772 = pneg %p460
        %p773 = pneg %p484
        %p774 = pneg %p481
        %p775 = pneg %p505
        %p776 = pneg %p502
        %p777 = pneg %p526
        %p778 = pneg %p523
        %p779 = pneg %p552
        %p780 = pneg %p549
        %s781 = sand.u32 %s539, 1
        %s782 = scalar_lea.sflag [#allocation6], %s781
        %s783 = sand.u32 %s539, 1
        %s784 = smul.addr %s783, 2
        %s785 = scalar_lea.vmem [#allocation5], %s784
        %s786 = smul.u32 2, %s38
        %p787 = scmp.lt.s32.totalorder %s786, 3
        %s788 = scalar_select %p787, %s786, 3
        %s789 = smul.addr %s788, 4
        %s790 = smul.addr %s789, 4
        %s791 = scalar_lea.vmem %s0, %s790
        %s792 = smul.u32 2, %s38
        %p793 = scmp.lt.s32.totalorder %s39, 1
        %s794 = scalar_select %p793, %s39, 1
        %s795 = scalar_lea.vmem %s4, %s794
        %p796 = scmp.lt.s32.totalorder %s39, 1
        %s797 = scalar_select %p796, %s39, 1
        %s798 = scalar_lea.vmem %s5, %s797
        %p799 = scmp.lt.s32.totalorder %s39, 1
        %s800 = scalar_select %p799, %s39, 1
        %s801 = smul.addr %s800, 4
        %s802 = smul.addr %s801, 4
        %s803 = scalar_lea.vmem %s6, %s802
        %p804 = scmp.lt.s32.totalorder %s39, 1
        %s805 = scalar_select %p804, %s39, 1
        %s806 = scalar_lea.vmem %s7, %s805
        %p807 = scmp.lt.s32.totalorder %s39, 1
        %s808 = scalar_select %p807, %s39, 1
        %s809 = smul.addr %s808, 4
        %s810 = smul.addr %s809, 4
        %s811 = scalar_lea.vmem %s8, %s810
        %p812 = scmp.lt.s32.totalorder %s39, 1
        %s813 = scalar_select %p812, %s39, 1
        %s814 = scalar_lea.vmem %s9, %s813
        %p815 = scmp.lt.s32.totalorder %s39, 1
        %s816 = scalar_select %p815, %s39, 1
        %s817 = scalar_lea.vmem %s10, %s816
        %p818 = scmp.lt.s32.totalorder %s39, 1
        %s819 = scalar_select %p818, %s39, 1
        %s820 = scalar_lea.vmem %s11, %s819
        %p821 = scmp.lt.s32.totalorder %s39, 1
        %s822 = scalar_select %p821, %s39, 1
        %s823 = smul.addr %s822, 4
        %s824 = smul.addr %s823, 4
        %s825 = scalar_lea.vmem %s12, %s824
        %p826 = scmp.lt.s32.totalorder %s39, 1
        %s827 = scalar_select %p826, %s39, 1
        %s828 = scalar_lea.vmem %s13, %s827
        %p829 = scmp.lt.s32.totalorder %s39, 1
        %s830 = scalar_select %p829, %s39, 1
        %s831 = smul.addr %s830, 16
        %s832 = smul.addr %s831, 4
        %s833 = scalar_lea.vmem %s14, %s832
        %p834 = scmp.lt.s32.totalorder %s39, 1
        %s835 = scalar_select %p834, %s39, 1
        %s836 = scalar_lea.vmem %s15, %s835
        %p838 = scmp.eq.s32.totalorder %s39, 0
        // Predicated region
        $region101: #{vit3d_forward.1} parent=99 // pred_check
          %p839 = pneg %p838
        $region102: #{vit3d_forward.1} parent=99 // pred_check_branch
          %841 = sbr.rel (%p839) target = $region104
        $region103: #{vit3d_forward.1} parent=99 // pred_region
          %vm842 = vcmask 261120
          %843 = vst.msk [vmem:[#allocation2] sm:$0xff] %vm842, 0.0
          %844 = vst.msk [vmem:[#allocation2 + $0x8] sm:$0xff] %vm842, 0.0
          %845 = vst.msk [vmem:[#allocation2 + $0x10] sm:$0xff] %vm842, 0.0
          %846 = vst.msk [vmem:[#allocation2 + $0x18] sm:$0xff] %vm842, 0.0
          %v847 = vld [vmem:[%s2] sm:$0x1]
          %v848 = vld [vmem:[%s2 + $0x1] sm:$0xff]
          %v849 = vld [vmem:[%s791] sm:$0xff]
          %v850 = vld [vmem:[%s791 + $0x8] sm:$0xff]
          %v851 = vld [vmem:[%s1] sm:$0xf]
          %v852 = vld [vmem:[%s1 + $0x4] sm:$0xf]
          %v853 = vld [vmem:[%s1 + $0x8] sm:$0xf]
          %v854 = vld [vmem:[%s1 + $0xc] sm:$0xf]
          %v855 = vld [vmem:[%s1 + $0x10] sm:$0xf]
          %v856 = vld [vmem:[%s1 + $0x14] sm:$0xf]
          %v857 = vld [vmem:[%s1 + $0x18] sm:$0xf]
          %v858 = vld [vmem:[%s1 + $0x1c] sm:$0xf]
          %v859 = vld [vmem:[%s1 + $0x20] sm:$0xf]
          %v860 = vld [vmem:[%s1 + $0x24] sm:$0xf]
          %v861 = vld [vmem:[%s1 + $0x28] sm:$0xf]
          %v862 = vld [vmem:[%s1 + $0x2c] sm:$0xf]
          %v863 = vld [vmem:[%s1 + $0x30] sm:$0xf]
          %v864 = vld [vmem:[%s1 + $0x34] sm:$0xf]
          %v865 = vld [vmem:[%s1 + $0x38] sm:$0xf]
          %v866 = vld [vmem:[%s1 + $0x3c] sm:$0xf]
          %v867 = vld [vmem:[%s1 + $0x40] sm:$0xf]
          %v868 = vld [vmem:[%s1 + $0x44] sm:$0xf]
          %v869 = vld [vmem:[%s1 + $0x48] sm:$0xf]
          %v870 = vld [vmem:[%s1 + $0x4c] sm:$0xf]
          %v871 = vld [vmem:[%s1 + $0x50] sm:$0xf]
          %v872 = vld [vmem:[%s1 + $0x54] sm:$0xf]
          %v873 = vld [vmem:[%s1 + $0x58] sm:$0xf]
          %v874 = vld [vmem:[%s1 + $0x5c] sm:$0xf]
          %v875 = vld [vmem:[%s1 + $0x60] sm:$0xf]
          %v876 = vld [vmem:[%s1 + $0x64] sm:$0xf]
          %v877 = vld [vmem:[%s1 + $0x68] sm:$0xf]
          %v878 = vld [vmem:[%s1 + $0x6c] sm:$0xf]
          %v879 = vld [vmem:[%s1 + $0x70] sm:$0xf]
          %v880 = vld [vmem:[%s1 + $0x74] sm:$0xf]
          %v881 = vld [vmem:[%s1 + $0x78] sm:$0xf]
          %v882 = vld [vmem:[%s1 + $0x7c] sm:$0xf]
          %v883 = vld [vmem:[%s1 + $0x80] sm:$0xf]
          %v884 = vld [vmem:[%s1 + $0x84] sm:$0xf]
          %v885 = vld [vmem:[%s1 + $0x88] sm:$0xf]
          %v886 = vld [vmem:[%s1 + $0x8c] sm:$0xf]
          %v887 = vld [vmem:[%s1 + $0x90] sm:$0xf]
          %v888 = vld [vmem:[%s1 + $0x94] sm:$0xf]
          %v889 = vld [vmem:[%s1 + $0x98] sm:$0xf]
          %v890 = vld [vmem:[%s1 + $0x9c] sm:$0xf]
          %v891 = vld [vmem:[%s1 + $0xa0] sm:$0xf]
          %v892 = vld [vmem:[%s1 + $0xa4] sm:$0xf]
          %v893 = vld [vmem:[%s1 + $0xa8] sm:$0xf]
          %v894 = vld [vmem:[%s1 + $0xac] sm:$0xf]
          %v895 = vld [vmem:[%s1 + $0xb0] sm:$0xf]
          %v896 = vld [vmem:[%s1 + $0xb4] sm:$0xf]
          %v897 = vld [vmem:[%s1 + $0xb8] sm:$0xf]
          %v898 = vld [vmem:[%s1 + $0xbc] sm:$0xf]
          %v899 = vld [vmem:[%s1 + $0xc0] sm:$0xf]
          %v900 = vld [vmem:[%s1 + $0xc4] sm:$0xf]
          %v901 = vld [vmem:[%s1 + $0xc8] sm:$0xf]
          %v902 = vld [vmem:[%s1 + $0xcc] sm:$0xf]
          %v903 = vld [vmem:[%s1 + $0xd0] sm:$0xf]
          %v904 = vld [vmem:[%s1 + $0xd4] sm:$0xf]
          %v905 = vld [vmem:[%s1 + $0xd8] sm:$0xf]
          %v906 = vld [vmem:[%s1 + $0xdc] sm:$0xf]
          %v907 = vld [vmem:[%s1 + $0xe0] sm:$0xf]
          %v908 = vld [vmem:[%s1 + $0xe4] sm:$0xf]
          %v909 = vld [vmem:[%s1 + $0xe8] sm:$0xf]
          %v910 = vld [vmem:[%s1 + $0xec] sm:$0xf]
          %v911 = vld [vmem:[%s1 + $0xf0] sm:$0xf]
          %v912 = vld [vmem:[%s1 + $0xf4] sm:$0xf]
          %v913 = vld [vmem:[%s1 + $0xf8] sm:$0xf]
          %v914 = vld [vmem:[%s1 + $0xfc] sm:$0xf]
          %vm915 = vcmask 253952
          %916 = vst.msk [vmem:[#allocation2] sm:$0x1] %vm915, %v847
          %v919 = vunpack.c.l.b16 %v849
          %v920 = vunpack.c.h.b16 %v849
          %v921 = vunpack.c.l.b16 %v850
          %v922 = vunpack.c.h.b16 %v850
          %v923 = vpack.c.b16 %v919, %v919
          %v924 = vpack.c.b16 %v920, %v920
          %v925 = vpack.c.b16 %v921, %v921
          %v926 = vpack.c.b16 %v922, %v922
          %v995 = vunpack.c.l.b16 %v851
          %v996 = vunpack.c.l.b16 %v852
          %v997 = vunpack.c.l.b16 %v853
          %v998 = vunpack.c.l.b16 %v854
          %v999 = vunpack.c.l.b16 %v855
          %v1000 = vunpack.c.l.b16 %v856
          %v1001 = vunpack.c.l.b16 %v857
          %v1002 = vunpack.c.l.b16 %v858
          %v1003 = vunpack.c.l.b16 %v859
          %v1004 = vunpack.c.l.b16 %v860
          %v1005 = vunpack.c.l.b16 %v861
          %v1006 = vunpack.c.l.b16 %v862
          %v1007 = vunpack.c.l.b16 %v863
          %v1008 = vunpack.c.l.b16 %v864
          %v1009 = vunpack.c.l.b16 %v865
          %v1010 = vunpack.c.l.b16 %v866
          %v1011 = vunpack.c.l.b16 %v867
          %v1012 = vunpack.c.l.b16 %v868
          %v1013 = vunpack.c.l.b16 %v869
          %v1014 = vunpack.c.l.b16 %v870
          %v1015 = vunpack.c.l.b16 %v871
          %v1016 = vunpack.c.l.b16 %v872
          %v1017 = vunpack.c.l.b16 %v873
          %v1018 = vunpack.c.l.b16 %v874
          %v1019 = vunpack.c.l.b16 %v875
          %v1020 = vunpack.c.l.b16 %v876
          %v1021 = vunpack.c.l.b16 %v877
          %v1022 = vunpack.c.l.b16 %v878
          %v1023 = vunpack.c.l.b16 %v879
          %v1024 = vunpack.c.l.b16 %v880
          %v1025 = vunpack.c.l.b16 %v881
          %v1026 = vunpack.c.l.b16 %v882
          %v1027 = vunpack.c.l.b16 %v883
          %v1028 = vunpack.c.l.b16 %v884
          %v1029 = vunpack.c.l.b16 %v885
          %v1030 = vunpack.c.l.b16 %v886
          %v1031 = vunpack.c.l.b16 %v887
          %v1032 = vunpack.c.l.b16 %v888
          %v1033 = vunpack.c.l.b16 %v889
          %v1034 = vunpack.c.l.b16 %v890
          %v1035 = vunpack.c.l.b16 %v891
          %v1036 = vunpack.c.l.b16 %v892
          %v1037 = vunpack.c.l.b16 %v893
          %v1038 = vunpack.c.l.b16 %v894
          %v1039 = vunpack.c.l.b16 %v895
          %v1040 = vunpack.c.l.b16 %v896
          %v1041 = vunpack.c.l.b16 %v897
          %v1042 = vunpack.c.l.b16 %v898
          %v1043 = vunpack.c.l.b16 %v899
          %v1044 = vunpack.c.l.b16 %v900
          %v1045 = vunpack.c.l.b16 %v901
          %v1046 = vunpack.c.l.b16 %v902
          %v1047 = vunpack.c.l.b16 %v903
          %v1048 = vunpack.c.l.b16 %v904
          %v1049 = vunpack.c.l.b16 %v905
          %v1050 = vunpack.c.l.b16 %v906
          %v1051 = vunpack.c.l.b16 %v907
          %v1052 = vunpack.c.l.b16 %v908
          %v1053 = vunpack.c.l.b16 %v909
          %v1054 = vunpack.c.l.b16 %v910
          %v1055 = vunpack.c.l.b16 %v911
          %v1056 = vunpack.c.l.b16 %v912
          %v1057 = vunpack.c.l.b16 %v913
          %v1058 = vunpack.c.l.b16 %v914
          %v1059 = vpack.c.b16 %v996, %v995
          %v1060 = vpack.c.b16 %v998, %v997
          %v1061 = vpack.c.b16 %v1000, %v999
          %v1062 = vpack.c.b16 %v1002, %v1001
          %v1063 = vpack.c.b16 %v1004, %v1003
          %v1064 = vpack.c.b16 %v1006, %v1005
          %v1065 = vpack.c.b16 %v1008, %v1007
          %v1066 = vpack.c.b16 %v1010, %v1009
          %v1067 = vpack.c.b16 %v1012, %v1011
          %v1068 = vpack.c.b16 %v1014, %v1013
          %v1069 = vpack.c.b16 %v1016, %v1015
          %v1070 = vpack.c.b16 %v1018, %v1017
          %v1071 = vpack.c.b16 %v1020, %v1019
          %v1072 = vpack.c.b16 %v1022, %v1021
          %v1073 = vpack.c.b16 %v1024, %v1023
          %v1074 = vpack.c.b16 %v1026, %v1025
          %v1075 = vpack.c.b16 %v1028, %v1027
          %v1076 = vpack.c.b16 %v1030, %v1029
          %v1077 = vpack.c.b16 %v1032, %v1031
          %v1078 = vpack.c.b16 %v1034, %v1033
          %v1079 = vpack.c.b16 %v1036, %v1035
          %v1080 = vpack.c.b16 %v1038, %v1037
          %v1081 = vpack.c.b16 %v1040, %v1039
          %v1082 = vpack.c.b16 %v1042, %v1041
          %v1083 = vpack.c.b16 %v1044, %v1043
          %v1084 = vpack.c.b16 %v1046, %v1045
          %v1085 = vpack.c.b16 %v1048, %v1047
          %v1086 = vpack.c.b16 %v1050, %v1049
          %v1087 = vpack.c.b16 %v1052, %v1051
          %v1088 = vpack.c.b16 %v1054, %v1053
          %v1089 = vpack.c.b16 %v1056, %v1055
          %v1090 = vpack.c.b16 %v1058, %v1057
          %1123 = vmatprep.subr.bf16.mxu0 0
          %1124 = vmatpush1.bf16.msra.mxu0 %v1059
          %1125 = vmatprep.subr.bf16.mxu0 0
          %1126 = vmatpush1.bf16.msra.mxu0 %v1060
          %1127 = vmatprep.subr.bf16.mxu0 0
          %1128 = vmatpush1.bf16.msra.mxu0 %v1061
          %1129 = vmatprep.subr.bf16.mxu0 0
          %1130 = vmatpush1.bf16.msra.mxu0 %v1062
          %1131 = vmatprep.subr.bf16.mxu0 0
          %1132 = vmatpush1.bf16.msra.mxu0 %v1063
          %1133 = vmatprep.subr.bf16.mxu0 0
          %1134 = vmatpush1.bf16.msra.mxu0 %v1064
          %1135 = vmatprep.subr.bf16.mxu0 0
          %1136 = vmatpush1.bf16.msra.mxu0 %v1065
          %1137 = vmatprep.subr.bf16.mxu0 0
          %1138 = vmatpush1.bf16.msra.mxu0 %v1066
          %1139 = vmatprep.subr.bf16.mxu0 0
          %1140 = vmatpush1.bf16.msra.mxu0 %v1067
          %1141 = vmatprep.subr.bf16.mxu0 0
          %1142 = vmatpush1.bf16.msra.mxu0 %v1068
          %1143 = vmatprep.subr.bf16.mxu0 0
          %1144 = vmatpush1.bf16.msra.mxu0 %v1069
          %1145 = vmatprep.subr.bf16.mxu0 0
          %1146 = vmatpush1.bf16.msra.mxu0 %v1070
          %1147 = vmatprep.subr.bf16.mxu0 0
          %1148 = vmatpush1.bf16.msra.mxu0 %v1071
          %1149 = vmatprep.subr.bf16.mxu0 0
          %1150 = vmatpush1.bf16.msra.mxu0 %v1072
          %1151 = vmatprep.subr.bf16.mxu0 0
          %1152 = vmatpush1.bf16.msra.mxu0 %v1073
          %1153 = vmatprep.subr.bf16.mxu0 0
          %1154 = vmatpush1.bf16.msra.mxu0 %v1074
          %1155 = vmatprep.mubr.bf16.mxu0 %v924
          %1156 = vmatmul.mubr.bf16.gmra.mrb[0].mxu0 %v923
          %v1157 = vpop.f32.mrb[0].mxu0
          %v1158 = vadd.f32 %v848, %v1157
          %v1159 = vpop.f32.mrb[0].mxu0
          %v1160 = vpop.f32.mrb[0].mxu0
          %v1161 = vpop.f32.mrb[0].mxu0
          %1162 = vdwg.mxu0
          %1163 = vmatprep.subr.bf16.mxu0 0
          %1164 = vmatpush1.bf16.msra.mxu0 %v1075
          %1165 = vmatprep.subr.bf16.mxu0 0
          %1166 = vmatpush1.bf16.msra.mxu0 %v1076
          %1167 = vmatprep.subr.bf16.mxu0 0
          %1168 = vmatpush1.bf16.msra.mxu0 %v1077
          %1169 = vmatprep.subr.bf16.mxu0 0
          %1170 = vmatpush1.bf16.msra.mxu0 %v1078
          %1171 = vmatprep.subr.bf16.mxu0 0
          %1172 = vmatpush1.bf16.msra.mxu0 %v1079
          %1173 = vmatprep.subr.bf16.mxu0 0
          %1174 = vmatpush1.bf16.msra.mxu0 %v1080
          %1175 = vmatprep.subr.bf16.mxu0 0
          %1176 = vmatpush1.bf16.msra.mxu0 %v1081
          %1177 = vmatprep.subr.bf16.mxu0 0
          %1178 = vmatpush1.bf16.msra.mxu0 %v1082
          %1179 = vmatprep.subr.bf16.mxu0 0
          %1180 = vmatpush1.bf16.msra.mxu0 %v1083
          %1181 = vmatprep.subr.bf16.mxu0 0
          %1182 = vmatpush1.bf16.msra.mxu0 %v1084
          %1183 = vmatprep.subr.bf16.mxu0 0
          %1184 = vmatpush1.bf16.msra.mxu0 %v1085
          %1185 = vmatprep.subr.bf16.mxu0 0
          %1186 = vmatpush1.bf16.msra.mxu0 %v1086
          %1187 = vmatprep.subr.bf16.mxu0 0
          %1188 = vmatpush1.bf16.msra.mxu0 %v1087
          %1189 = vmatprep.subr.bf16.mxu0 0
          %1190 = vmatpush1.bf16.msra.mxu0 %v1088
          %1191 = vmatprep.subr.bf16.mxu0 0
          %1192 = vmatpush1.bf16.msra.mxu0 %v1089
          %1193 = vmatprep.subr.bf16.mxu0 0
          %1194 = vmatpush1.bf16.msra.mxu0 %v1090
          %1195 = vmatprep.mubr.bf16.mxu0 %v926
          %1196 = vmatmul.mubr.bf16.gmra.mrb[0].mxu0 %v925
          %v1197 = vpop.f32.mrb[0].mxu0
          %v1198 = vadd.f32 %v1158, %v1197
          %v1199 = vpop.f32.mrb[0].mxu0
          %v1200 = vpop.f32.mrb[0].mxu0
          %v1201 = vpop.f32.mrb[0].mxu0
          %1202 = vdwg.mxu0
          %1203 = vst.msk [vmem:[#allocation2 + $0x1] sm:$0xff] %vm842, %v1198
          %s1204 = scalar_lea.vmem %s791, 16
          %v1205 = vld [vmem:[%s1204] sm:$0xff]
          %v1206 = vld [vmem:[%s1204 + $0x8] sm:$0xff]
          %v1207 = vld [vmem:[%s1] sm:$0xf]
          %v1208 = vld [vmem:[%s1 + $0x4] sm:$0xf]
          %v1209 = vld [vmem:[%s1 + $0x8] sm:$0xf]
          %v1210 = vld [vmem:[%s1 + $0xc] sm:$0xf]
          %v1211 = vld [vmem:[%s1 + $0x10] sm:$0xf]
          %v1212 = vld [vmem:[%s1 + $0x14] sm:$0xf]
          %v1213 = vld [vmem:[%s1 + $0x18] sm:$0xf]
          %v1214 = vld [vmem:[%s1 + $0x1c] sm:$0xf]
          %v1215 = vld [vmem:[%s1 + $0x20] sm:$0xf]
          %v1216 = vld [vmem:[%s1 + $0x24] sm:$0xf]
          %v1217 = vld [vmem:[%s1 + $0x28] sm:$0xf]
          %v1218 = vld [vmem:[%s1 + $0x2c] sm:$0xf]
          %v1219 = vld [vmem:[%s1 + $0x30] sm:$0xf]
          %v1220 = vld [vmem:[%s1 + $0x34] sm:$0xf]
          %v1221 = vld [vmem:[%s1 + $0x38] sm:$0xf]
          %v1222 = vld [vmem:[%s1 + $0x3c] sm:$0xf]
          %v1223 = vld [vmem:[%s1 + $0x40] sm:$0xf]
          %v1224 = vld [vmem:[%s1 + $0x44] sm:$0xf]
          %v1225 = vld [vmem:[%s1 + $0x48] sm:$0xf]
          %v1226 = vld [vmem:[%s1 + $0x4c] sm:$0xf]
          %v1227 = vld [vmem:[%s1 + $0x50] sm:$0xf]
          %v1228 = vld [vmem:[%s1 + $0x54] sm:$0xf]
          %v1229 = vld [vmem:[%s1 + $0x58] sm:$0xf]
          %v1230 = vld [vmem:[%s1 + $0x5c] sm:$0xf]
          %v1231 = vld [vmem:[%s1 + $0x60] sm:$0xf]
          %v1232 = vld [vmem:[%s1 + $0x64] sm:$0xf]
          %v1233 = vld [vmem:[%s1 + $0x68] sm:$0xf]
          %v1234 = vld [vmem:[%s1 + $0x6c] sm:$0xf]
          %v1235 = vld [vmem:[%s1 + $0x70] sm:$0xf]
          %v1236 = vld [vmem:[%s1 + $0x74] sm:$0xf]
          %v1237 = vld [vmem:[%s1 + $0x78] sm:$0xf]
          %v1238 = vld [vmem:[%s1 + $0x7c] sm:$0xf]
          %v1239 = vld [vmem:[%s1 + $0x80] sm:$0xf]
          %v1240 = vld [vmem:[%s1 + $0x84] sm:$0xf]
          %v1241 = vld [vmem:[%s1 + $0x88] sm:$0xf]
          %v1242 = vld [vmem:[%s1 + $0x8c] sm:$0xf]
          %v1243 = vld [vmem:[%s1 + $0x90] sm:$0xf]
          %v1244 = vld [vmem:[%s1 + $0x94] sm:$0xf]
          %v1245 = vld [vmem:[%s1 + $0x98] sm:$0xf]
          %v1246 = vld [vmem:[%s1 + $0x9c] sm:$0xf]
          %v1247 = vld [vmem:[%s1 + $0xa0] sm:$0xf]
          %v1248 = vld [vmem:[%s1 + $0xa4] sm:$0xf]
          %v1249 = vld [vmem:[%s1 + $0xa8] sm:$0xf]
          %v1250 = vld [vmem:[%s1 + $0xac] sm:$0xf]
          %v1251 = vld [vmem:[%s1 + $0xb0] sm:$0xf]
          %v1252 = vld [vmem:[%s1 + $0xb4] sm:$0xf]
          %v1253 = vld [vmem:[%s1 + $0xb8] sm:$0xf]
          %v1254 = vld [vmem:[%s1 + $0xbc] sm:$0xf]
          %v1255 = vld [vmem:[%s1 + $0xc0] sm:$0xf]
          %v1256 = vld [vmem:[%s1 + $0xc4] sm:$0xf]
          %v1257 = vld [vmem:[%s1 + $0xc8] sm:$0xf]
          %v1258 = vld [vmem:[%s1 + $0xcc] sm:$0xf]
          %v1259 = vld [vmem:[%s1 + $0xd0] sm:$0xf]
          %v1260 = vld [vmem:[%s1 + $0xd4] sm:$0xf]
          %v1261 = vld [vmem:[%s1 + $0xd8] sm:$0xf]
          %v1262 = vld [vmem:[%s1 + $0xdc] sm:$0xf]
          %v1263 = vld [vmem:[%s1 + $0xe0] sm:$0xf]
          %v1264 = vld [vmem:[%s1 + $0xe4] sm:$0xf]
          %v1265 = vld [vmem:[%s1 + $0xe8] sm:$0xf]
          %v1266 = vld [vmem:[%s1 + $0xec] sm:$0xf]
          %v1267 = vld [vmem:[%s1 + $0xf0] sm:$0xf]
          %v1268 = vld [vmem:[%s1 + $0xf4] sm:$0xf]
          %v1269 = vld [vmem:[%s1 + $0xf8] sm:$0xf]
          %v1270 = vld [vmem:[%s1 + $0xfc] sm:$0xf]
          %1271 = vst.msk [vmem:[#allocation2 + $0x10] sm:$0x1] %vm915, %v847
          %v1274 = vunpack.c.l.b16 %v1205
          %v1275 = vunpack.c.h.b16 %v1205
          %v1276 = vunpack.c.l.b16 %v1206
          %v1277 = vunpack.c.h.b16 %v1206
          %v1278 = vpack.c.b16 %v1274, %v1274
          %v1279 = vpack.c.b16 %v1275, %v1275
          %v1280 = vpack.c.b16 %v1276, %v1276
          %v1281 = vpack.c.b16 %v1277, %v1277
          %v1350 = vunpack.c.l.b16 %v1207
          %v1351 = vunpack.c.l.b16 %v1208
          %v1352 = vunpack.c.l.b16 %v1209
          %v1353 = vunpack.c.l.b16 %v1210
          %v1354 = vunpack.c.l.b16 %v1211
          %v1355 = vunpack.c.l.b16 %v1212
          %v1356 = vunpack.c.l.b16 %v1213
          %v1357 = vunpack.c.l.b16 %v1214
          %v1358 = vunpack.c.l.b16 %v1215
          %v1359 = vunpack.c.l.b16 %v1216
          %v1360 = vunpack.c.l.b16 %v1217
          %v1361 = vunpack.c.l.b16 %v1218
          %v1362 = vunpack.c.l.b16 %v1219
          %v1363 = vunpack.c.l.b16 %v1220
          %v1364 = vunpack.c.l.b16 %v1221
          %v1365 = vunpack.c.l.b16 %v1222
          %v1366 = vunpack.c.l.b16 %v1223
          %v1367 = vunpack.c.l.b16 %v1224
          %v1368 = vunpack.c.l.b16 %v1225
          %v1369 = vunpack.c.l.b16 %v1226
          %v1370 = vunpack.c.l.b16 %v1227
          %v1371 = vunpack.c.l.b16 %v1228
          %v1372 = vunpack.c.l.b16 %v1229
          %v1373 = vunpack.c.l.b16 %v1230
          %v1374 = vunpack.c.l.b16 %v1231
          %v1375 = vunpack.c.l.b16 %v1232
          %v1376 = vunpack.c.l.b16 %v1233
          %v1377 = vunpack.c.l.b16 %v1234
          %v1378 = vunpack.c.l.b16 %v1235
          %v1379 = vunpack.c.l.b16 %v1236
          %v1380 = vunpack.c.l.b16 %v1237
          %v1381 = vunpack.c.l.b16 %v1238
          %v1382 = vunpack.c.l.b16 %v1239
          %v1383 = vunpack.c.l.b16 %v1240
          %v1384 = vunpack.c.l.b16 %v1241
          %v1385 = vunpack.c.l.b16 %v1242
          %v1386 = vunpack.c.l.b16 %v1243
          %v1387 = vunpack.c.l.b16 %v1244
          %v1388 = vunpack.c.l.b16 %v1245
          %v1389 = vunpack.c.l.b16 %v1246
          %v1390 = vunpack.c.l.b16 %v1247
          %v1391 = vunpack.c.l.b16 %v1248
          %v1392 = vunpack.c.l.b16 %v1249
          %v1393 = vunpack.c.l.b16 %v1250
          %v1394 = vunpack.c.l.b16 %v1251
          %v1395 = vunpack.c.l.b16 %v1252
          %v1396 = vunpack.c.l.b16 %v1253
          %v1397 = vunpack.c.l.b16 %v1254
          %v1398 = vunpack.c.l.b16 %v1255
          %v1399 = vunpack.c.l.b16 %v1256
          %v1400 = vunpack.c.l.b16 %v1257
          %v1401 = vunpack.c.l.b16 %v1258
          %v1402 = vunpack.c.l.b16 %v1259
          %v1403 = vunpack.c.l.b16 %v1260
          %v1404 = vunpack.c.l.b16 %v1261
          %v1405 = vunpack.c.l.b16 %v1262
          %v1406 = vunpack.c.l.b16 %v1263
          %v1407 = vunpack.c.l.b16 %v1264
          %v1408 = vunpack.c.l.b16 %v1265
          %v1409 = vunpack.c.l.b16 %v1266
          %v1410 = vunpack.c.l.b16 %v1267
          %v1411 = vunpack.c.l.b16 %v1268
          %v1412 = vunpack.c.l.b16 %v1269
          %v1413 = vunpack.c.l.b16 %v1270
          %v1414 = vpack.c.b16 %v1351, %v1350
          %v1415 = vpack.c.b16 %v1353, %v1352
          %v1416 = vpack.c.b16 %v1355, %v1354
          %v1417 = vpack.c.b16 %v1357, %v1356
          %v1418 = vpack.c.b16 %v1359, %v1358
          %v1419 = vpack.c.b16 %v1361, %v1360
          %v1420 = vpack.c.b16 %v1363, %v1362
          %v1421 = vpack.c.b16 %v1365, %v1364
          %v1422 = vpack.c.b16 %v1367, %v1366
          %v1423 = vpack.c.b16 %v1369, %v1368
          %v1424 = vpack.c.b16 %v1371, %v1370
          %v1425 = vpack.c.b16 %v1373, %v1372
          %v1426 = vpack.c.b16 %v1375, %v1374
          %v1427 = vpack.c.b16 %v1377, %v1376
          %v1428 = vpack.c.b16 %v1379, %v1378
          %v1429 = vpack.c.b16 %v1381, %v1380
          %v1430 = vpack.c.b16 %v1383, %v1382
          %v1431 = vpack.c.b16 %v1385, %v1384
          %v1432 = vpack.c.b16 %v1387, %v1386
          %v1433 = vpack.c.b16 %v1389, %v1388
          %v1434 = vpack.c.b16 %v1391, %v1390
          %v1435 = vpack.c.b16 %v1393, %v1392
          %v1436 = vpack.c.b16 %v1395, %v1394
          %v1437 = vpack.c.b16 %v1397, %v1396
          %v1438 = vpack.c.b16 %v1399, %v1398
          %v1439 = vpack.c.b16 %v1401, %v1400
          %v1440 = vpack.c.b16 %v1403, %v1402
          %v1441 = vpack.c.b16 %v1405, %v1404
          %v1442 = vpack.c.b16 %v1407, %v1406
          %v1443 = vpack.c.b16 %v1409, %v1408
          %v1444 = vpack.c.b16 %v1411, %v1410
          %v1445 = vpack.c.b16 %v1413, %v1412
          %1478 = vmatprep.subr.bf16.mxu0 0
          %1479 = vmatpush1.bf16.msra.mxu0 %v1414
          %1480 = vmatprep.subr.bf16.mxu0 0
          %1481 = vmatpush1.bf16.msra.mxu0 %v1415
          %1482 = vmatprep.subr.bf16.mxu0 0
          %1483 = vmatpush1.bf16.msra.mxu0 %v1416
          %1484 = vmatprep.subr.bf16.mxu0 0
          %1485 = vmatpush1.bf16.msra.mxu0 %v1417
          %1486 = vmatprep.subr.bf16.mxu0 0
          %1487 = vmatpush1.bf16.msra.mxu0 %v1418
          %1488 = vmatprep.subr.bf16.mxu0 0
          %1489 = vmatpush1.bf16.msra.mxu0 %v1419
          %1490 = vmatprep.subr.bf16.mxu0 0
          %1491 = vmatpush1.bf16.msra.mxu0 %v1420
          %1492 = vmatprep.subr.bf16.mxu0 0
          %1493 = vmatpush1.bf16.msra.mxu0 %v1421
          %1494 = vmatprep.subr.bf16.mxu0 0
          %1495 = vmatpush1.bf16.msra.mxu0 %v1422
          %1496 = vmatprep.subr.bf16.mxu0 0
          %1497 = vmatpush1.bf16.msra.mxu0 %v1423
          %1498 = vmatprep.subr.bf16.mxu0 0
          %1499 = vmatpush1.bf16.msra.mxu0 %v1424
          %1500 = vmatprep.subr.bf16.mxu0 0
          %1501 = vmatpush1.bf16.msra.mxu0 %v1425
          %1502 = vmatprep.subr.bf16.mxu0 0
          %1503 = vmatpush1.bf16.msra.mxu0 %v1426
          %1504 = vmatprep.subr.bf16.mxu0 0
          %1505 = vmatpush1.bf16.msra.mxu0 %v1427
          %1506 = vmatprep.subr.bf16.mxu0 0
          %1507 = vmatpush1.bf16.msra.mxu0 %v1428
          %1508 = vmatprep.subr.bf16.mxu0 0
          %1509 = vmatpush1.bf16.msra.mxu0 %v1429
          %1510 = vmatprep.mubr.bf16.mxu0 %v1279
          %1511 = vmatmul.mubr.bf16.gmra.mrb[0].mxu0 %v1278
          %v1512 = vpop.f32.mrb[0].mxu0
          %v1513 = vadd.f32 %v848, %v1512
          %v1514 = vpop.f32.mrb[0].mxu0
          %v1515 = vpop.f32.mrb[0].mxu0
          %v1516 = vpop.f32.mrb[0].mxu0
          %1517 = vdwg.mxu0
          %1518 = vmatprep.subr.bf16.mxu0 0
          %1519 = vmatpush1.bf16.msra.mxu0 %v1430
          %1520 = vmatprep.subr.bf16.mxu0 0
          %1521 = vmatpush1.bf16.msra.mxu0 %v1431
          %1522 = vmatprep.subr.bf16.mxu0 0
          %1523 = vmatpush1.bf16.msra.mxu0 %v1432
          %1524 = vmatprep.subr.bf16.mxu0 0
          %1525 = vmatpush1.bf16.msra.mxu0 %v1433
          %1526 = vmatprep.subr.bf16.mxu0 0
          %1527 = vmatpush1.bf16.msra.mxu0 %v1434
          %1528 = vmatprep.subr.bf16.mxu0 0
          %1529 = vmatpush1.bf16.msra.mxu0 %v1435
          %1530 = vmatprep.subr.bf16.mxu0 0
          %1531 = vmatpush1.bf16.msra.mxu0 %v1436
          %1532 = vmatprep.subr.bf16.mxu0 0
          %1533 = vmatpush1.bf16.msra.mxu0 %v1437
          %1534 = vmatprep.subr.bf16.mxu0 0
          %1535 = vmatpush1.bf16.msra.mxu0 %v1438
          %1536 = vmatprep.subr.bf16.mxu0 0
          %1537 = vmatpush1.bf16.msra.mxu0 %v1439
          %1538 = vmatprep.subr.bf16.mxu0 0
          %1539 = vmatpush1.bf16.msra.mxu0 %v1440
          %1540 = vmatprep.subr.bf16.mxu0 0
          %1541 = vmatpush1.bf16.msra.mxu0 %v1441
          %1542 = vmatprep.subr.bf16.mxu0 0
          %1543 = vmatpush1.bf16.msra.mxu0 %v1442
          %1544 = vmatprep.subr.bf16.mxu0 0
          %1545 = vmatpush1.bf16.msra.mxu0 %v1443
          %1546 = vmatprep.subr.bf16.mxu0 0
          %1547 = vmatpush1.bf16.msra.mxu0 %v1444
          %1548 = vmatprep.subr.bf16.mxu0 0
          %1549 = vmatpush1.bf16.msra.mxu0 %v1445
          %1550 = vmatprep.mubr.bf16.mxu0 %v1281
          %1551 = vmatmul.mubr.bf16.gmra.mrb[0].mxu0 %v1280
          %v1552 = vpop.f32.mrb[0].mxu0
          %v1553 = vadd.f32 %v1513, %v1552
          %v1554 = vpop.f32.mrb[0].mxu0
          %v1555 = vpop.f32.mrb[0].mxu0
          %v1556 = vpop.f32.mrb[0].mxu0
          %1557 = vdwg.mxu0
          %1558 = vst.msk [vmem:[#allocation2 + $0x11] sm:$0xff] %vm842, %v1553
        $region104: #{vit3d_forward.1} parent=99 // pred_fallthru
          _
        %v1559 = vld [vmem:[#allocation2] sm:$0xff]
        %v1560 = vld [vmem:[#allocation2 + $0x8] sm:$0xff]
        %v1561 = vld [vmem:[#allocation2 + $0x10] sm:$0xff]
        %v1562 = vld [vmem:[#allocation2 + $0x18] sm:$0xff]
        %v1563 = vld [vmem:[%s795] sm:$0x1]
        %v1564 = vld [vmem:[%s798] sm:$0x1]
        %vm1565 = vcmask 261120
        %v1566 = vsel %vm1565, %v1559, 0.0
        %1567 = vadd.xlane.f32.xlu0 %v1566
        %v1568 = vpop.xlane.xlu0 %1567
        %v1569 = vsel %vm1565, %v1560, 0.0
        %1570 = vadd.xlane.f32.xlu0 %v1569
        %v1571 = vpop.xlane.xlu0 %1570
        %v1572 = vsel %vm1565, %v1561, 0.0
        %1573 = vadd.xlane.f32.xlu0 %v1572
        %v1574 = vpop.xlane.xlu0 %1573
        %v1575 = vsel %vm1565, %v1562, 0.0
        %1576 = vadd.xlane.f32.xlu0 %v1575
        %v1577 = vpop.xlane.xlu0 %1576
        %v1578 = vrcp.pop 32.0
        %v1579 = vmul.f32 %v1568, %v1578
        %v1580 = vmul.f32 %v1571, %v1578
        %v1581 = vmul.f32 %v1574, %v1578
        %v1582 = vmul.f32 %v1577, %v1578
        %v1583 = vsub.f32 %v1559, %v1579
        %v1584 = vsub.f32 %v1560, %v1580
        %v1585 = vsub.f32 %v1561, %v1581
        %v1586 = vsub.f32 %v1562, %v1582
        %v1587 = vmul.f32 %v1583, %v1583
        %v1588 = vmul.f32 %v1584, %v1584
        %v1589 = vmul.f32 %v1585, %v1585
        %v1590 = vmul.f32 %v1586, %v1586
        %v1591 = vsel %vm1565, %v1587, 0.0
        %1592 = vadd.xlane.f32.xlu0 %v1591
        %v1593 = vpop.xlane.xlu0 %1592
        %v1594 = vsel %vm1565, %v1588, 0.0
        %1595 = vadd.xlane.f32.xlu0 %v1594
        %v1596 = vpop.xlane.xlu0 %1595
        %v1597 = vsel %vm1565, %v1589, 0.0
        %1598 = vadd.xlane.f32.xlu0 %v1597
        %v1599 = vpop.xlane.xlu0 %1598
        %v1600 = vsel %vm1565, %v1590, 0.0
        %1601 = vadd.xlane.f32.xlu0 %v1600
        %v1602 = vpop.xlane.xlu0 %1601
        %v1603 = vmul.f32 %v1593, %v1578
        %v1604 = vmul.f32 %v1596, %v1578
        %v1605 = vmul.f32 %v1599, %v1578
        %v1606 = vmul.f32 %v1602, %v1578
        %v1607 = vadd.f32 %v1603, 1e-06
        %v1608 = vadd.f32 %v1604, 1e-06
        %v1609 = vadd.f32 %v1605, 1e-06
        %v1610 = vadd.f32 %v1606, 1e-06
        %v1611 = vrsqrt.pop %v1607
        %v1612 = vrsqrt.pop %v1608
        %v1613 = vrsqrt.pop %v1609
        %v1614 = vrsqrt.pop %v1610
        %v1615 = vmul.f32 %v1583, %v1611
        %v1616 = vmul.f32 %v1584, %v1612
        %v1617 = vmul.f32 %v1585, %v1613
        %v1618 = vmul.f32 %v1586, %v1614
        %v1620 = vlaneseq
        %v1621 = vshrl.u32 %v1620, 7
        %v1622 = vsub.s32 0, %v1621
        %v1623 = vrot.slane %v1563, %v1622
        %v1625 = vmul.f32 %v1615, %v1623
        %v1626 = vmul.f32 %v1616, %v1623
        %v1627 = vmul.f32 %v1617, %v1623
        %v1628 = vmul.f32 %v1618, %v1623
        %v1630 = vlaneseq
        %v1631 = vshrl.u32 %v1630, 7
        %v1632 = vsub.s32 0, %v1631
        %v1633 = vrot.slane %v1564, %v1632
        %v1635 = vadd.f32 %v1625, %v1633
        %v1636 = vadd.f32 %v1626, %v1633
        %v1637 = vadd.f32 %v1627, %v1633
        %v1638 = vadd.f32 %v1628, %v1633
        %v1639 = vpack.c.bf16 %v1636, %v1635
        %v1640 = vpack.c.bf16 %v1638, %v1637
        %v1641 = vld [vmem:[%s803] sm:$0xf]
        %v1642 = vld [vmem:[%s803 + $0x4] sm:$0xf]
        %v1643 = vld [vmem:[%s803 + $0x8] sm:$0xf]
        %v1644 = vld [vmem:[%s803 + $0xc] sm:$0xf]
        %v1645 = vld [vmem:[%s806] sm:$0x1]
        %v1647 = vlaneseq
        %v1648 = vshrl.u32 %v1647, 7
        %v1649 = vsub.s32 0, %v1648
        %v1650 = vrot.slane %v1645, %v1649
        %v1656 = vunpack.c.l.b16 %v1641
        %v1657 = vunpack.c.l.b16 %v1642
        %v1658 = vunpack.c.l.b16 %v1643
        %v1659 = vunpack.c.l.b16 %v1644
        %v1660 = vpack.c.b16 %v1657, %v1656
        %v1661 = vpack.c.b16 %v1659, %v1658
        %v1665 = vsel %vm1565, %v1639, 0
        %v1668 = vsel %vm1565, %v1640, 0
        %1670 = vmatprep.subr.bf16.mxu0 0
        %1671 = vmatpush1.bf16.msra.mxu0 %v1660
        %1672 = vmatprep.subr.bf16.mxu0 0
        %1673 = vmatpush1.bf16.msra.mxu0 %v1661
        %1674 = vmatprep.subr.bf16.mxu0 0
        %1675 = vmatpush1.bf16.msra.mxu0 0
        %1676 = vmatprep.subr.bf16.mxu0 0
        %1677 = vmatpush1.bf16.msra.mxu0 0
        %1678 = vmatprep.subr.bf16.mxu0 0
        %1679 = vmatpush1.bf16.msra.mxu0 0
        %1680 = vmatprep.subr.bf16.mxu0 0
        %1681 = vmatpush1.bf16.msra.mxu0 0
        %1682 = vmatprep.subr.bf16.mxu0 0
        %1683 = vmatpush1.bf16.msra.mxu0 0
        %1684 = vmatprep.subr.bf16.mxu0 0
        %1685 = vmatpush1.bf16.msra.mxu0 0
        %1686 = vmatprep.subr.bf16.mxu0 0
        %1687 = vmatpush1.bf16.msra.mxu0 0
        %1688 = vmatprep.subr.bf16.mxu0 0
        %1689 = vmatpush1.bf16.msra.mxu0 0
        %1690 = vmatprep.subr.bf16.mxu0 0
        %1691 = vmatpush1.bf16.msra.mxu0 0
        %1692 = vmatprep.subr.bf16.mxu0 0
        %1693 = vmatpush1.bf16.msra.mxu0 0
        %1694 = vmatprep.subr.bf16.mxu0 0
        %1695 = vmatpush1.bf16.msra.mxu0 0
        %1696 = vmatprep.subr.bf16.mxu0 0
        %1697 = vmatpush1.bf16.msra.mxu0 0
        %1698 = vmatprep.subr.bf16.mxu0 0
        %1699 = vmatpush1.bf16.msra.mxu0 0
        %1700 = vmatprep.subr.bf16.mxu0 0
        %1701 = vmatpush1.bf16.msra.mxu0 0
        %1702 = vmatprep.mubr.bf16.mxu0 0
        %1703 = vmatmul.mubr.bf16.gmra.mrb[0].mxu0 %v1665
        %v1704 = vpop.f32.mrb[0].mxu0
        %v1705 = vadd.f32 %v1650, %v1704
        %v1706 = vpop.f32.mrb[0].mxu0
        %v1707 = vpop.f32.mrb[0].mxu0
        %v1708 = vadd.f32 %v1650, %v1707
        %v1709 = vpop.f32.mrb[0].mxu0
        %1710 = vmatprep.mubr.bf16.mxu0 0
        %1711 = vmatmul.mubr.bf16.gmra.mrb[0].mxu0 %v1668
        %v1712 = vpop.f32.mrb[0].mxu0
        %v1713 = vadd.f32 %v1650, %v1712
        %v1714 = vpop.f32.mrb[0].mxu0
        %v1715 = vpop.f32.mrb[0].mxu0
        %v1716 = vadd.f32 %v1650, %v1715
        %v1717 = vpop.f32.mrb[0].mxu0
        %1718 = vdwg.mxu0
        %v1719 = vpack.c.bf16 %v1708, %v1705
        %vm1720 = vcmask 785408
        %1721 = vst.msk [vmem:[#allocation3] sm:$0xff] %vm1720, %v1719
        %v1722 = vpack.c.bf16 %v1716, %v1713
        %s1723 = scalar_lea.vmem [#allocation3], 8
        %1724 = vst.msk [vmem:[%s1723] sm:$0xff] %vm1720, %v1722
        %v1725 = vld [vmem:[%s3] sm:$0x1]
        %v1726 = vld [vmem:[#allocation3] sm:$0xff]
        %v1727 = vld [vmem:[#allocation3 + $0x8] sm:$0xff]
        %1729 = vrot.lane.b32.xlu0 %v1726, 96
        %v1730 = vpop.permute.xlu0 %1729
        %vm1731 = vcmask 64512
        %v1733 = vsel %vm1731, %v1726, 0
        %v1736 = vsel %vm1731, %v1730, 0
        %1738 = vmatprep.subr.bf16.mxu0 0
        %1739 = vmatpush1.bf16.xpose.msra.mxu0 %v1736
        %1740 = vmatprep.subr.bf16.mxu0 0
        %1741 = vmatpush1.bf16.xpose.msra.mxu0 0
        %1742 = vmatprep.subr.bf16.mxu0 0
        %1743 = vmatpush1.bf16.xpose.msra.mxu0 0
        %1744 = vmatprep.subr.bf16.mxu0 0
        %1745 = vmatpush1.bf16.xpose.msra.mxu0 0
        %1746 = vmatprep.subr.bf16.mxu0 0
        %1747 = vmatpush1.bf16.xpose.msra.mxu0 0
        %1748 = vmatprep.subr.bf16.mxu0 0
        %1749 = vmatpush1.bf16.xpose.msra.mxu0 0
        %1750 = vmatprep.subr.bf16.mxu0 0
        %1751 = vmatpush1.bf16.xpose.msra.mxu0 0
        %1752 = vmatprep.subr.bf16.mxu0 0
        %1753 = vmatpush1.bf16.xpose.msra.mxu0 0
        %1754 = vmatprep.subr.bf16.mxu0 0
        %1755 = vmatpush1.bf16.xpose.msra.mxu0 0
        %1756 = vmatprep.subr.bf16.mxu0 0
        %1757 = vmatpush1.bf16.xpose.msra.mxu0 0
        %1758 = vmatprep.subr.bf16.mxu0 0
        %1759 = vmatpush1.bf16.xpose.msra.mxu0 0
        %1760 = vmatprep.subr.bf16.mxu0 0
        %1761 = vmatpush1.bf16.xpose.msra.mxu0 0
        %1762 = vmatprep.subr.bf16.mxu0 0
        %1763 = vmatpush1.bf16.xpose.msra.mxu0 0
        %1764 = vmatprep.subr.bf16.mxu0 0
        %1765 = vmatpush1.bf16.xpose.msra.mxu0 0
        %1766 = vmatprep.subr.bf16.mxu0 0
        %1767 = vmatpush1.bf16.xpose.msra.mxu0 0
        %1768 = vmatprep.subr.bf16.mxu0 0
        %1769 = vmatpush1.bf16.xpose.msra.mxu0 0
        %1770 = vmatprep.mubr.bf16.mxu0 0
        %1771 = vmatmul.mubr.bf16.gmra.mrb[0].mxu0 %v1733
        %v1772 = vpop.f32.mrb[0].mxu0
        %v1773 = vadd.f32 0.0, %v1772
        %v1774 = vpop.f32.mrb[0].mxu0
        %v1775 = vpop.f32.mrb[0].mxu0
        %v1776 = vadd.f32 0.0, %v1775
        %v1777 = vpop.f32.mrb[0].mxu0
        %1778 = vdwg.mxu0
        %1780 = vrot.lane.b32.xlu0 %v1727, 96
        %v1781 = vpop.permute.xlu0 %1780
        %v1783 = vsel %vm1731, %v1727, 0
        %v1786 = vsel %vm1731, %v1781, 0
        %1788 = vmatprep.subr.bf16.mxu0 0
        %1789 = vmatpush1.bf16.xpose.msra.mxu0 %v1786
        %1790 = vmatprep.subr.bf16.mxu0 0
        %1791 = vmatpush1.bf16.xpose.msra.mxu0 0
        %1792 = vmatprep.subr.bf16.mxu0 0
        %1793 = vmatpush1.bf16.xpose.msra.mxu0 0
        %1794 = vmatprep.subr.bf16.mxu0 0
        %1795 = vmatpush1.bf16.xpose.msra.mxu0 0
        %1796 = vmatprep.subr.bf16.mxu0 0
        %1797 = vmatpush1.bf16.xpose.msra.mxu0 0
        %1798 = vmatprep.subr.bf16.mxu0 0
        %1799 = vmatpush1.bf16.xpose.msra.mxu0 0
        %1800 = vmatprep.subr.bf16.mxu0 0
        %1801 = vmatpush1.bf16.xpose.msra.mxu0 0
        %1802 = vmatprep.subr.bf16.mxu0 0
        %1803 = vmatpush1.bf16.xpose.msra.mxu0 0
        %1804 = vmatprep.subr.bf16.mxu0 0
        %1805 = vmatpush1.bf16.xpose.msra.mxu0 0
        %1806 = vmatprep.subr.bf16.mxu0 0
        %1807 = vmatpush1.bf16.xpose.msra.mxu0 0
        %1808 = vmatprep.subr.bf16.mxu0 0
        %1809 = vmatpush1.bf16.xpose.msra.mxu0 0
        %1810 = vmatprep.subr.bf16.mxu0 0
        %1811 = vmatpush1.bf16.xpose.msra.mxu0 0
        %1812 = vmatprep.subr.bf16.mxu0 0
        %1813 = vmatpush1.bf16.xpose.msra.mxu0 0
        %1814 = vmatprep.subr.bf16.mxu0 0
        %1815 = vmatpush1.bf16.xpose.msra.mxu0 0
        %1816 = vmatprep.subr.bf16.mxu0 0
        %1817 = vmatpush1.bf16.xpose.msra.mxu0 0
        %1818 = vmatprep.subr.bf16.mxu0 0
        %1819 = vmatpush1.bf16.xpose.msra.mxu0 0
        %1820 = vmatprep.mubr.bf16.mxu0 0
        %1821 = vmatmul.mubr.bf16.gmra.mrb[0].mxu0 %v1783
        %v1822 = vpop.f32.mrb[0].mxu0
        %v1823 = vadd.f32 0.0, %v1822
        %v1824 = vpop.f32.mrb[0].mxu0
        %v1825 = vpop.f32.mrb[0].mxu0
        %v1826 = vadd.f32 0.0, %v1825
        %v1827 = vpop.f32.mrb[0].mxu0
        %1828 = vdwg.mxu0
        %v1829 = vmul.f32 %v1773, 0.35355338
        %v1830 = vmul.f32 %v1776, 0.35355338
        %v1831 = vmul.f32 %v1823, 0.35355338
        %v1832 = vmul.f32 %v1826, 0.35355338
        %v1834 = vlaneseq
        %v1835 = vshrl.u32 %v1834, 7
        %v1836 = vsub.s32 0, %v1835
        %v1837 = vrot.slane %v1725, %v1836
        %v1839 = vadd.f32 %v1829, %v1837
        %v1840 = vadd.f32 %v1830, %v1837
        %v1841 = vadd.f32 %v1831, %v1837
        %v1842 = vadd.f32 %v1832, %v1837
        %vm1843 = vcmask 130048
        %v1844 = vsel %vm1843, %v1839, -inf
        %1845 = vmax.xlane.f32.xlu0 %v1844
        %v1846 = vpop.xlane.xlu0 %1845
        %v1847 = vsel %vm1843, %v1840, -inf
        %1848 = vmax.xlane.f32.xlu0 %v1847
        %v1849 = vpop.xlane.xlu0 %1848
        %v1850 = vsel %vm1843, %v1841, -inf
        %1851 = vmax.xlane.f32.xlu0 %v1850
        %v1852 = vpop.xlane.xlu0 %1851
        %v1853 = vsel %vm1843, %v1842, -inf
        %1854 = vmax.xlane.f32.xlu0 %v1853
        %v1855 = vpop.xlane.xlu0 %1854
        %v1856 = vsub.f32 %v1839, %v1846
        %v1857 = vsub.f32 %v1840, %v1849
        %v1858 = vsub.f32 %v1841, %v1852
        %v1859 = vsub.f32 %v1842, %v1855
        %v1860 = vmul.f32 %v1856, 1.442695
        %v1861 = vpow.pop %v1860
        %v1862 = vmul.f32 %v1857, 1.442695
        %v1863 = vpow.pop %v1862
        %v1864 = vmul.f32 %v1858, 1.442695
        %v1865 = vpow.pop %v1864
        %v1866 = vmul.f32 %v1859, 1.442695
        %v1867 = vpow.pop %v1866
        %v1868 = vsel %vm1843, %v1861, 0.0
        %1869 = vadd.xlane.f32.xlu0 %v1868
        %v1870 = vpop.xlane.xlu0 %1869
        %v1871 = vsel %vm1843, %v1863, 0.0
        %1872 = vadd.xlane.f32.xlu0 %v1871
        %v1873 = vpop.xlane.xlu0 %1872
        %v1874 = vsel %vm1843, %v1865, 0.0
        %1875 = vadd.xlane.f32.xlu0 %v1874
        %v1876 = vpop.xlane.xlu0 %1875
        %v1877 = vsel %vm1843, %v1867, 0.0
        %1878 = vadd.xlane.f32.xlu0 %v1877
        %v1879 = vpop.xlane.xlu0 %1878
        %v1880 = vrcp.pop %v1870
        %v1881 = vrcp.pop %v1873
        %v1882 = vrcp.pop %v1876
        %v1883 = vrcp.pop %v1879
        %v1884 = vmul.f32 %v1861, %v1880
        %v1885 = vmul.f32 %v1863, %v1881
        %v1886 = vmul.f32 %v1865, %v1882
        %v1887 = vmul.f32 %v1867, %v1883
        %v1888 = vpack.c.bf16 %v1885, %v1884
        %v1889 = vpack.c.bf16 %v1887, %v1886
        %1890 = vrot.lane.b32.xlu0 %v1726, 64
        %v1891 = vpop.permute.xlu0 %1890
        %v1894 = vsel %vm1843, %v1888, 0
        %1896 = vmatprep.subr.bf16.mxu0 0
        %1897 = vmatpush1.bf16.msra.mxu0 %v1891
        %1898 = vmatprep.subr.bf16.mxu0 0
        %1899 = vmatpush1.bf16.msra.mxu0 0
        %1900 = vmatprep.subr.bf16.mxu0 0
        %1901 = vmatpush1.bf16.msra.mxu0 0
        %1902 = vmatprep.subr.bf16.mxu0 0
        %1903 = vmatpush1.bf16.msra.mxu0 0
        %1904 = vmatprep.subr.bf16.mxu0 0
        %1905 = vmatpush1.bf16.msra.mxu0 0
        %1906 = vmatprep.subr.bf16.mxu0 0
        %1907 = vmatpush1.bf16.msra.mxu0 0
        %1908 = vmatprep.subr.bf16.mxu0 0
        %1909 = vmatpush1.bf16.msra.mxu0 0
        %1910 = vmatprep.subr.bf16.mxu0 0
        %1911 = vmatpush1.bf16.msra.mxu0 0
        %1912 = vmatprep.subr.bf16.mxu0 0
        %1913 = vmatpush1.bf16.msra.mxu0 0
        %1914 = vmatprep.subr.bf16.mxu0 0
        %1915 = vmatpush1.bf16.msra.mxu0 0
        %1916 = vmatprep.subr.bf16.mxu0 0
        %1917 = vmatpush1.bf16.msra.mxu0 0
        %1918 = vmatprep.subr.bf16.mxu0 0
        %1919 = vmatpush1.bf16.msra.mxu0 0
        %1920 = vmatprep.subr.bf16.mxu0 0
        %1921 = vmatpush1.bf16.msra.mxu0 0
        %1922 = vmatprep.subr.bf16.mxu0 0
        %1923 = vmatpush1.bf16.msra.mxu0 0
        %1924 = vmatprep.subr.bf16.mxu0 0
        %1925 = vmatpush1.bf16.msra.mxu0 0
        %1926 = vmatprep.subr.bf16.mxu0 0
        %1927 = vmatpush1.bf16.msra.mxu0 0
        %1928 = vmatprep.mubr.bf16.mxu0 0
        %1929 = vmatmul.mubr.bf16.gmra.mrb[0].mxu0 %v1894
        %v1930 = vpop.f32.mrb[0].mxu0
        %v1931 = vadd.f32 0.0, %v1930
        %v1932 = vpop.f32.mrb[0].mxu0
        %v1933 = vpop.f32.mrb[0].mxu0
        %v1934 = vadd.f32 0.0, %v1933
        %v1935 = vpop.f32.mrb[0].mxu0
        %1936 = vdwg.mxu0
        %1937 = vrot.lane.b32.xlu0 %v1727, 64
        %v1938 = vpop.permute.xlu0 %1937
        %v1941 = vsel %vm1843, %v1889, 0
        %1943 = vmatprep.subr.bf16.mxu0 0
        %1944 = vmatpush1.bf16.msra.mxu0 %v1938
        %1945 = vmatprep.subr.bf16.mxu0 0
        %1946 = vmatpush1.bf16.msra.mxu0 0
        %1947 = vmatprep.subr.bf16.mxu0 0
        %1948 = vmatpush1.bf16.msra.mxu0 0
        %1949 = vmatprep.subr.bf16.mxu0 0
        %1950 = vmatpush1.bf16.msra.mxu0 0
        %1951 = vmatprep.subr.bf16.mxu0 0
        %1952 = vmatpush1.bf16.msra.mxu0 0
        %1953 = vmatprep.subr.bf16.mxu0 0
        %1954 = vmatpush1.bf16.msra.mxu0 0
        %1955 = vmatprep.subr.bf16.mxu0 0
        %1956 = vmatpush1.bf16.msra.mxu0 0
        %1957 = vmatprep.subr.bf16.mxu0 0
        %1958 = vmatpush1.bf16.msra.mxu0 0
        %1959 = vmatprep.subr.bf16.mxu0 0
        %1960 = vmatpush1.bf16.msra.mxu0 0
        %1961 = vmatprep.subr.bf16.mxu0 0
        %1962 = vmatpush1.bf16.msra.mxu0 0
        %1963 = vmatprep.subr.bf16.mxu0 0
        %1964 = vmatpush1.bf16.msra.mxu0 0
        %1965 = vmatprep.subr.bf16.mxu0 0
        %1966 = vmatpush1.bf16.msra.mxu0 0
        %1967 = vmatprep.subr.bf16.mxu0 0
        %1968 = vmatpush1.bf16.msra.mxu0 0
        %1969 = vmatprep.subr.bf16.mxu0 0
        %1970 = vmatpush1.bf16.msra.mxu0 0
        %1971 = vmatprep.subr.bf16.mxu0 0
        %1972 = vmatpush1.bf16.msra.mxu0 0
        %1973 = vmatprep.subr.bf16.mxu0 0
        %1974 = vmatpush1.bf16.msra.mxu0 0
        %1975 = vmatprep.mubr.bf16.mxu0 0
        %1976 = vmatmul.mubr.bf16.gmra.mrb[0].mxu0 %v1941
        %v1977 = vpop.f32.mrb[0].mxu0
        %v1978 = vadd.f32 0.0, %v1977
        %v1979 = vpop.f32.mrb[0].mxu0
        %v1980 = vpop.f32.mrb[0].mxu0
        %v1981 = vadd.f32 0.0, %v1980
        %v1982 = vpop.f32.mrb[0].mxu0
        %1983 = vdwg.mxu0
        %v1984 = vpack.c.bf16 %v1934, %v1931
        %v1985 = vpack.c.bf16 %v1981, %v1978
        %1986 = vst.msk [vmem:[#allocation4] sm:$0xff] %vm1731, %v1984
        %1987 = vst.msk [vmem:[#allocation4 + $0x8] sm:$0xff] %vm1731, %v1985
        %v1988 = vld [vmem:[#allocation3] sm:$0xff]
        %v1989 = vld [vmem:[#allocation3 + $0x8] sm:$0xff]
        %1991 = vrot.lane.b32.xlu0 %v1988, 120
        %v1992 = vpop.permute.xlu0 %1991
        %1993 = vrot.lane.b32.xlu0 %v1988, 88
        %v1994 = vpop.permute.xlu0 %1993
        %v1996 = vsel %vm1731, %v1992, 0
        %v1999 = vsel %vm1731, %v1994, 0
        %2001 = vmatprep.subr.bf16.mxu0 0
        %2002 = vmatpush1.bf16.xpose.msra.mxu0 %v1999
        %2003 = vmatprep.subr.bf16.mxu0 0
        %2004 = vmatpush1.bf16.xpose.msra.mxu0 0
        %2005 = vmatprep.subr.bf16.mxu0 0
        %2006 = vmatpush1.bf16.xpose.msra.mxu0 0
        %2007 = vmatprep.subr.bf16.mxu0 0
        %2008 = vmatpush1.bf16.xpose.msra.mxu0 0
        %2009 = vmatprep.subr.bf16.mxu0 0
        %2010 = vmatpush1.bf16.xpose.msra.mxu0 0
        %2011 = vmatprep.subr.bf16.mxu0 0
        %2012 = vmatpush1.bf16.xpose.msra.mxu0 0
        %2013 = vmatprep.subr.bf16.mxu0 0
        %2014 = vmatpush1.bf16.xpose.msra.mxu0 0
        %2015 = vmatprep.subr.bf16.mxu0 0
        %2016 = vmatpush1.bf16.xpose.msra.mxu0 0
        %2017 = vmatprep.subr.bf16.mxu0 0
        %2018 = vmatpush1.bf16.xpose.msra.mxu0 0
        %2019 = vmatprep.subr.bf16.mxu0 0
        %2020 = vmatpush1.bf16.xpose.msra.mxu0 0
        %2021 = vmatprep.subr.bf16.mxu0 0
        %2022 = vmatpush1.bf16.xpose.msra.mxu0 0
        %2023 = vmatprep.subr.bf16.mxu0 0
        %2024 = vmatpush1.bf16.xpose.msra.mxu0 0
        %2025 = vmatprep.subr.bf16.mxu0 0
        %2026 = vmatpush1.bf16.xpose.msra.mxu0 0
        %2027 = vmatprep.subr.bf16.mxu0 0
        %2028 = vmatpush1.bf16.xpose.msra.mxu0 0
        %2029 = vmatprep.subr.bf16.mxu0 0
        %2030 = vmatpush1.bf16.xpose.msra.mxu0 0
        %2031 = vmatprep.subr.bf16.mxu0 0
        %2032 = vmatpush1.bf16.xpose.msra.mxu0 0
        %2033 = vmatprep.mubr.bf16.mxu0 0
        %2034 = vmatmul.mubr.bf16.gmra.mrb[0].mxu0 %v1996
        %v2035 = vpop.f32.mrb[0].mxu0
        %v2036 = vadd.f32 0.0, %v2035
        %v2037 = vpop.f32.mrb[0].mxu0
        %v2038 = vpop.f32.mrb[0].mxu0
        %v2039 = vadd.f32 0.0, %v2038
        %v2040 = vpop.f32.mrb[0].mxu0
        %2041 = vdwg.mxu0
        %2043 = vrot.lane.b32.xlu0 %v1989, 120
        %v2044 = vpop.permute.xlu0 %2043
        %2045 = vrot.lane.b32.xlu0 %v1989, 88
        %v2046 = vpop.permute.xlu0 %2045
        %v2048 = vsel %vm1731, %v2044, 0
        %v2051 = vsel %vm1731, %v2046, 0
        %2053 = vmatprep.subr.bf16.mxu0 0
        %2054 = vmatpush1.bf16.xpose.msra.mxu0 %v2051
        %2055 = vmatprep.subr.bf16.mxu0 0
        %2056 = vmatpush1.bf16.xpose.msra.mxu0 0
        %2057 = vmatprep.subr.bf16.mxu0 0
        %2058 = vmatpush1.bf16.xpose.msra.mxu0 0
        %2059 = vmatprep.subr.bf16.mxu0 0
        %2060 = vmatpush1.bf16.xpose.msra.mxu0 0
        %2061 = vmatprep.subr.bf16.mxu0 0
        %2062 = vmatpush1.bf16.xpose.msra.mxu0 0
        %2063 = vmatprep.subr.bf16.mxu0 0
        %2064 = vmatpush1.bf16.xpose.msra.mxu0 0
        %2065 = vmatprep.subr.bf16.mxu0 0
        %2066 = vmatpush1.bf16.xpose.msra.mxu0 0
        %2067 = vmatprep.subr.bf16.mxu0 0
        %2068 = vmatpush1.bf16.xpose.msra.mxu0 0
        %2069 = vmatprep.subr.bf16.mxu0 0
        %2070 = vmatpush1.bf16.xpose.msra.mxu0 0
        %2071 = vmatprep.subr.bf16.mxu0 0
        %2072 = vmatpush1.bf16.xpose.msra.mxu0 0
        %2073 = vmatprep.subr.bf16.mxu0 0
        %2074 = vmatpush1.bf16.xpose.msra.mxu0 0
        %2075 = vmatprep.subr.bf16.mxu0 0
        %2076 = vmatpush1.bf16.xpose.msra.mxu0 0
        %2077 = vmatprep.subr.bf16.mxu0 0
        %2078 = vmatpush1.bf16.xpose.msra.mxu0 0
        %2079 = vmatprep.subr.bf16.mxu0 0
        %2080 = vmatpush1.bf16.xpose.msra.mxu0 0
        %2081 = vmatprep.subr.bf16.mxu0 0
        %2082 = vmatpush1.bf16.xpose.msra.mxu0 0
        %2083 = vmatprep.subr.bf16.mxu0 0
        %2084 = vmatpush1.bf16.xpose.msra.mxu0 0
        %2085 = vmatprep.mubr.bf16.mxu0 0
        %2086 = vmatmul.mubr.bf16.gmra.mrb[0].mxu0 %v2048
        %v2087 = vpop.f32.mrb[0].mxu0
        %v2088 = vadd.f32 0.0, %v2087
        %v2089 = vpop.f32.mrb[0].mxu0
        %v2090 = vpop.f32.mrb[0].mxu0
        %v2091 = vadd.f32 0.0, %v2090
        %v2092 = vpop.f32.mrb[0].mxu0
        %2093 = vdwg.mxu0
        %v2094 = vmul.f32 %v2036, 0.35355338
        %v2095 = vmul.f32 %v2039, 0.35355338
        %v2096 = vmul.f32 %v2088, 0.35355338
        %v2097 = vmul.f32 %v2091, 0.35355338
        %v2098 = vadd.f32 %v2094, %v1837
        %v2099 = vadd.f32 %v2095, %v1837
        %v2100 = vadd.f32 %v2096, %v1837
        %v2101 = vadd.f32 %v2097, %v1837
        %v2102 = vsel %vm1843, %v2098, -inf
        %2103 = vmax.xlane.f32.xlu0 %v2102
        %v2104 = vpop.xlane.xlu0 %2103
        %v2105 = vsel %vm1843, %v2099, -inf
        %2106 = vmax.xlane.f32.xlu0 %v2105
        %v2107 = vpop.xlane.xlu0 %2106
        %v2108 = vsel %vm1843, %v2100, -inf
        %2109 = vmax.xlane.f32.xlu0 %v2108
        %v2110 = vpop.xlane.xlu0 %2109
        %v2111 = vsel %vm1843, %v2101, -inf
        %2112 = vmax.xlane.f32.xlu0 %v2111
        %v2113 = vpop.xlane.xlu0 %2112
        %v2114 = vsub.f32 %v2098, %v2104
        %v2115 = vsub.f32 %v2099, %v2107
        %v2116 = vsub.f32 %v2100, %v2110
        %v2117 = vsub.f32 %v2101, %v2113
        %v2118 = vmul.f32 %v2114, 1.442695
        %v2119 = vpow.pop %v2118
        %v2120 = vmul.f32 %v2115, 1.442695
        %v2121 = vpow.pop %v2120
        %v2122 = vmul.f32 %v2116, 1.442695
        %v2123 = vpow.pop %v2122
        %v2124 = vmul.f32 %v2117, 1.442695
        %v2125 = vpow.pop %v2124
        %v2126 = vsel %vm1843, %v2119, 0.0
        %2127 = vadd.xlane.f32.xlu0 %v2126
        %v2128 = vpop.xlane.xlu0 %2127
        %v2129 = vsel %vm1843, %v2121, 0.0
        %2130 = vadd.xlane.f32.xlu0 %v2129
        %v2131 = vpop.xlane.xlu0 %2130
        %v2132 = vsel %vm1843, %v2123, 0.0
        %2133 = vadd.xlane.f32.xlu0 %v2132
        %v2134 = vpop.xlane.xlu0 %2133
        %v2135 = vsel %vm1843, %v2125, 0.0
        %2136 = vadd.xlane.f32.xlu0 %v2135
        %v2137 = vpop.xlane.xlu0 %2136
        %v2138 = vrcp.pop %v2128
        %v2139 = vrcp.pop %v2131
        %v2140 = vrcp.pop %v2134
        %v2141 = vrcp.pop %v2137
        %v2142 = vmul.f32 %v2119, %v2138
        %v2143 = vmul.f32 %v2121, %v2139
        %v2144 = vmul.f32 %v2123, %v2140
        %v2145 = vmul.f32 %v2125, %v2141
        %v2146 = vpack.c.bf16 %v2143, %v2142
        %v2147 = vpack.c.bf16 %v2145, %v2144
        %2148 = vrot.lane.b32.xlu0 %v1988, 56
        %v2149 = vpop.permute.xlu0 %2148
        %v2152 = vsel %vm1843, %v2146, 0
        %2154 = vmatprep.subr.bf16.mxu0 0
        %2155 = vmatpush1.bf16.msra.mxu0 %v2149
        %2156 = vmatprep.subr.bf16.mxu0 0
        %2157 = vmatpush1.bf16.msra.mxu0 0
        %2158 = vmatprep.subr.bf16.mxu0 0
        %2159 = vmatpush1.bf16.msra.mxu0 0
        %2160 = vmatprep.subr.bf16.mxu0 0
        %2161 = vmatpush1.bf16.msra.mxu0 0
        %2162 = vmatprep.subr.bf16.mxu0 0
        %2163 = vmatpush1.bf16.msra.mxu0 0
        %2164 = vmatprep.subr.bf16.mxu0 0
        %2165 = vmatpush1.bf16.msra.mxu0 0
        %2166 = vmatprep.subr.bf16.mxu0 0
        %2167 = vmatpush1.bf16.msra.mxu0 0
        %2168 = vmatprep.subr.bf16.mxu0 0
        %2169 = vmatpush1.bf16.msra.mxu0 0
        %2170 = vmatprep.subr.bf16.mxu0 0
        %2171 = vmatpush1.bf16.msra.mxu0 0
        %2172 = vmatprep.subr.bf16.mxu0 0
        %2173 = vmatpush1.bf16.msra.mxu0 0
        %2174 = vmatprep.subr.bf16.mxu0 0
        %2175 = vmatpush1.bf16.msra.mxu0 0
        %2176 = vmatprep.subr.bf16.mxu0 0
        %2177 = vmatpush1.bf16.msra.mxu0 0
        %2178 = vmatprep.subr.bf16.mxu0 0
        %2179 = vmatpush1.bf16.msra.mxu0 0
        %2180 = vmatprep.subr.bf16.mxu0 0
        %2181 = vmatpush1.bf16.msra.mxu0 0
        %2182 = vmatprep.subr.bf16.mxu0 0
        %2183 = vmatpush1.bf16.msra.mxu0 0
        %2184 = vmatprep.subr.bf16.mxu0 0
        %2185 = vmatpush1.bf16.msra.mxu0 0
        %2186 = vmatprep.mubr.bf16.mxu0 0
        %2187 = vmatmul.mubr.bf16.gmra.mrb[0].mxu0 %v2152
        %v2188 = vpop.f32.mrb[0].mxu0
        %v2189 = vadd.f32 0.0, %v2188
        %v2190 = vpop.f32.mrb[0].mxu0
        %v2191 = vpop.f32.mrb[0].mxu0
        %v2192 = vadd.f32 0.0, %v2191
        %v2193 = vpop.f32.mrb[0].mxu0
        %2194 = vdwg.mxu0
        %2195 = vrot.lane.b32.xlu0 %v1989, 56
        %v2196 = vpop.permute.xlu0 %2195
        %v2199 = vsel %vm1843, %v2147, 0
        %2201 = vmatprep.subr.bf16.mxu0 0
        %2202 = vmatpush1.bf16.msra.mxu0 %v2196
        %2203 = vmatprep.subr.bf16.mxu0 0
        %2204 = vmatpush1.bf16.msra.mxu0 0
        %2205 = vmatprep.subr.bf16.mxu0 0
        %2206 = vmatpush1.bf16.msra.mxu0 0
        %2207 = vmatprep.subr.bf16.mxu0 0
        %2208 = vmatpush1.bf16.msra.mxu0 0
        %2209 = vmatprep.subr.bf16.mxu0 0
        %2210 = vmatpush1.bf16.msra.mxu0 0
        %2211 = vmatprep.subr.bf16.mxu0 0
        %2212 = vmatpush1.bf16.msra.mxu0 0
        %2213 = vmatprep.subr.bf16.mxu0 0
        %2214 = vmatpush1.bf16.msra.mxu0 0
        %2215 = vmatprep.subr.bf16.mxu0 0
        %2216 = vmatpush1.bf16.msra.mxu0 0
        %2217 = vmatprep.subr.bf16.mxu0 0
        %2218 = vmatpush1.bf16.msra.mxu0 0
        %2219 = vmatprep.subr.bf16.mxu0 0
        %2220 = vmatpush1.bf16.msra.mxu0 0
        %2221 = vmatprep.subr.bf16.mxu0 0
        %2222 = vmatpush1.bf16.msra.mxu0 0
        %2223 = vmatprep.subr.bf16.mxu0 0
        %2224 = vmatpush1.bf16.msra.mxu0 0
        %2225 = vmatprep.subr.bf16.mxu0 0
        %2226 = vmatpush1.bf16.msra.mxu0 0
        %2227 = vmatprep.subr.bf16.mxu0 0
        %2228 = vmatpush1.bf16.msra.mxu0 0
        %2229 = vmatprep.subr.bf16.mxu0 0
        %2230 = vmatpush1.bf16.msra.mxu0 0
        %2231 = vmatprep.subr.bf16.mxu0 0
        %2232 = vmatpush1.bf16.msra.mxu0 0
        %2233 = vmatprep.mubr.bf16.mxu0 0
        %2234 = vmatmul.mubr.bf16.gmra.mrb[0].mxu0 %v2199
        %v2235 = vpop.f32.mrb[0].mxu0
        %v2236 = vadd.f32 0.0, %v2235
        %v2237 = vpop.f32.mrb[0].mxu0
        %v2238 = vpop.f32.mrb[0].mxu0
        %v2239 = vadd.f32 0.0, %v2238
        %v2240 = vpop.f32.mrb[0].mxu0
        %2241 = vdwg.mxu0
        %v2242 = vpack.c.bf16 %v2192, %v2189
        %v2243 = vpack.c.bf16 %v2239, %v2236
        %2246 = vrot.lane.b32.xlu0 %v2242, 8
        %v2247 = vpop.permute.xlu0 %2246
        %2248 = vrot.lane.b32.xlu0 %v2243, 8
        %v2249 = vpop.permute.xlu0 %2248
        %vm2252 = vcmask 130112
        %2253 = vst.msk [vmem:[#allocation4] sm:$0xff] %vm2252, %v2247
        %2254 = vst.msk [vmem:[#allocation4 + $0x8] sm:$0xff] %vm2252, %v2249
        %v2255 = vld [vmem:[#allocation3] sm:$0xff]
        %v2256 = vld [vmem:[#allocation3 + $0x8] sm:$0xff]
        %2258 = vrot.lane.b32.xlu0 %v2255, 112
        %v2259 = vpop.permute.xlu0 %2258
        %2260 = vrot.lane.b32.xlu0 %v2255, 80
        %v2261 = vpop.permute.xlu0 %2260
        %v2263 = vsel %vm1731, %v2259, 0
        %v2266 = vsel %vm1731, %v2261, 0
        %2268 = vmatprep.subr.bf16.mxu0 0
        %2269 = vmatpush1.bf16.xpose.msra.mxu0 %v2266
        %2270 = vmatprep.subr.bf16.mxu0 0
        %2271 = vmatpush1.bf16.xpose.msra.mxu0 0
        %2272 = vmatprep.subr.bf16.mxu0 0
        %2273 = vmatpush1.bf16.xpose.msra.mxu0 0
        %2274 = vmatprep.subr.bf16.mxu0 0
        %2275 = vmatpush1.bf16.xpose.msra.mxu0 0
        %2276 = vmatprep.subr.bf16.mxu0 0
        %2277 = vmatpush1.bf16.xpose.msra.mxu0 0
        %2278 = vmatprep.subr.bf16.mxu0 0
        %2279 = vmatpush1.bf16.xpose.msra.mxu0 0
        %2280 = vmatprep.subr.bf16.mxu0 0
        %2281 = vmatpush1.bf16.xpose.msra.mxu0 0
        %2282 = vmatprep.subr.bf16.mxu0 0
        %2283 = vmatpush1.bf16.xpose.msra.mxu0 0
        %2284 = vmatprep.subr.bf16.mxu0 0
        %2285 = vmatpush1.bf16.xpose.msra.mxu0 0
        %2286 = vmatprep.subr.bf16.mxu0 0
        %2287 = vmatpush1.bf16.xpose.msra.mxu0 0
        %2288 = vmatprep.subr.bf16.mxu0 0
        %2289 = vmatpush1.bf16.xpose.msra.mxu0 0
        %2290 = vmatprep.subr.bf16.mxu0 0
        %2291 = vmatpush1.bf16.xpose.msra.mxu0 0
        %2292 = vmatprep.subr.bf16.mxu0 0
        %2293 = vmatpush1.bf16.xpose.msra.mxu0 0
        %2294 = vmatprep.subr.bf16.mxu0 0
        %2295 = vmatpush1.bf16.xpose.msra.mxu0 0
        %2296 = vmatprep.subr.bf16.mxu0 0
        %2297 = vmatpush1.bf16.xpose.msra.mxu0 0
        %2298 = vmatprep.subr.bf16.mxu0 0
        %2299 = vmatpush1.bf16.xpose.msra.mxu0 0
        %2300 = vmatprep.mubr.bf16.mxu0 0
        %2301 = vmatmul.mubr.bf16.gmra.mrb[0].mxu0 %v2263
        %v2302 = vpop.f32.mrb[0].mxu0
        %v2303 = vadd.f32 0.0, %v2302
        %v2304 = vpop.f32.mrb[0].mxu0
        %v2305 = vpop.f32.mrb[0].mxu0
        %v2306 = vadd.f32 0.0, %v2305
        %v2307 = vpop.f32.mrb[0].mxu0
        %2308 = vdwg.mxu0
        %2310 = vrot.lane.b32.xlu0 %v2256, 112
        %v2311 = vpop.permute.xlu0 %2310
        %2312 = vrot.lane.b32.xlu0 %v2256, 80
        %v2313 = vpop.permute.xlu0 %2312
        %v2315 = vsel %vm1731, %v2311, 0
        %v2318 = vsel %vm1731, %v2313, 0
        %2320 = vmatprep.subr.bf16.mxu0 0
        %2321 = vmatpush1.bf16.xpose.msra.mxu0 %v2318
        %2322 = vmatprep.subr.bf16.mxu0 0
        %2323 = vmatpush1.bf16.xpose.msra.mxu0 0
        %2324 = vmatprep.subr.bf16.mxu0 0
        %2325 = vmatpush1.bf16.xpose.msra.mxu0 0
        %2326 = vmatprep.subr.bf16.mxu0 0
        %2327 = vmatpush1.bf16.xpose.msra.mxu0 0
        %2328 = vmatprep.subr.bf16.mxu0 0
        %2329 = vmatpush1.bf16.xpose.msra.mxu0 0
        %2330 = vmatprep.subr.bf16.mxu0 0
        %2331 = vmatpush1.bf16.xpose.msra.mxu0 0
        %2332 = vmatprep.subr.bf16.mxu0 0
        %2333 = vmatpush1.bf16.xpose.msra.mxu0 0
        %2334 = vmatprep.subr.bf16.mxu0 0
        %2335 = vmatpush1.bf16.xpose.msra.mxu0 0
        %2336 = vmatprep.subr.bf16.mxu0 0
        %2337 = vmatpush1.bf16.xpose.msra.mxu0 0
        %2338 = vmatprep.subr.bf16.mxu0 0
        %2339 = vmatpush1.bf16.xpose.msra.mxu0 0
        %2340 = vmatprep.subr.bf16.mxu0 0
        %2341 = vmatpush1.bf16.xpose.msra.mxu0 0
        %2342 = vmatprep.subr.bf16.mxu0 0
        %2343 = vmatpush1.bf16.xpose.msra.mxu0 0
        %2344 = vmatprep.subr.bf16.mxu0 0
        %2345 = vmatpush1.bf16.xpose.msra.mxu0 0
        %2346 = vmatprep.subr.bf16.mxu0 0
        %2347 = vmatpush1.bf16.xpose.msra.mxu0 0
        %2348 = vmatprep.subr.bf16.mxu0 0
        %2349 = vmatpush1.bf16.xpose.msra.mxu0 0
        %2350 = vmatprep.subr.bf16.mxu0 0
        %2351 = vmatpush1.bf16.xpose.msra.mxu0 0
        %2352 = vmatprep.mubr.bf16.mxu0 0
        %2353 = vmatmul.mubr.bf16.gmra.mrb[0].mxu0 %v2315
        %v2354 = vpop.f32.mrb[0].mxu0
        %v2355 = vadd.f32 0.0, %v2354
        %v2356 = vpop.f32.mrb[0].mxu0
        %v2357 = vpop.f32.mrb[0].mxu0
        %v2358 = vadd.f32 0.0, %v2357
        %v2359 = vpop.f32.mrb[0].mxu0
        %2360 = vdwg.mxu0
        %v2361 = vmul.f32 %v2303, 0.35355338
        %v2362 = vmul.f32 %v2306, 0.35355338
        %v2363 = vmul.f32 %v2355, 0.35355338
        %v2364 = vmul.f32 %v2358, 0.35355338
        %v2365 = vadd.f32 %v2361, %v1837
        %v2366 = vadd.f32 %v2362, %v1837
        %v2367 = vadd.f32 %v2363, %v1837
        %v2368 = vadd.f32 %v2364, %v1837
        %v2369 = vsel %vm1843, %v2365, -inf
        %2370 = vmax.xlane.f32.xlu0 %v2369
        %v2371 = vpop.xlane.xlu0 %2370
        %v2372 = vsel %vm1843, %v2366, -inf
        %2373 = vmax.xlane.f32.xlu0 %v2372
        %v2374 = vpop.xlane.xlu0 %2373
        %v2375 = vsel %vm1843, %v2367, -inf
        %2376 = vmax.xlane.f32.xlu0 %v2375
        %v2377 = vpop.xlane.xlu0 %2376
        %v2378 = vsel %vm1843, %v2368, -inf
        %2379 = vmax.xlane.f32.xlu0 %v2378
        %v2380 = vpop.xlane.xlu0 %2379
        %v2381 = vsub.f32 %v2365, %v2371
        %v2382 = vsub.f32 %v2366, %v2374
        %v2383 = vsub.f32 %v2367, %v2377
        %v2384 = vsub.f32 %v2368, %v2380
        %v2385 = vmul.f32 %v2381, 1.442695
        %v2386 = vpow.pop %v2385
        %v2387 = vmul.f32 %v2382, 1.442695
        %v2388 = vpow.pop %v2387
        %v2389 = vmul.f32 %v2383, 1.442695
        %v2390 = vpow.pop %v2389
        %v2391 = vmul.f32 %v2384, 1.442695
        %v2392 = vpow.pop %v2391
        %v2393 = vsel %vm1843, %v2386, 0.0
        %2394 = vadd.xlane.f32.xlu0 %v2393
        %v2395 = vpop.xlane.xlu0 %2394
        %v2396 = vsel %vm1843, %v2388, 0.0
        %2397 = vadd.xlane.f32.xlu0 %v2396
        %v2398 = vpop.xlane.xlu0 %2397
        %v2399 = vsel %vm1843, %v2390, 0.0
        %2400 = vadd.xlane.f32.xlu0 %v2399
        %v2401 = vpop.xlane.xlu0 %2400
        %v2402 = vsel %vm1843, %v2392, 0.0
        %2403 = vadd.xlane.f32.xlu0 %v2402
        %v2404 = vpop.xlane.xlu0 %2403
        %v2405 = vrcp.pop %v2395
        %v2406 = vrcp.pop %v2398
        %v2407 = vrcp.pop %v2401
        %v2408 = vrcp.pop %v2404
        %v2409 = vmul.f32 %v2386, %v2405
        %v2410 = vmul.f32 %v2388, %v2406
        %v2411 = vmul.f32 %v2390, %v2407
        %v2412 = vmul.f32 %v2392, %v2408
        %v2413 = vpack.c.bf16 %v2410, %v2409
        %v2414 = vpack.c.bf16 %v2412, %v2411
        %2415 = vrot.lane.b32.xlu0 %v2255, 48
        %v2416 = vpop.permute.xlu0 %2415
        %v2419 = vsel %vm1843, %v2413, 0
        %2421 = vmatprep.subr.bf16.mxu0 0
        %2422 = vmatpush1.bf16.msra.mxu0 %v2416
        %2423 = vmatprep.subr.bf16.mxu0 0
        %2424 = vmatpush1.bf16.msra.mxu0 0
        %2425 = vmatprep.subr.bf16.mxu0 0
        %2426 = vmatpush1.bf16.msra.mxu0 0
        %2427 = vmatprep.subr.bf16.mxu0 0
        %2428 = vmatpush1.bf16.msra.mxu0 0
        %2429 = vmatprep.subr.bf16.mxu0 0
        %2430 = vmatpush1.bf16.msra.mxu0 0
        %2431 = vmatprep.subr.bf16.mxu0 0
        %2432 = vmatpush1.bf16.msra.mxu0 0
        %2433 = vmatprep.subr.bf16.mxu0 0
        %2434 = vmatpush1.bf16.msra.mxu0 0
        %2435 = vmatprep.subr.bf16.mxu0 0
        %2436 = vmatpush1.bf16.msra.mxu0 0
        %2437 = vmatprep.subr.bf16.mxu0 0
        %2438 = vmatpush1.bf16.msra.mxu0 0
        %2439 = vmatprep.subr.bf16.mxu0 0
        %2440 = vmatpush1.bf16.msra.mxu0 0
        %2441 = vmatprep.subr.bf16.mxu0 0
        %2442 = vmatpush1.bf16.msra.mxu0 0
        %2443 = vmatprep.subr.bf16.mxu0 0
        %2444 = vmatpush1.bf16.msra.mxu0 0
        %2445 = vmatprep.subr.bf16.mxu0 0
        %2446 = vmatpush1.bf16.msra.mxu0 0
        %2447 = vmatprep.subr.bf16.mxu0 0
        %2448 = vmatpush1.bf16.msra.mxu0 0
        %2449 = vmatprep.subr.bf16.mxu0 0
        %2450 = vmatpush1.bf16.msra.mxu0 0
        %2451 = vmatprep.subr.bf16.mxu0 0
        %2452 = vmatpush1.bf16.msra.mxu0 0
        %2453 = vmatprep.mubr.bf16.mxu0 0
        %2454 = vmatmul.mubr.bf16.gmra.mrb[0].mxu0 %v2419
        %v2455 = vpop.f32.mrb[0].mxu0
        %v2456 = vadd.f32 0.0, %v2455
        %v2457 = vpop.f32.mrb[0].mxu0
        %v2458 = vpop.f32.mrb[0].mxu0
        %v2459 = vadd.f32 0.0, %v2458
        %v2460 = vpop.f32.mrb[0].mxu0
        %2461 = vdwg.mxu0
        %2462 = vrot.lane.b32.xlu0 %v2256, 48
        %v2463 = vpop.permute.xlu0 %2462
        %v2466 = vsel %vm1843, %v2414, 0
        %2468 = vmatprep.subr.bf16.mxu0 0
        %2469 = vmatpush1.bf16.msra.mxu0 %v2463
        %2470 = vmatprep.subr.bf16.mxu0 0
        %2471 = vmatpush1.bf16.msra.mxu0 0
        %2472 = vmatprep.subr.bf16.mxu0 0
        %2473 = vmatpush1.bf16.msra.mxu0 0
        %2474 = vmatprep.subr.bf16.mxu0 0
        %2475 = vmatpush1.bf16.msra.mxu0 0
        %2476 = vmatprep.subr.bf16.mxu0 0
        %2477 = vmatpush1.bf16.msra.mxu0 0
        %2478 = vmatprep.subr.bf16.mxu0 0
        %2479 = vmatpush1.bf16.msra.mxu0 0
        %2480 = vmatprep.subr.bf16.mxu0 0
        %2481 = vmatpush1.bf16.msra.mxu0 0
        %2482 = vmatprep.subr.bf16.mxu0 0
        %2483 = vmatpush1.bf16.msra.mxu0 0
        %2484 = vmatprep.subr.bf16.mxu0 0
        %2485 = vmatpush1.bf16.msra.mxu0 0
        %2486 = vmatprep.subr.bf16.mxu0 0
        %2487 = vmatpush1.bf16.msra.mxu0 0
        %2488 = vmatprep.subr.bf16.mxu0 0
        %2489 = vmatpush1.bf16.msra.mxu0 0
        %2490 = vmatprep.subr.bf16.mxu0 0
        %2491 = vmatpush1.bf16.msra.mxu0 0
        %2492 = vmatprep.subr.bf16.mxu0 0
        %2493 = vmatpush1.bf16.msra.mxu0 0
        %2494 = vmatprep.subr.bf16.mxu0 0
        %2495 = vmatpush1.bf16.msra.mxu0 0
        %2496 = vmatprep.subr.bf16.mxu0 0
        %2497 = vmatpush1.bf16.msra.mxu0 0
        %2498 = vmatprep.subr.bf16.mxu0 0
        %2499 = vmatpush1.bf16.msra.mxu0 0
        %2500 = vmatprep.mubr.bf16.mxu0 0
        %2501 = vmatmul.mubr.bf16.gmra.mrb[0].mxu0 %v2466
        %v2502 = vpop.f32.mrb[0].mxu0
        %v2503 = vadd.f32 0.0, %v2502
        %v2504 = vpop.f32.mrb[0].mxu0
        %v2505 = vpop.f32.mrb[0].mxu0
        %v2506 = vadd.f32 0.0, %v2505
        %v2507 = vpop.f32.mrb[0].mxu0
        %2508 = vdwg.mxu0
        %v2509 = vpack.c.bf16 %v2459, %v2456
        %v2510 = vpack.c.bf16 %v2506, %v2503
        %2513 = vrot.lane.b32.xlu0 %v2509, 16
        %v2514 = vpop.permute.xlu0 %2513
        %2515 = vrot.lane.b32.xlu0 %v2510, 16
        %v2516 = vpop.permute.xlu0 %2515
        %vm2519 = vcmask 195712
        %2520 = vst.msk [vmem:[#allocation4] sm:$0xff] %vm2519, %v2514
        %2521 = vst.msk [vmem:[#allocation4 + $0x8] sm:$0xff] %vm2519, %v2516
        %v2522 = vld [vmem:[#allocation3] sm:$0xff]
        %v2523 = vld [vmem:[#allocation3 + $0x8] sm:$0xff]
        %2525 = vrot.lane.b32.xlu0 %v2522, 104
        %v2526 = vpop.permute.xlu0 %2525
        %2527 = vrot.lane.b32.xlu0 %v2522, 72
        %v2528 = vpop.permute.xlu0 %2527
        %v2530 = vsel %vm1731, %v2526, 0
        %v2533 = vsel %vm1731, %v2528, 0
        %2535 = vmatprep.subr.bf16.mxu0 0
        %2536 = vmatpush1.bf16.xpose.msra.mxu0 %v2533
        %2537 = vmatprep.subr.bf16.mxu0 0
        %2538 = vmatpush1.bf16.xpose.msra.mxu0 0
        %2539 = vmatprep.subr.bf16.mxu0 0
        %2540 = vmatpush1.bf16.xpose.msra.mxu0 0
        %2541 = vmatprep.subr.bf16.mxu0 0
        %2542 = vmatpush1.bf16.xpose.msra.mxu0 0
        %2543 = vmatprep.subr.bf16.mxu0 0
        %2544 = vmatpush1.bf16.xpose.msra.mxu0 0
        %2545 = vmatprep.subr.bf16.mxu0 0
        %2546 = vmatpush1.bf16.xpose.msra.mxu0 0
        %2547 = vmatprep.subr.bf16.mxu0 0
        %2548 = vmatpush1.bf16.xpose.msra.mxu0 0
        %2549 = vmatprep.subr.bf16.mxu0 0
        %2550 = vmatpush1.bf16.xpose.msra.mxu0 0
        %2551 = vmatprep.subr.bf16.mxu0 0
        %2552 = vmatpush1.bf16.xpose.msra.mxu0 0
        %2553 = vmatprep.subr.bf16.mxu0 0
        %2554 = vmatpush1.bf16.xpose.msra.mxu0 0
        %2555 = vmatprep.subr.bf16.mxu0 0
        %2556 = vmatpush1.bf16.xpose.msra.mxu0 0
        %2557 = vmatprep.subr.bf16.mxu0 0
        %2558 = vmatpush1.bf16.xpose.msra.mxu0 0
        %2559 = vmatprep.subr.bf16.mxu0 0
        %2560 = vmatpush1.bf16.xpose.msra.mxu0 0
        %2561 = vmatprep.subr.bf16.mxu0 0
        %2562 = vmatpush1.bf16.xpose.msra.mxu0 0
        %2563 = vmatprep.subr.bf16.mxu0 0
        %2564 = vmatpush1.bf16.xpose.msra.mxu0 0
        %2565 = vmatprep.subr.bf16.mxu0 0
        %2566 = vmatpush1.bf16.xpose.msra.mxu0 0
        %2567 = vmatprep.mubr.bf16.mxu0 0
        %2568 = vmatmul.mubr.bf16.gmra.mrb[0].mxu0 %v2530
        %v2569 = vpop.f32.mrb[0].mxu0
        %v2570 = vadd.f32 0.0, %v2569
        %v2571 = vpop.f32.mrb[0].mxu0
        %v2572 = vpop.f32.mrb[0].mxu0
        %v2573 = vadd.f32 0.0, %v2572
        %v2574 = vpop.f32.mrb[0].mxu0
        %2575 = vdwg.mxu0
        %2577 = vrot.lane.b32.xlu0 %v2523, 104
        %v2578 = vpop.permute.xlu0 %2577
        %2579 = vrot.lane.b32.xlu0 %v2523, 72
        %v2580 = vpop.permute.xlu0 %2579
        %v2582 = vsel %vm1731, %v2578, 0
        %v2585 = vsel %vm1731, %v2580, 0
        %2587 = vmatprep.subr.bf16.mxu0 0
        %2588 = vmatpush1.bf16.xpose.msra.mxu0 %v2585
        %2589 = vmatprep.subr.bf16.mxu0 0
        %2590 = vmatpush1.bf16.xpose.msra.mxu0 0
        %2591 = vmatprep.subr.bf16.mxu0 0
        %2592 = vmatpush1.bf16.xpose.msra.mxu0 0
        %2593 = vmatprep.subr.bf16.mxu0 0
        %2594 = vmatpush1.bf16.xpose.msra.mxu0 0
        %2595 = vmatprep.subr.bf16.mxu0 0
        %2596 = vmatpush1.bf16.xpose.msra.mxu0 0
        %2597 = vmatprep.subr.bf16.mxu0 0
        %2598 = vmatpush1.bf16.xpose.msra.mxu0 0
        %2599 = vmatprep.subr.bf16.mxu0 0
        %2600 = vmatpush1.bf16.xpose.msra.mxu0 0
        %2601 = vmatprep.subr.bf16.mxu0 0
        %2602 = vmatpush1.bf16.xpose.msra.mxu0 0
        %2603 = vmatprep.subr.bf16.mxu0 0
        %2604 = vmatpush1.bf16.xpose.msra.mxu0 0
        %2605 = vmatprep.subr.bf16.mxu0 0
        %2606 = vmatpush1.bf16.xpose.msra.mxu0 0
        %2607 = vmatprep.subr.bf16.mxu0 0
        %2608 = vmatpush1.bf16.xpose.msra.mxu0 0
        %2609 = vmatprep.subr.bf16.mxu0 0
        %2610 = vmatpush1.bf16.xpose.msra.mxu0 0
        %2611 = vmatprep.subr.bf16.mxu0 0
        %2612 = vmatpush1.bf16.xpose.msra.mxu0 0
        %2613 = vmatprep.subr.bf16.mxu0 0
        %2614 = vmatpush1.bf16.xpose.msra.mxu0 0
        %2615 = vmatprep.subr.bf16.mxu0 0
        %2616 = vmatpush1.bf16.xpose.msra.mxu0 0
        %2617 = vmatprep.subr.bf16.mxu0 0
        %2618 = vmatpush1.bf16.xpose.msra.mxu0 0
        %2619 = vmatprep.mubr.bf16.mxu0 0
        %2620 = vmatmul.mubr.bf16.gmra.mrb[0].mxu0 %v2582
        %v2621 = vpop.f32.mrb[0].mxu0
        %v2622 = vadd.f32 0.0, %v2621
        %v2623 = vpop.f32.mrb[0].mxu0
        %v2624 = vpop.f32.mrb[0].mxu0
        %v2625 = vadd.f32 0.0, %v2624
        %v2626 = vpop.f32.mrb[0].mxu0
        %2627 = vdwg.mxu0
        %v2628 = vmul.f32 %v2570, 0.35355338
        %v2629 = vmul.f32 %v2573, 0.35355338
        %v2630 = vmul.f32 %v2622, 0.35355338
        %v2631 = vmul.f32 %v2625, 0.35355338
        %v2632 = vadd.f32 %v2628, %v1837
        %v2633 = vadd.f32 %v2629, %v1837
        %v2634 = vadd.f32 %v2630, %v1837
        %v2635 = vadd.f32 %v2631, %v1837
        %v2636 = vsel %vm1843, %v2632, -inf
        %2637 = vmax.xlane.f32.xlu0 %v2636
        %v2638 = vpop.xlane.xlu0 %2637
        %v2639 = vsel %vm1843, %v2633, -inf
        %2640 = vmax.xlane.f32.xlu0 %v2639
        %v2641 = vpop.xlane.xlu0 %2640
        %v2642 = vsel %vm1843, %v2634, -inf
        %2643 = vmax.xlane.f32.xlu0 %v2642
        %v2644 = vpop.xlane.xlu0 %2643
        %v2645 = vsel %vm1843, %v2635, -inf
        %2646 = vmax.xlane.f32.xlu0 %v2645
        %v2647 = vpop.xlane.xlu0 %2646
        %v2648 = vsub.f32 %v2632, %v2638
        %v2649 = vsub.f32 %v2633, %v2641
        %v2650 = vsub.f32 %v2634, %v2644
        %v2651 = vsub.f32 %v2635, %v2647
        %v2652 = vmul.f32 %v2648, 1.442695
        %v2653 = vpow.pop %v2652
        %v2654 = vmul.f32 %v2649, 1.442695
        %v2655 = vpow.pop %v2654
        %v2656 = vmul.f32 %v2650, 1.442695
        %v2657 = vpow.pop %v2656
        %v2658 = vmul.f32 %v2651, 1.442695
        %v2659 = vpow.pop %v2658
        %v2660 = vsel %vm1843, %v2653, 0.0
        %2661 = vadd.xlane.f32.xlu0 %v2660
        %v2662 = vpop.xlane.xlu0 %2661
        %v2663 = vsel %vm1843, %v2655, 0.0
        %2664 = vadd.xlane.f32.xlu0 %v2663
        %v2665 = vpop.xlane.xlu0 %2664
        %v2666 = vsel %vm1843, %v2657, 0.0
        %2667 = vadd.xlane.f32.xlu0 %v2666
        %v2668 = vpop.xlane.xlu0 %2667
        %v2669 = vsel %vm1843, %v2659, 0.0
        %2670 = vadd.xlane.f32.xlu0 %v2669
        %v2671 = vpop.xlane.xlu0 %2670
        %v2672 = vrcp.pop %v2662
        %v2673 = vrcp.pop %v2665
        %v2674 = vrcp.pop %v2668
        %v2675 = vrcp.pop %v2671
        %v2676 = vmul.f32 %v2653, %v2672
        %v2677 = vmul.f32 %v2655, %v2673
        %v2678 = vmul.f32 %v2657, %v2674
        %v2679 = vmul.f32 %v2659, %v2675
        %v2680 = vpack.c.bf16 %v2677, %v2676
        %v2681 = vpack.c.bf16 %v2679, %v2678
        %2682 = vrot.lane.b32.xlu0 %v2522, 40
        %v2683 = vpop.permute.xlu0 %2682
        %v2686 = vsel %vm1843, %v2680, 0
        %2688 = vmatprep.subr.bf16.mxu0 0
        %2689 = vmatpush1.bf16.msra.mxu0 %v2683
        %2690 = vmatprep.subr.bf16.mxu0 0
        %2691 = vmatpush1.bf16.msra.mxu0 0
        %2692 = vmatprep.subr.bf16.mxu0 0
        %2693 = vmatpush1.bf16.msra.mxu0 0
        %2694 = vmatprep.subr.bf16.mxu0 0
        %2695 = vmatpush1.bf16.msra.mxu0 0
        %2696 = vmatprep.subr.bf16.mxu0 0
        %2697 = vmatpush1.bf16.msra.mxu0 0
        %2698 = vmatprep.subr.bf16.mxu0 0
        %2699 = vmatpush1.bf16.msra.mxu0 0
        %2700 = vmatprep.subr.bf16.mxu0 0
        %2701 = vmatpush1.bf16.msra.mxu0 0
        %2702 = vmatprep.subr.bf16.mxu0 0
        %2703 = vmatpush1.bf16.msra.mxu0 0
        %2704 = vmatprep.subr.bf16.mxu0 0
        %2705 = vmatpush1.bf16.msra.mxu0 0
        %2706 = vmatprep.subr.bf16.mxu0 0
        %2707 = vmatpush1.bf16.msra.mxu0 0
        %2708 = vmatprep.subr.bf16.mxu0 0
        %2709 = vmatpush1.bf16.msra.mxu0 0
        %2710 = vmatprep.subr.bf16.mxu0 0
        %2711 = vmatpush1.bf16.msra.mxu0 0
        %2712 = vmatprep.subr.bf16.mxu0 0
        %2713 = vmatpush1.bf16.msra.mxu0 0
        %2714 = vmatprep.subr.bf16.mxu0 0
        %2715 = vmatpush1.bf16.msra.mxu0 0
        %2716 = vmatprep.subr.bf16.mxu0 0
        %2717 = vmatpush1.bf16.msra.mxu0 0
        %2718 = vmatprep.subr.bf16.mxu0 0
        %2719 = vmatpush1.bf16.msra.mxu0 0
        %2720 = vmatprep.mubr.bf16.mxu0 0
        %2721 = vmatmul.mubr.bf16.gmra.mrb[0].mxu0 %v2686
        %v2722 = vpop.f32.mrb[0].mxu0
        %v2723 = vadd.f32 0.0, %v2722
        %v2724 = vpop.f32.mrb[0].mxu0
        %v2725 = vpop.f32.mrb[0].mxu0
        %v2726 = vadd.f32 0.0, %v2725
        %v2727 = vpop.f32.mrb[0].mxu0
        %2728 = vdwg.mxu0
        %2729 = vrot.lane.b32.xlu0 %v2523, 40
        %v2730 = vpop.permute.xlu0 %2729
        %v2733 = vsel %vm1843, %v2681, 0
        %2735 = vmatprep.subr.bf16.mxu0 0
        %2736 = vmatpush1.bf16.msra.mxu0 %v2730
        %2737 = vmatprep.subr.bf16.mxu0 0
        %2738 = vmatpush1.bf16.msra.mxu0 0
        %2739 = vmatprep.subr.bf16.mxu0 0
        %2740 = vmatpush1.bf16.msra.mxu0 0
        %2741 = vmatprep.subr.bf16.mxu0 0
        %2742 = vmatpush1.bf16.msra.mxu0 0
        %2743 = vmatprep.subr.bf16.mxu0 0
        %2744 = vmatpush1.bf16.msra.mxu0 0
        %2745 = vmatprep.subr.bf16.mxu0 0
        %2746 = vmatpush1.bf16.msra.mxu0 0
        %2747 = vmatprep.subr.bf16.mxu0 0
        %2748 = vmatpush1.bf16.msra.mxu0 0
        %2749 = vmatprep.subr.bf16.mxu0 0
        %2750 = vmatpush1.bf16.msra.mxu0 0
        %2751 = vmatprep.subr.bf16.mxu0 0
        %2752 = vmatpush1.bf16.msra.mxu0 0
        %2753 = vmatprep.subr.bf16.mxu0 0
        %2754 = vmatpush1.bf16.msra.mxu0 0
        %2755 = vmatprep.subr.bf16.mxu0 0
        %2756 = vmatpush1.bf16.msra.mxu0 0
        %2757 = vmatprep.subr.bf16.mxu0 0
        %2758 = vmatpush1.bf16.msra.mxu0 0
        %2759 = vmatprep.subr.bf16.mxu0 0
        %2760 = vmatpush1.bf16.msra.mxu0 0
        %2761 = vmatprep.subr.bf16.mxu0 0
        %2762 = vmatpush1.bf16.msra.mxu0 0
        %2763 = vmatprep.subr.bf16.mxu0 0
        %2764 = vmatpush1.bf16.msra.mxu0 0
        %2765 = vmatprep.subr.bf16.mxu0 0
        %2766 = vmatpush1.bf16.msra.mxu0 0
        %2767 = vmatprep.mubr.bf16.mxu0 0
        %2768 = vmatmul.mubr.bf16.gmra.mrb[0].mxu0 %v2733
        %v2769 = vpop.f32.mrb[0].mxu0
        %v2770 = vadd.f32 0.0, %v2769
        %v2771 = vpop.f32.mrb[0].mxu0
        %v2772 = vpop.f32.mrb[0].mxu0
        %v2773 = vadd.f32 0.0, %v2772
        %v2774 = vpop.f32.mrb[0].mxu0
        %2775 = vdwg.mxu0
        %v2776 = vpack.c.bf16 %v2726, %v2723
        %v2777 = vpack.c.bf16 %v2773, %v2770
        %2780 = vrot.lane.b32.xlu0 %v2776, 24
        %v2781 = vpop.permute.xlu0 %2780
        %2782 = vrot.lane.b32.xlu0 %v2777, 24
        %v2783 = vpop.permute.xlu0 %2782
        %vm2786 = vcmask 261312
        %2787 = vst.msk [vmem:[#allocation4] sm:$0xff] %vm2786, %v2781
        %2788 = vst.msk [vmem:[#allocation4 + $0x8] sm:$0xff] %vm2786, %v2783
        %v2789 = vld [vmem:[#allocation4] sm:$0xff]
        %s2790 = scalar_lea.vmem [#allocation4], 8
        %v2791 = vld [vmem:[%s2790] sm:$0xff]
        %v2792 = vld [vmem:[%s811] sm:$0xf]
        %v2793 = vld [vmem:[%s811 + $0x4] sm:$0xf]
        %v2794 = vld [vmem:[%s811 + $0x8] sm:$0xf]
        %v2795 = vld [vmem:[%s811 + $0xc] sm:$0xf]
        %v2796 = vld [vmem:[%s814] sm:$0x1]
        %v2798 = vlaneseq
        %v2799 = vshrl.u32 %v2798, 7
        %v2800 = vsub.s32 0, %v2799
        %v2801 = vrot.slane %v2796, %v2800
        %v2807 = vunpack.c.l.b16 %v2792
        %v2808 = vunpack.c.l.b16 %v2793
        %v2809 = vunpack.c.l.b16 %v2794
        %v2810 = vunpack.c.l.b16 %v2795
        %v2811 = vpack.c.b16 %v2808, %v2807
        %v2812 = vpack.c.b16 %v2810, %v2809
        %v2816 = vsel %vm1565, %v2789, 0
        %v2819 = vsel %vm1565, %v2791, 0
        %2821 = vmatprep.subr.bf16.mxu0 0
        %2822 = vmatpush1.bf16.msra.mxu0 %v2811
        %2823 = vmatprep.subr.bf16.mxu0 0
        %2824 = vmatpush1.bf16.msra.mxu0 %v2812
        %2825 = vmatprep.subr.bf16.mxu0 0
        %2826 = vmatpush1.bf16.msra.mxu0 0
        %2827 = vmatprep.subr.bf16.mxu0 0
        %2828 = vmatpush1.bf16.msra.mxu0 0
        %2829 = vmatprep.subr.bf16.mxu0 0
        %2830 = vmatpush1.bf16.msra.mxu0 0
        %2831 = vmatprep.subr.bf16.mxu0 0
        %2832 = vmatpush1.bf16.msra.mxu0 0
        %2833 = vmatprep.subr.bf16.mxu0 0
        %2834 = vmatpush1.bf16.msra.mxu0 0
        %2835 = vmatprep.subr.bf16.mxu0 0
        %2836 = vmatpush1.bf16.msra.mxu0 0
        %2837 = vmatprep.subr.bf16.mxu0 0
        %2838 = vmatpush1.bf16.msra.mxu0 0
        %2839 = vmatprep.subr.bf16.mxu0 0
        %2840 = vmatpush1.bf16.msra.mxu0 0
        %2841 = vmatprep.subr.bf16.mxu0 0
        %2842 = vmatpush1.bf16.msra.mxu0 0
        %2843 = vmatprep.subr.bf16.mxu0 0
        %2844 = vmatpush1.bf16.msra.mxu0 0
        %2845 = vmatprep.subr.bf16.mxu0 0
        %2846 = vmatpush1.bf16.msra.mxu0 0
        %2847 = vmatprep.subr.bf16.mxu0 0
        %2848 = vmatpush1.bf16.msra.mxu0 0
        %2849 = vmatprep.subr.bf16.mxu0 0
        %2850 = vmatpush1.bf16.msra.mxu0 0
        %2851 = vmatprep.subr.bf16.mxu0 0
        %2852 = vmatpush1.bf16.msra.mxu0 0
        %2853 = vmatprep.mubr.bf16.mxu0 0
        %2854 = vmatmul.mubr.bf16.gmra.mrb[0].mxu0 %v2816
        %v2855 = vpop.f32.mrb[0].mxu0
        %v2856 = vadd.f32 %v2801, %v2855
        %v2857 = vpop.f32.mrb[0].mxu0
        %v2858 = vpop.f32.mrb[0].mxu0
        %v2859 = vadd.f32 %v2801, %v2858
        %v2860 = vpop.f32.mrb[0].mxu0
        %2861 = vmatprep.mubr.bf16.mxu0 0
        %2862 = vmatmul.mubr.bf16.gmra.mrb[0].mxu0 %v2819
        %v2863 = vpop.f32.mrb[0].mxu0
        %v2864 = vadd.f32 %v2801, %v2863
        %v2865 = vpop.f32.mrb[0].mxu0
        %v2866 = vpop.f32.mrb[0].mxu0
        %v2867 = vadd.f32 %v2801, %v2866
        %v2868 = vpop.f32.mrb[0].mxu0
        %2869 = vdwg.mxu0
        %v2870 = vadd.f32 %v1559, %v2856
        %v2871 = vadd.f32 %v1560, %v2859
        %v2872 = vadd.f32 %v1561, %v2864
        %v2873 = vadd.f32 %v1562, %v2867
        %v2874 = vld [vmem:[%s817] sm:$0x1]
        %v2875 = vld [vmem:[%s820] sm:$0x1]
        %v2876 = vsel %vm1565, %v2870, 0.0
        %2877 = vadd.xlane.f32.xlu0 %v2876
        %v2878 = vpop.xlane.xlu0 %2877
        %v2879 = vsel %vm1565, %v2871, 0.0
        %2880 = vadd.xlane.f32.xlu0 %v2879
        %v2881 = vpop.xlane.xlu0 %2880
        %v2882 = vsel %vm1565, %v2872, 0.0
        %2883 = vadd.xlane.f32.xlu0 %v2882
        %v2884 = vpop.xlane.xlu0 %2883
        %v2885 = vsel %vm1565, %v2873, 0.0
        %2886 = vadd.xlane.f32.xlu0 %v2885
        %v2887 = vpop.xlane.xlu0 %2886
        %v2888 = vmul.f32 %v2878, %v1578
        %v2889 = vmul.f32 %v2881, %v1578
        %v2890 = vmul.f32 %v2884, %v1578
        %v2891 = vmul.f32 %v2887, %v1578
        %v2892 = vsub.f32 %v2870, %v2888
        %v2893 = vsub.f32 %v2871, %v2889
        %v2894 = vsub.f32 %v2872, %v2890
        %v2895 = vsub.f32 %v2873, %v2891
        %v2896 = vmul.f32 %v2892, %v2892
        %v2897 = vmul.f32 %v2893, %v2893
        %v2898 = vmul.f32 %v2894, %v2894
        %v2899 = vmul.f32 %v2895, %v2895
        %v2900 = vsel %vm1565, %v2896, 0.0
        %2901 = vadd.xlane.f32.xlu0 %v2900
        %v2902 = vpop.xlane.xlu0 %2901
        %v2903 = vsel %vm1565, %v2897, 0.0
        %2904 = vadd.xlane.f32.xlu0 %v2903
        %v2905 = vpop.xlane.xlu0 %2904
        %v2906 = vsel %vm1565, %v2898, 0.0
        %2907 = vadd.xlane.f32.xlu0 %v2906
        %v2908 = vpop.xlane.xlu0 %2907
        %v2909 = vsel %vm1565, %v2899, 0.0
        %2910 = vadd.xlane.f32.xlu0 %v2909
        %v2911 = vpop.xlane.xlu0 %2910
        %v2912 = vmul.f32 %v2902, %v1578
        %v2913 = vmul.f32 %v2905, %v1578
        %v2914 = vmul.f32 %v2908, %v1578
        %v2915 = vmul.f32 %v2911, %v1578
        %v2916 = vadd.f32 %v2912, 1e-06
        %v2917 = vadd.f32 %v2913, 1e-06
        %v2918 = vadd.f32 %v2914, 1e-06
        %v2919 = vadd.f32 %v2915, 1e-06
        %v2920 = vrsqrt.pop %v2916
        %v2921 = vrsqrt.pop %v2917
        %v2922 = vrsqrt.pop %v2918
        %v2923 = vrsqrt.pop %v2919
        %v2924 = vmul.f32 %v2892, %v2920
        %v2925 = vmul.f32 %v2893, %v2921
        %v2926 = vmul.f32 %v2894, %v2922
        %v2927 = vmul.f32 %v2895, %v2923
        %v2929 = vlaneseq
        %v2930 = vshrl.u32 %v2929, 7
        %v2931 = vsub.s32 0, %v2930
        %v2932 = vrot.slane %v2874, %v2931
        %v2934 = vmul.f32 %v2924, %v2932
        %v2935 = vmul.f32 %v2925, %v2932
        %v2936 = vmul.f32 %v2926, %v2932
        %v2937 = vmul.f32 %v2927, %v2932
        %v2939 = vlaneseq
        %v2940 = vshrl.u32 %v2939, 7
        %v2941 = vsub.s32 0, %v2940
        %v2942 = vrot.slane %v2875, %v2941
        %v2944 = vadd.f32 %v2934, %v2942
        %v2945 = vadd.f32 %v2935, %v2942
        %v2946 = vadd.f32 %v2936, %v2942
        %v2947 = vadd.f32 %v2937, %v2942
        %v2948 = vpack.c.bf16 %v2945, %v2944
        %v2949 = vpack.c.bf16 %v2947, %v2946
        %v2950 = vld [vmem:[%s825] sm:$0xf]
        %v2951 = vld [vmem:[%s825 + $0x4] sm:$0xf]
        %v2952 = vld [vmem:[%s825 + $0x8] sm:$0xf]
        %v2953 = vld [vmem:[%s825 + $0xc] sm:$0xf]
        %v2954 = vld [vmem:[%s828] sm:$0x1]
        %v2956 = vlaneseq
        %v2957 = vshrl.u32 %v2956, 7
        %v2958 = vsub.s32 0, %v2957
        %v2959 = vrot.slane %v2954, %v2958
        %v2965 = vunpack.c.l.b16 %v2950
        %v2966 = vunpack.c.l.b16 %v2951
        %v2967 = vunpack.c.l.b16 %v2952
        %v2968 = vunpack.c.l.b16 %v2953
        %v2969 = vpack.c.b16 %v2966, %v2965
        %v2970 = vpack.c.b16 %v2968, %v2967
        %v2974 = vsel %vm1565, %v2948, 0
        %v2977 = vsel %vm1565, %v2949, 0
        %2979 = vmatprep.subr.bf16.mxu0 0
        %2980 = vmatpush1.bf16.msra.mxu0 %v2969
        %2981 = vmatprep.subr.bf16.mxu0 0
        %2982 = vmatpush1.bf16.msra.mxu0 %v2970
        %2983 = vmatprep.subr.bf16.mxu0 0
        %2984 = vmatpush1.bf16.msra.mxu0 0
        %2985 = vmatprep.subr.bf16.mxu0 0
        %2986 = vmatpush1.bf16.msra.mxu0 0
        %2987 = vmatprep.subr.bf16.mxu0 0
        %2988 = vmatpush1.bf16.msra.mxu0 0
        %2989 = vmatprep.subr.bf16.mxu0 0
        %2990 = vmatpush1.bf16.msra.mxu0 0
        %2991 = vmatprep.subr.bf16.mxu0 0
        %2992 = vmatpush1.bf16.msra.mxu0 0
        %2993 = vmatprep.subr.bf16.mxu0 0
        %2994 = vmatpush1.bf16.msra.mxu0 0
        %2995 = vmatprep.subr.bf16.mxu0 0
        %2996 = vmatpush1.bf16.msra.mxu0 0
        %2997 = vmatprep.subr.bf16.mxu0 0
        %2998 = vmatpush1.bf16.msra.mxu0 0
        %2999 = vmatprep.subr.bf16.mxu0 0
        %3000 = vmatpush1.bf16.msra.mxu0 0
        %3001 = vmatprep.subr.bf16.mxu0 0
        %3002 = vmatpush1.bf16.msra.mxu0 0
        %3003 = vmatprep.subr.bf16.mxu0 0
        %3004 = vmatpush1.bf16.msra.mxu0 0
        %3005 = vmatprep.subr.bf16.mxu0 0
        %3006 = vmatpush1.bf16.msra.mxu0 0
        %3007 = vmatprep.subr.bf16.mxu0 0
        %3008 = vmatpush1.bf16.msra.mxu0 0
        %3009 = vmatprep.subr.bf16.mxu0 0
        %3010 = vmatpush1.bf16.msra.mxu0 0
        %3011 = vmatprep.mubr.bf16.mxu0 0
        %3012 = vmatmul.mubr.bf16.gmra.mrb[0].mxu0 %v2974
        %v3013 = vpop.f32.mrb[0].mxu0
        %v3014 = vadd.f32 %v2959, %v3013
        %v3015 = vpop.f32.mrb[0].mxu0
        %v3016 = vpop.f32.mrb[0].mxu0
        %v3017 = vadd.f32 %v2959, %v3016
        %v3018 = vpop.f32.mrb[0].mxu0
        %3019 = vmatprep.mubr.bf16.mxu0 0
        %3020 = vmatmul.mubr.bf16.gmra.mrb[0].mxu0 %v2977
        %v3021 = vpop.f32.mrb[0].mxu0
        %v3022 = vadd.f32 %v2959, %v3021
        %v3023 = vpop.f32.mrb[0].mxu0
        %v3024 = vpop.f32.mrb[0].mxu0
        %v3025 = vadd.f32 %v2959, %v3024
        %v3026 = vpop.f32.mrb[0].mxu0
        %3027 = vdwg.mxu0
        %v3028 = vmul.f32 %v3014, 0.5
        %v3029 = vmul.f32 %v3017, 0.5
        %v3030 = vmul.f32 %v3022, 0.5
        %v3031 = vmul.f32 %v3025, 0.5
        %v3032 = vmul.f32 %v3014, 0.70710677
        %v3033 = vmul.f32 %v3017, 0.70710677
        %v3034 = vmul.f32 %v3022, 0.70710677
        %v3035 = vmul.f32 %v3025, 0.70710677
        %v3036 = verf.f32.pop %v3032
        %v3037 = verf.f32.pop %v3033
        %v3038 = verf.f32.pop %v3034
        %v3039 = verf.f32.pop %v3035
        %v3040 = vadd.f32 %v3036, 1.0
        %v3041 = vadd.f32 %v3037, 1.0
        %v3042 = vadd.f32 %v3038, 1.0
        %v3043 = vadd.f32 %v3039, 1.0
        %v3044 = vmul.f32 %v3028, %v3040
        %v3045 = vmul.f32 %v3029, %v3041
        %v3046 = vmul.f32 %v3030, %v3042
        %v3047 = vmul.f32 %v3031, %v3043
        %v3048 = vpack.c.bf16 %v3045, %v3044
        %v3049 = vpack.c.bf16 %v3047, %v3046
        %v3050 = vld [vmem:[%s833] sm:$0xf]
        %v3051 = vld [vmem:[%s833 + $0x4] sm:$0xf]
        %v3052 = vld [vmem:[%s833 + $0x8] sm:$0xf]
        %v3053 = vld [vmem:[%s833 + $0xc] sm:$0xf]
        %v3054 = vld [vmem:[%s833 + $0x10] sm:$0xf]
        %v3055 = vld [vmem:[%s833 + $0x14] sm:$0xf]
        %v3056 = vld [vmem:[%s833 + $0x18] sm:$0xf]
        %v3057 = vld [vmem:[%s833 + $0x1c] sm:$0xf]
        %v3058 = vld [vmem:[%s833 + $0x20] sm:$0xf]
        %v3059 = vld [vmem:[%s833 + $0x24] sm:$0xf]
        %v3060 = vld [vmem:[%s833 + $0x28] sm:$0xf]
        %v3061 = vld [vmem:[%s833 + $0x2c] sm:$0xf]
        %v3062 = vld [vmem:[%s833 + $0x30] sm:$0xf]
        %v3063 = vld [vmem:[%s833 + $0x34] sm:$0xf]
        %v3064 = vld [vmem:[%s833 + $0x38] sm:$0xf]
        %v3065 = vld [vmem:[%s833 + $0x3c] sm:$0xf]
        %v3066 = vld [vmem:[%s836] sm:$0x1]
        %v3068 = vlaneseq
        %v3069 = vshrl.u32 %v3068, 7
        %v3070 = vsub.s32 0, %v3069
        %v3071 = vrot.slane %v3066, %v3070
        %v3089 = vunpack.c.l.b16 %v3050
        %v3090 = vunpack.c.l.b16 %v3051
        %v3091 = vunpack.c.l.b16 %v3052
        %v3092 = vunpack.c.l.b16 %v3053
        %v3093 = vunpack.c.l.b16 %v3054
        %v3094 = vunpack.c.l.b16 %v3055
        %v3095 = vunpack.c.l.b16 %v3056
        %v3096 = vunpack.c.l.b16 %v3057
        %v3097 = vunpack.c.l.b16 %v3058
        %v3098 = vunpack.c.l.b16 %v3059
        %v3099 = vunpack.c.l.b16 %v3060
        %v3100 = vunpack.c.l.b16 %v3061
        %v3101 = vunpack.c.l.b16 %v3062
        %v3102 = vunpack.c.l.b16 %v3063
        %v3103 = vunpack.c.l.b16 %v3064
        %v3104 = vunpack.c.l.b16 %v3065
        %v3105 = vpack.c.b16 %v3090, %v3089
        %v3106 = vpack.c.b16 %v3092, %v3091
        %v3107 = vpack.c.b16 %v3094, %v3093
        %v3108 = vpack.c.b16 %v3096, %v3095
        %v3109 = vpack.c.b16 %v3098, %v3097
        %v3110 = vpack.c.b16 %v3100, %v3099
        %v3111 = vpack.c.b16 %v3102, %v3101
        %v3112 = vpack.c.b16 %v3104, %v3103
        %3121 = vmatprep.subr.bf16.mxu0 0
        %3122 = vmatpush1.bf16.msra.mxu0 %v3105
        %3123 = vmatprep.subr.bf16.mxu0 0
        %3124 = vmatpush1.bf16.msra.mxu0 %v3106
        %3125 = vmatprep.subr.bf16.mxu0 0
        %3126 = vmatpush1.bf16.msra.mxu0 %v3107
        %3127 = vmatprep.subr.bf16.mxu0 0
        %3128 = vmatpush1.bf16.msra.mxu0 %v3108
        %3129 = vmatprep.subr.bf16.mxu0 0
        %3130 = vmatpush1.bf16.msra.mxu0 %v3109
        %3131 = vmatprep.subr.bf16.mxu0 0
        %3132 = vmatpush1.bf16.msra.mxu0 %v3110
        %3133 = vmatprep.subr.bf16.mxu0 0
        %3134 = vmatpush1.bf16.msra.mxu0 %v3111
        %3135 = vmatprep.subr.bf16.mxu0 0
        %3136 = vmatpush1.bf16.msra.mxu0 %v3112
        %3137 = vmatprep.subr.bf16.mxu0 0
        %3138 = vmatpush1.bf16.msra.mxu0 0
        %3139 = vmatprep.subr.bf16.mxu0 0
        %3140 = vmatpush1.bf16.msra.mxu0 0
        %3141 = vmatprep.subr.bf16.mxu0 0
        %3142 = vmatpush1.bf16.msra.mxu0 0
        %3143 = vmatprep.subr.bf16.mxu0 0
        %3144 = vmatpush1.bf16.msra.mxu0 0
        %3145 = vmatprep.subr.bf16.mxu0 0
        %3146 = vmatpush1.bf16.msra.mxu0 0
        %3147 = vmatprep.subr.bf16.mxu0 0
        %3148 = vmatpush1.bf16.msra.mxu0 0
        %3149 = vmatprep.subr.bf16.mxu0 0
        %3150 = vmatpush1.bf16.msra.mxu0 0
        %3151 = vmatprep.subr.bf16.mxu0 0
        %3152 = vmatpush1.bf16.msra.mxu0 0
        %3153 = vmatprep.mubr.bf16.mxu0 0
        %3154 = vmatmul.mubr.bf16.gmra.mrb[0].mxu0 %v3048
        %v3155 = vpop.f32.mrb[0].mxu0
        %v3156 = vadd.f32 %v3071, %v3155
        %v3157 = vpop.f32.mrb[0].mxu0
        %v3158 = vpop.f32.mrb[0].mxu0
        %v3159 = vadd.f32 %v3071, %v3158
        %v3160 = vpop.f32.mrb[0].mxu0
        %3161 = vmatprep.mubr.bf16.mxu0 0
        %3162 = vmatmul.mubr.bf16.gmra.mrb[0].mxu0 %v3049
        %v3163 = vpop.f32.mrb[0].mxu0
        %v3164 = vadd.f32 %v3071, %v3163
        %v3165 = vpop.f32.mrb[0].mxu0
        %v3166 = vpop.f32.mrb[0].mxu0
        %v3167 = vadd.f32 %v3071, %v3166
        %v3168 = vpop.f32.mrb[0].mxu0
        %3169 = vdwg.mxu0
        %v3170 = vadd.f32 %v2870, %v3156
        %v3171 = vadd.f32 %v2871, %v3159
        %v3172 = vadd.f32 %v2872, %v3164
        %v3173 = vadd.f32 %v2873, %v3167
        %3174 = vst.msk [vmem:[#allocation2] sm:$0xff] %vm1565, %v3170
        %3175 = vst.msk [vmem:[#allocation2 + $0x8] sm:$0xff] %vm1565, %v3171
        %3176 = vst.msk [vmem:[#allocation2 + $0x10] sm:$0xff] %vm1565, %v3172
        %3177 = vst.msk [vmem:[#allocation2 + $0x18] sm:$0xff] %vm1565, %v3173
        %p3178 = scmp.eq.s32.totalorder %s39, 1
        // Predicated region
        $region105: #{vit3d_forward.1} parent=99 // pred_check
          %p3179 = pneg %p3178
        $region106: #{vit3d_forward.1} parent=99 // pred_check_branch
          %3181 = sbr.rel (%p3179) target = $region108
        $region107: #{vit3d_forward.1} parent=99 // pred_region
          %v3182 = vld [vmem:[#allocation2] sm:$0xff]
          %v3183 = vld [vmem:[#allocation2 + $0x10] sm:$0xff]
          %v3185 = vrot.slane %v3183, 7
          %vm3187 = vcmask 1040384
          %v3188 = vsel %vm3187, %v3182, %v3185
          %v3189 = vld [vmem:[%s16] sm:$0x1]
          %v3190 = vld [vmem:[%s17] sm:$0x1]
          %vm3191 = vcmask 254976
          %v3192 = vsel %vm3191, %v3188, 0.0
          %3193 = vadd.xlane.f32.xlu0 %v3192
          %v3194 = vpop.xlane.xlu0 %3193
          %v3195 = vmul.f32 %v3194, %v1578
          %v3196 = vsub.f32 %v3188, %v3195
          %v3197 = vmul.f32 %v3196, %v3196
          %v3198 = vsel %vm3191, %v3197, 0.0
          %3199 = vadd.xlane.f32.xlu0 %v3198
          %v3200 = vpop.xlane.xlu0 %3199
          %v3201 = vmul.f32 %v3200, %v1578
          %v3202 = vadd.f32 %v3201, 1e-06
          %v3203 = vrsqrt.pop %v3202
          %v3204 = vmul.f32 %v3196, %v3203
          %v3206 = vlaneseq
          %v3207 = vshrl.u32 %v3206, 7
          %v3208 = vsub.s32 0, %v3207
          %v3209 = vrot.slane %v3189, %v3208
          %v3211 = vmul.f32 %v3204, %v3209
          %v3213 = vlaneseq
          %v3214 = vshrl.u32 %v3213, 7
          %v3215 = vsub.s32 0, %v3214
          %v3216 = vrot.slane %v3190, %v3215
          %v3218 = vadd.f32 %v3211, %v3216
          %v3219 = vpack.c.bf16 %v3218, %v3218
          %v3220 = vld [vmem:[%s18] sm:$0xf]
          %v3221 = vld [vmem:[%s18 + $0x4] sm:$0xf]
          %v3222 = vld [vmem:[%s18 + $0x8] sm:$0xf]
          %v3223 = vld [vmem:[%s18 + $0xc] sm:$0xf]
          %v3224 = vld [vmem:[%s19] sm:$0x1]
          %v3226 = vlaneseq
          %v3227 = vshrl.u32 %v3226, 7
          %v3228 = vsub.s32 0, %v3227
          %v3229 = vrot.slane %v3224, %v3228
          %v3235 = vunpack.c.l.b16 %v3220
          %v3236 = vunpack.c.l.b16 %v3221
          %v3237 = vunpack.c.l.b16 %v3222
          %v3238 = vunpack.c.l.b16 %v3223
          %v3239 = vpack.c.b16 %v3236, %v3235
          %v3240 = vpack.c.b16 %v3238, %v3237
          %v3244 = vsel %vm1565, %v3219, 0
          %3246 = vmatprep.subr.bf16.mxu0 0
          %3247 = vmatpush1.bf16.msra.mxu0 %v3239
          %3248 = vmatprep.subr.bf16.mxu0 0
          %3249 = vmatpush1.bf16.msra.mxu0 %v3240
          %3250 = vmatprep.subr.bf16.mxu0 0
          %3251 = vmatpush1.bf16.msra.mxu0 0
          %3252 = vmatprep.subr.bf16.mxu0 0
          %3253 = vmatpush1.bf16.msra.mxu0 0
          %3254 = vmatprep.subr.bf16.mxu0 0
          %3255 = vmatpush1.bf16.msra.mxu0 0
          %3256 = vmatprep.subr.bf16.mxu0 0
          %3257 = vmatpush1.bf16.msra.mxu0 0
          %3258 = vmatprep.subr.bf16.mxu0 0
          %3259 = vmatpush1.bf16.msra.mxu0 0
          %3260 = vmatprep.subr.bf16.mxu0 0
          %3261 = vmatpush1.bf16.msra.mxu0 0
          %3262 = vmatprep.subr.bf16.mxu0 0
          %3263 = vmatpush1.bf16.msra.mxu0 0
          %3264 = vmatprep.subr.bf16.mxu0 0
          %3265 = vmatpush1.bf16.msra.mxu0 0
          %3266 = vmatprep.subr.bf16.mxu0 0
          %3267 = vmatpush1.bf16.msra.mxu0 0
          %3268 = vmatprep.subr.bf16.mxu0 0
          %3269 = vmatpush1.bf16.msra.mxu0 0
          %3270 = vmatprep.subr.bf16.mxu0 0
          %3271 = vmatpush1.bf16.msra.mxu0 0
          %3272 = vmatprep.subr.bf16.mxu0 0
          %3273 = vmatpush1.bf16.msra.mxu0 0
          %3274 = vmatprep.subr.bf16.mxu0 0
          %3275 = vmatpush1.bf16.msra.mxu0 0
          %3276 = vmatprep.subr.bf16.mxu0 0
          %3277 = vmatpush1.bf16.msra.mxu0 0
          %3278 = vmatprep.mubr.bf16.mxu0 0
          %3279 = vmatmul.mubr.bf16.gmra.mrb[0].mxu0 %v3244
          %v3280 = vpop.f32.mrb[0].mxu0
          %v3281 = vadd.f32 %v3229, %v3280
          %v3282 = vpop.f32.mrb[0].mxu0
          %v3283 = vpop.f32.mrb[0].mxu0
          %v3284 = vpop.f32.mrb[0].mxu0
          %3285 = vdwg.mxu0
          %3286 = vst [vmem:[%s785] sm:$0x3] %v3281
        $region108: #{vit3d_forward.1} parent=99 // pred_fallthru
          _
        %s3287 = sand.u32 %s539, 1
        %s3288 = scalar_lea.sflag [#allocation6], %s3287
        %s3289 = sand.u32 %s539, 1
        %s3290 = smul.addr %s3289, 2
        %s3291 = scalar_lea.vmem [#allocation5], %s3290
        // Predicated region
        $region109: #{vit3d_forward.1} parent=99 // pred_check
          %p3292 = pneg %p549
        $region110: #{vit3d_forward.1} parent=99 // pred_check_branch
          %3294 = sbr.rel (%p3292) target = $region112
        $region111: #{vit3d_forward.1} parent=99 // pred_region
          %s3296 = ssub.s32 32, 32
          %3297 = vsyncadd %s3288, %s3296
          %s3298 = smul.addr %s38, 32
          %s3299 = scalar_lea.hbm %s20, %s3298
          %s3301 = sshll.u32 %s3291, 4
          %s3302 = int_to_ptr.vmem [resolvable:$true] %s3301
          %3304 = dma.vmem_to_hbm [thread:$0]  %s3302, 32, %s3299, %s3288
        $region112: #{vit3d_forward.1} parent=99 // pred_fallthru
          _
      $region100: #{vit3d_forward.1} parent=5 // pred_fallthru
        _
      %p3305 = scmp.le.s32.totalorder 2, %s29
      // Predicated region
      $region113: #{vit3d_forward.1} parent=5 // pred_check
        %p3306 = pneg %p3305
      $region114: #{vit3d_forward.1} parent=5 // pred_check_branch
        %3308 = sbr.rel (%p3306) target = $region116
      $region115: #{vit3d_forward.1} parent=5 // pred_region
        %s3309 = ssub.s32 %s29, 2
        // Predicated region
        $region117: #{vit3d_forward.1} parent=115 // pred_check
          %p3310 = pneg %p555
        $region118: #{vit3d_forward.1} parent=115 // pred_check_branch
          %3312 = sbr.rel (%p3310) target = $region120
        $region119: #{vit3d_forward.1} parent=115 // pred_region
          %s3313 = sand.u32 %s540, 1
          %s3314 = scalar_lea.sflag [#allocation6], %s3313
          %s3315 = sand.u32 %s540, 1
          %s3316 = smul.addr %s3315, 2
          %s3317 = scalar_lea.vmem [#allocation5], %s3316
          %3318 = dma.done %s3314, 32
        $region120: #{vit3d_forward.1} parent=115 // pred_fallthru
          _
      $region116: #{vit3d_forward.1} parent=5 // pred_fallthru
        _
    $region6: #{vit3d_forward.1} parent=1 // loop_footer
      %s33 = sadd.s32 1, %s29
    $region7: #{vit3d_forward.1} parent=1 // loop_footer_branch
      %28 = sbr.rel target = $region3
    $region8: #{vit3d_forward.1} parent=1 // loop_exit
      _
    %3319 = vsyncpa [#allocation6], 1
    %s3320 = scalar_lea.sflag [#allocation6], 1
    %3321 = vsyncpa %s3320, 1

</llo_original>
